<compile_context>
chip_gen: v7x
topology: tpu7x:2x2x1
jax: 0.10.0
libtpu: 0.0.40
codegen_flags: <defaults>
</compile_context>

<pallas_src>
import jax
import jax.numpy as jnp
from jax.experimental import pallas as pl
from jax.experimental.pallas import tpu as pltpu

# Layer dims: 64 -> 256 -> 512 -> 512 -> 512 -> 512 -> 200
DIMS = [64, 256, 512, 512, 512, 512, 200]
OUT_PAD = 256  # last layer padded to a lane-dense multiple of 128


def _mlp_kernel(x_ref,
                w1, b1, w2, b2, w3, b3, w4, b4, w5, b5, w6, b6,
                o_ref):
    """Fused MLP forward for one batch tile: 6 matmuls + bias, ReLU on the first 5.

    Activations travel in bf16 between layers; accumulation and bias add in f32.
    """

    def lin(h_bf16, w_ref, b_ref, relu):
        y = jnp.dot(h_bf16, w_ref[...],
                    preferred_element_type=jnp.float32) + b_ref[...]
        if relu:
            return jnp.maximum(y, 0.0).astype(jnp.bfloat16)
        return y  # final layer stays f32

    h = x_ref[...]                      # already bf16 (cast once in the wrapper)
    h = lin(h, w1, b1, True)
    h = lin(h, w2, b2, True)
    h = lin(h, w3, b3, True)
    h = lin(h, w4, b4, True)
    # Dropout(0.1): identity in eval()/inference mode.
    h = lin(h, w5, b5, True)
    h = lin(h, w6, b6, False)
    o_ref[...] = h.astype(o_ref.dtype)


def _round_up(x, m):
    return (x + m - 1) // m * m


def mlp_forward(x, params, tile_b=512):
    """x: (B, 64) float32/bfloat16. params: list of (W, b), W=(in,out), b=(1,out) f32."""
    B = x.shape[0]

    # Batch tile selection:
    #  * always a multiple of 8 (sublane rule),
    #  * for small/medium B, split into (at least) two tiles so both v7x
    #    TensorCores get a grid step; for large B use the caller tile.
    tb = _round_up(max(tile_b, 8), 8)
    if B <= 2 * tb:
        tb = max(8, _round_up((B + 1) // 2, 8))
    B_pad = _round_up(B, tb)

    # Cast x once here (halves the x DMA, removes the in-kernel cast).
    x = x.astype(jnp.bfloat16)
    if B_pad != B:
        x = jnp.pad(x, ((0, B_pad - B), (0, 0)))

    # Flatten params: bf16 weights (halve HBM weight traffic, native MXU rate),
    # f32 biases. Pad the final layer to OUT_PAD zero columns (lane-dense store).
    flat = []
    n_layers = len(params)
    for i, (w, b) in enumerate(params):
        if i == n_layers - 1 and w.shape[1] != OUT_PAD:
            pad = OUT_PAD - w.shape[1]
            w = jnp.pad(w, ((0, 0), (0, pad)))
            b = jnp.pad(b, ((0, 0), (0, pad)))
        flat.append(w.astype(jnp.bfloat16))
        flat.append(b.astype(jnp.float32))

    grid = (B_pad // tb,)

    x_spec = pl.BlockSpec((tb, DIMS[0]), lambda i: (i, 0))
    o_spec = pl.BlockSpec((tb, OUT_PAD), lambda i: (i, 0))
    # Weights/biases: block index constant across the grid -> DMA'd once and kept
    # VMEM-resident; single-buffered (Buffered(1)) since the block never changes.
    wb_specs = [
        pl.BlockSpec(a.shape, lambda i: (0, 0), pipeline_mode=pl.Buffered(1))
        for a in flat
    ]

    out = pl.pallas_call(
        _mlp_kernel,
        out_shape=jax.ShapeDtypeStruct((B_pad, OUT_PAD), jnp.float32),
        grid=grid,
        in_specs=[x_spec] + wb_specs,
        out_specs=o_spec,
        compiler_params=pltpu.CompilerParams(
            dimension_semantics=("parallel",),
            vmem_limit_bytes=32 * 1024 * 1024,
        ),
    )(x, *flat)

    return out[:B, :DIMS[-1]]


def init_params(key):
    """Deterministic init; Kaiming-uniform-like scale as in torch.nn.Linear."""
    params = []
    for i in range(len(DIMS) - 1):
        fan_in, fan_out = DIMS[i], DIMS[i + 1]
        key, kw, kb = jax.random.split(key, 3)
        bound = 1.0 / jnp.sqrt(fan_in)
        w = jax.random.uniform(kw, (fan_in, fan_out), jnp.float32, -bound, bound)
        b = jax.random.uniform(kb, (1, fan_out), jnp.float32, -bound, bound)
        params.append((w, b))
    return params


def reference_forward(x, params):
    """Plain-JAX reference with the same rounding points as the kernel:
    bf16 operands, f32 accumulation, f32 bias/ReLU, bf16 inter-layer activations."""
    h = x.astype(jnp.bfloat16)
    n = len(params)
    for i, (w, b) in enumerate(params):
        y = jnp.dot(h.astype(jnp.float32),
                    w.astype(jnp.bfloat16).astype(jnp.float32),
                    preferred_element_type=jnp.float32) + b
        if i < n - 1:
            h = jnp.maximum(y, 0.0).astype(jnp.bfloat16)
        else:
            h = y
    return h


if __name__ == "__main__":
    key = jax.random.PRNGKey(0)
    key, kx = jax.random.split(key)
    params = init_params(key)

    # Small batch: collapses to a single 8-row tile, padded 256-wide output store.
    B = 8
    x = jax.random.normal(kx, (B, DIMS[0]), jnp.float32)
    out = jax.block_until_ready(mlp_forward(x, params))
    ref = reference_forward(x, params)
    assert out.shape == (B, DIMS[-1]), out.shape
    assert jnp.allclose(out, ref, atol=2e-2, rtol=2e-2), "mismatch vs reference (B=8)"

    # Exercise the multi-tile grid + batch-padding path (grid of 2 steps).
    B2 = 13
    key, kx2 = jax.random.split(key)
    x2 = jax.random.normal(kx2, (B2, DIMS[0]), jnp.float32)
    out2 = jax.block_until_ready(mlp_forward(x2, params, tile_b=8))
    ref2 = reference_forward(x2, params)
    assert out2.shape == (B2, DIMS[-1]), out2.shape
    assert jnp.allclose(out2, ref2, atol=2e-2, rtol=2e-2), "mismatch vs reference (B=13)"

    print("KERNEL_OK")
</pallas_src>

<mosaic_0001>
module attributes {stable_mosaic.version = 11 : i64} {
  func.func @_mlp_kernel(%arg0: i32, %arg1: memref<8x64xbf16, #tpu.memory_space<vmem>>, %arg2: memref<64x256xbf16, #tpu.memory_space<vmem>>, %arg3: memref<1x256xf32, #tpu.memory_space<vmem>>, %arg4: memref<256x512xbf16, #tpu.memory_space<vmem>>, %arg5: memref<1x512xf32, #tpu.memory_space<vmem>>, %arg6: memref<512x512xbf16, #tpu.memory_space<vmem>>, %arg7: memref<1x512xf32, #tpu.memory_space<vmem>>, %arg8: memref<512x512xbf16, #tpu.memory_space<vmem>>, %arg9: memref<1x512xf32, #tpu.memory_space<vmem>>, %arg10: memref<512x512xbf16, #tpu.memory_space<vmem>>, %arg11: memref<1x512xf32, #tpu.memory_space<vmem>>, %arg12: memref<512x256xbf16, #tpu.memory_space<vmem>>, %arg13: memref<1x256xf32, #tpu.memory_space<vmem>>, %arg14: memref<8x256xf32, #tpu.memory_space<vmem>>) attributes {dimension_semantics = [#tpu.dimension_semantics<parallel>], iteration_bounds = array<i64: 1>, scalar_prefetch = 0 : i64, scratch_operands = 0 : i64, tpu.core_type = #tpu.core_type<tc>, window_params = [{transform_indices = @transform_0, window_bounds = array<i64: 8, 64>}, {pipeline_mode = #tpu.pipeline_mode<synchronous>, transform_indices = @transform_1, window_bounds = array<i64: 64, 256>}, {pipeline_mode = #tpu.pipeline_mode<synchronous>, transform_indices = @transform_2, window_bounds = array<i64: 1, 256>}, {pipeline_mode = #tpu.pipeline_mode<synchronous>, transform_indices = @transform_3, window_bounds = array<i64: 256, 512>}, {pipeline_mode = #tpu.pipeline_mode<synchronous>, transform_indices = @transform_4, window_bounds = array<i64: 1, 512>}, {pipeline_mode = #tpu.pipeline_mode<synchronous>, transform_indices = @transform_5, window_bounds = array<i64: 512, 512>}, {pipeline_mode = #tpu.pipeline_mode<synchronous>, transform_indices = @transform_6, window_bounds = array<i64: 1, 512>}, {pipeline_mode = #tpu.pipeline_mode<synchronous>, transform_indices = @transform_7, window_bounds = array<i64: 512, 512>}, {pipeline_mode = #tpu.pipeline_mode<synchronous>, transform_indices = @transform_8, window_bounds = array<i64: 1, 512>}, {pipeline_mode = #tpu.pipeline_mode<synchronous>, transform_indices = @transform_9, window_bounds = array<i64: 512, 512>}, {pipeline_mode = #tpu.pipeline_mode<synchronous>, transform_indices = @transform_10, window_bounds = array<i64: 1, 512>}, {pipeline_mode = #tpu.pipeline_mode<synchronous>, transform_indices = @transform_11, window_bounds = array<i64: 512, 256>}, {pipeline_mode = #tpu.pipeline_mode<synchronous>, transform_indices = @transform_12, window_bounds = array<i64: 1, 256>}, {transform_indices = @transform_13, window_bounds = array<i64: 8, 256>}]} {
    %c0 = arith.constant 0 : index
    %c0_0 = arith.constant 0 : index
    %0 = vector.load %arg1[%c0, %c0_0] : memref<8x64xbf16, #tpu.memory_space<vmem>>, vector<8x64xbf16>
    %c0_1 = arith.constant 0 : index
    %c0_2 = arith.constant 0 : index
    %1 = vector.load %arg2[%c0_1, %c0_2] : memref<64x256xbf16, #tpu.memory_space<vmem>>, vector<64x256xbf16>
    %cst = arith.constant dense<0.000000e+00> : vector<8x256xf32>
    %2 = tpu.matmul %0, %1, %cst {dimension_numbers = #tpu.dot_dimension_numbers<[1], [0], [0], [1], [0, 0, 1, 1], [], []>} : vector<8x64xbf16>, vector<64x256xbf16>, vector<8x256xf32> -> vector<8x256xf32>
    %c0_3 = arith.constant 0 : index
    %c0_4 = arith.constant 0 : index
    %3 = vector.load %arg3[%c0_3, %c0_4] : memref<1x256xf32, #tpu.memory_space<vmem>>, vector<1x256xf32>
    %4 = vector.broadcast %3 : vector<1x256xf32> to vector<8x256xf32>
    %5 = arith.addf %2, %4 : vector<8x256xf32>
    %cst_5 = arith.constant 0.000000e+00 : f32
    %6 = vector.broadcast %cst_5 : f32 to vector<8x256xf32>
    %7 = arith.maximumf %5, %6 : vector<8x256xf32>
    %8 = arith.truncf %7 : vector<8x256xf32> to vector<8x256xbf16>
    %c0_6 = arith.constant 0 : index
    %c0_7 = arith.constant 0 : index
    %9 = vector.load %arg4[%c0_6, %c0_7] : memref<256x512xbf16, #tpu.memory_space<vmem>>, vector<256x512xbf16>
    %cst_8 = arith.constant dense<0.000000e+00> : vector<8x512xf32>
    %10 = tpu.matmul %8, %9, %cst_8 {dimension_numbers = #tpu.dot_dimension_numbers<[1], [0], [0], [1], [0, 0, 1, 1], [], []>} : vector<8x256xbf16>, vector<256x512xbf16>, vector<8x512xf32> -> vector<8x512xf32>
    %c0_9 = arith.constant 0 : index
    %c0_10 = arith.constant 0 : index
    %11 = vector.load %arg5[%c0_9, %c0_10] : memref<1x512xf32, #tpu.memory_space<vmem>>, vector<1x512xf32>
    %12 = vector.broadcast %11 : vector<1x512xf32> to vector<8x512xf32>
    %13 = arith.addf %10, %12 : vector<8x512xf32>
    %cst_11 = arith.constant 0.000000e+00 : f32
    %14 = vector.broadcast %cst_11 : f32 to vector<8x512xf32>
    %15 = arith.maximumf %13, %14 : vector<8x512xf32>
    %16 = arith.truncf %15 : vector<8x512xf32> to vector<8x512xbf16>
    %c0_12 = arith.constant 0 : index
    %c0_13 = arith.constant 0 : index
    %17 = vector.load %arg6[%c0_12, %c0_13] : memref<512x512xbf16, #tpu.memory_space<vmem>>, vector<512x512xbf16>
    %cst_14 = arith.constant dense<0.000000e+00> : vector<8x512xf32>
    %18 = tpu.matmul %16, %17, %cst_14 {dimension_numbers = #tpu.dot_dimension_numbers<[1], [0], [0], [1], [0, 0, 1, 1], [], []>} : vector<8x512xbf16>, vector<512x512xbf16>, vector<8x512xf32> -> vector<8x512xf32>
    %c0_15 = arith.constant 0 : index
    %c0_16 = arith.constant 0 : index
    %19 = vector.load %arg7[%c0_15, %c0_16] : memref<1x512xf32, #tpu.memory_space<vmem>>, vector<1x512xf32>
    %20 = vector.broadcast %19 : vector<1x512xf32> to vector<8x512xf32>
    %21 = arith.addf %18, %20 : vector<8x512xf32>
    %cst_17 = arith.constant 0.000000e+00 : f32
    %22 = vector.broadcast %cst_17 : f32 to vector<8x512xf32>
    %23 = arith.maximumf %21, %22 : vector<8x512xf32>
    %24 = arith.truncf %23 : vector<8x512xf32> to vector<8x512xbf16>
    %c0_18 = arith.constant 0 : index
    %c0_19 = arith.constant 0 : index
    %25 = vector.load %arg8[%c0_18, %c0_19] : memref<512x512xbf16, #tpu.memory_space<vmem>>, vector<512x512xbf16>
    %cst_20 = arith.constant dense<0.000000e+00> : vector<8x512xf32>
    %26 = tpu.matmul %24, %25, %cst_20 {dimension_numbers = #tpu.dot_dimension_numbers<[1], [0], [0], [1], [0, 0, 1, 1], [], []>} : vector<8x512xbf16>, vector<512x512xbf16>, vector<8x512xf32> -> vector<8x512xf32>
    %c0_21 = arith.constant 0 : index
    %c0_22 = arith.constant 0 : index
    %27 = vector.load %arg9[%c0_21, %c0_22] : memref<1x512xf32, #tpu.memory_space<vmem>>, vector<1x512xf32>
    %28 = vector.broadcast %27 : vector<1x512xf32> to vector<8x512xf32>
    %29 = arith.addf %26, %28 : vector<8x512xf32>
    %cst_23 = arith.constant 0.000000e+00 : f32
    %30 = vector.broadcast %cst_23 : f32 to vector<8x512xf32>
    %31 = arith.maximumf %29, %30 : vector<8x512xf32>
    %32 = arith.truncf %31 : vector<8x512xf32> to vector<8x512xbf16>
    %c0_24 = arith.constant 0 : index
    %c0_25 = arith.constant 0 : index
    %33 = vector.load %arg10[%c0_24, %c0_25] : memref<512x512xbf16, #tpu.memory_space<vmem>>, vector<512x512xbf16>
    %cst_26 = arith.constant dense<0.000000e+00> : vector<8x512xf32>
    %34 = tpu.matmul %32, %33, %cst_26 {dimension_numbers = #tpu.dot_dimension_numbers<[1], [0], [0], [1], [0, 0, 1, 1], [], []>} : vector<8x512xbf16>, vector<512x512xbf16>, vector<8x512xf32> -> vector<8x512xf32>
    %c0_27 = arith.constant 0 : index
    %c0_28 = arith.constant 0 : index
    %35 = vector.load %arg11[%c0_27, %c0_28] : memref<1x512xf32, #tpu.memory_space<vmem>>, vector<1x512xf32>
    %36 = vector.broadcast %35 : vector<1x512xf32> to vector<8x512xf32>
    %37 = arith.addf %34, %36 : vector<8x512xf32>
    %cst_29 = arith.constant 0.000000e+00 : f32
    %38 = vector.broadcast %cst_29 : f32 to vector<8x512xf32>
    %39 = arith.maximumf %37, %38 : vector<8x512xf32>
    %40 = arith.truncf %39 : vector<8x512xf32> to vector<8x512xbf16>
    %c0_30 = arith.constant 0 : index
    %c0_31 = arith.constant 0 : index
    %41 = vector.load %arg12[%c0_30, %c0_31] : memref<512x256xbf16, #tpu.memory_space<vmem>>, vector<512x256xbf16>
    %cst_32 = arith.constant dense<0.000000e+00> : vector<8x256xf32>
    %42 = tpu.matmul %40, %41, %cst_32 {dimension_numbers = #tpu.dot_dimension_numbers<[1], [0], [0], [1], [0, 0, 1, 1], [], []>} : vector<8x512xbf16>, vector<512x256xbf16>, vector<8x256xf32> -> vector<8x256xf32>
    %c0_33 = arith.constant 0 : index
    %c0_34 = arith.constant 0 : index
    %43 = vector.load %arg13[%c0_33, %c0_34] : memref<1x256xf32, #tpu.memory_space<vmem>>, vector<1x256xf32>
    %44 = vector.broadcast %43 : vector<1x256xf32> to vector<8x256xf32>
    %45 = arith.addf %42, %44 : vector<8x256xf32>
    %c0_35 = arith.constant 0 : index
    %c0_36 = arith.constant 0 : index
    %46 = vector.load %arg14[%c0_35, %c0_36] : memref<8x256xf32, #tpu.memory_space<vmem>>, vector<8x256xf32>
    tpu.vector_store %arg14[%c0_35, %c0_36], %45 {strides = array<i32>} : memref<8x256xf32, #tpu.memory_space<vmem>>, vector<8x256xf32>,
    return
  }
  func.func @transform_0(%arg0: i32) -> (i32, i32) {
    %c0_i32 = arith.constant 0 : i32
    %c0_i32_0 = arith.constant 0 : i32
    return %arg0, %c0_i32 : i32, i32
  }
  func.func @transform_1(%arg0: i32) -> (i32, i32) {
    %c0_i32 = arith.constant 0 : i32
    %c0_i32_0 = arith.constant 0 : i32
    %c0_i32_1 = arith.constant 0 : i32
    return %c0_i32, %c0_i32_0 : i32, i32
  }
  func.func @transform_2(%arg0: i32) -> (i32, i32) {
    %c0_i32 = arith.constant 0 : i32
    %c0_i32_0 = arith.constant 0 : i32
    %c0_i32_1 = arith.constant 0 : i32
    return %c0_i32, %c0_i32_0 : i32, i32
  }
  func.func @transform_3(%arg0: i32) -> (i32, i32) {
    %c0_i32 = arith.constant 0 : i32
    %c0_i32_0 = arith.constant 0 : i32
    %c0_i32_1 = arith.constant 0 : i32
    return %c0_i32, %c0_i32_0 : i32, i32
  }
  func.func @transform_4(%arg0: i32) -> (i32, i32) {
    %c0_i32 = arith.constant 0 : i32
    %c0_i32_0 = arith.constant 0 : i32
    %c0_i32_1 = arith.constant 0 : i32
    return %c0_i32, %c0_i32_0 : i32, i32
  }
  func.func @transform_5(%arg0: i32) -> (i32, i32) {
    %c0_i32 = arith.constant 0 : i32
    %c0_i32_0 = arith.constant 0 : i32
    %c0_i32_1 = arith.constant 0 : i32
    return %c0_i32, %c0_i32_0 : i32, i32
  }
  func.func @transform_6(%arg0: i32) -> (i32, i32) {
    %c0_i32 = arith.constant 0 : i32
    %c0_i32_0 = arith.constant 0 : i32
    %c0_i32_1 = arith.constant 0 : i32
    return %c0_i32, %c0_i32_0 : i32, i32
  }
  func.func @transform_7(%arg0: i32) -> (i32, i32) {
    %c0_i32 = arith.constant 0 : i32
    %c0_i32_0 = arith.constant 0 : i32
    %c0_i32_1 = arith.constant 0 : i32
    return %c0_i32, %c0_i32_0 : i32, i32
  }
  func.func @transform_8(%arg0: i32) -> (i32, i32) {
    %c0_i32 = arith.constant 0 : i32
    %c0_i32_0 = arith.constant 0 : i32
    %c0_i32_1 = arith.constant 0 : i32
    return %c0_i32, %c0_i32_0 : i32, i32
  }
  func.func @transform_9(%arg0: i32) -> (i32, i32) {
    %c0_i32 = arith.constant 0 : i32
    %c0_i32_0 = arith.constant 0 : i32
    %c0_i32_1 = arith.constant 0 : i32
    return %c0_i32, %c0_i32_0 : i32, i32
  }
  func.func @transform_10(%arg0: i32) -> (i32, i32) {
    %c0_i32 = arith.constant 0 : i32
    %c0_i32_0 = arith.constant 0 : i32
    %c0_i32_1 = arith.constant 0 : i32
    return %c0_i32, %c0_i32_0 : i32, i32
  }
  func.func @transform_11(%arg0: i32) -> (i32, i32) {
    %c0_i32 = arith.constant 0 : i32
    %c0_i32_0 = arith.constant 0 : i32
    %c0_i32_1 = arith.constant 0 : i32
    return %c0_i32, %c0_i32_0 : i32, i32
  }
  func.func @transform_12(%arg0: i32) -> (i32, i32) {
    %c0_i32 = arith.constant 0 : i32
    %c0_i32_0 = arith.constant 0 : i32
    %c0_i32_1 = arith.constant 0 : i32
    return %c0_i32, %c0_i32_0 : i32, i32
  }
  func.func @transform_13(%arg0: i32) -> (i32, i32) {
    %c0_i32 = arith.constant 0 : i32
    %c0_i32_0 = arith.constant 0 : i32
    return %arg0, %c0_i32 : i32, i32
  }
}

</mosaic_0001>

<llo_original>
// kernel: tpu_custom_call.1
$region0: #{tpu_custom_call.1}
  #allocation0 [shape = 'u32[]', space=smem, size = 0x4, offset = 0x4, fixed_abs, tag = 'smem constant byte address 0x4 - core index']
  #allocation1 [shape = 'u32[144,128]{1,0:T(1,128)}', space=vmem, size = 0x12000, scoped, tag = 'internal scratch']
  %s0 = inlined_call_operand.hbm [shape: bf16[8,64], index: 0, kind: input, shape index: {}]
  %s1 = inlined_call_operand.hbm [shape: bf16[64,256], index: 1, kind: input, shape index: {}]
  %s2 = inlined_call_operand.vmem [shape: f32[1,256], index: 2, kind: input, shape index: {}]
  %s3 = inlined_call_operand.hbm [shape: bf16[256,512], index: 3, kind: input, shape index: {}]
  %s4 = inlined_call_operand.vmem [shape: f32[1,512], index: 4, kind: input, shape index: {}]
  %s5 = inlined_call_operand.hbm [shape: bf16[512,512], index: 5, kind: input, shape index: {}]
  %s6 = inlined_call_operand.vmem [shape: f32[1,512], index: 6, kind: input, shape index: {}]
  %s7 = inlined_call_operand.hbm [shape: bf16[512,512], index: 7, kind: input, shape index: {}]
  %s8 = inlined_call_operand.vmem [shape: f32[1,512], index: 8, kind: input, shape index: {}]
  %s9 = inlined_call_operand.hbm [shape: bf16[512,512], index: 9, kind: input, shape index: {}]
  %s10 = inlined_call_operand.vmem [shape: f32[1,512], index: 10, kind: input, shape index: {}]
  %s11 = inlined_call_operand.hbm [shape: bf16[512,256], index: 11, kind: input, shape index: {}]
  %s12 = inlined_call_operand.vmem [shape: f32[1,256], index: 12, kind: input, shape index: {}]
  %s13 = inlined_call_operand.hbm [shape: f32[8,256], index: 13, kind: output, shape index: {}]
  %s14 = sld [smem:[#allocation0]]
  $region90: #{tpu_custom_call.1} parent=0
    _
  %s16 = ssub.s32 1, %s14
  %s17 = scalar_select 0, %s16, %s14
  $region1: #{tpu_custom_call.1} parent=0
    #allocation2 [shape = 'u8[2048]{0}', space=vmem, size = 0x800, scoped, tag = 'input window, operand 0, single buffered']
    #allocation3 [shape = 's32[1]{0}', space=sflag, size = 0x4, scoped, tag = 'scoped memory for tpu_custom_call.1']
    #allocation4 [shape = 's32[1]{0}', space=sflag, size = 0x4, scoped, tag = 'scoped memory for tpu_custom_call.1']
    #allocation5 [shape = 'u8[32768]{0}', space=vmem, size = 0x8000, scoped, tag = 'input window, operand 1, single buffered']
    #allocation6 [shape = 's32[1]{0}', space=sflag, size = 0x4, scoped, tag = 'scoped memory for tpu_custom_call.1']
    #allocation7 [shape = 'u8[262144]{0}', space=vmem, size = 0x40000, scoped, tag = 'input window, operand 3, single buffered']
    #allocation8 [shape = 'u8[524288]{0}', space=vmem, size = 0x80000, scoped, tag = 'input window, operand 5, single buffered']
    #allocation9 [shape = 's32[1]{0}', space=sflag, size = 0x4, scoped, tag = 'scoped memory for tpu_custom_call.1']
    #allocation10 [shape = 'u8[524288]{0}', space=vmem, size = 0x80000, scoped, tag = 'input window, operand 7, single buffered']
    #allocation11 [shape = 'u8[524288]{0}', space=vmem, size = 0x80000, scoped, tag = 'input window, operand 9, single buffered']
    #allocation12 [shape = 's32[1]{0}', space=sflag, size = 0x4, scoped, tag = 'scoped memory for tpu_custom_call.1']
    #allocation13 [shape = 'u8[262144]{0}', space=vmem, size = 0x40000, scoped, tag = 'input window, operand 11, single buffered']
    #allocation14 [shape = 'u8[8192]{0}', space=vmem, size = 0x2000, scoped, tag = 'output window, operand 0, single buffered']
    %18 = vsyncpa [#allocation3], 0
    %19 = vsyncpa [#allocation6], 0
    %20 = vsyncpa [#allocation9], 0
    %21 = vsyncpa [#allocation12], 0
    %22 = vsyncpa [#allocation4], 0
    // Predicated region
    $region2: #{tpu_custom_call.1} parent=1 // pred_check
      _
    $region3: #{tpu_custom_call.1} parent=1 // pred_check_branch
      %24 = sbr.rel (0) target = $region5
    $region4: #{tpu_custom_call.1} parent=1 // pred_region
      %s26 = ssub.s32 64, 64
      %27 = vsyncadd [#allocation3], %s26
      %s29 = sshll.u32 [#allocation2], 4
      %s30 = int_to_ptr.vmem [resolvable:$true] %s29
      %32 = dma.hbm_to_vmem [thread:$0]  %s0, 64, %s30, [#allocation3]
    $region5: #{tpu_custom_call.1} parent=1 // pred_fallthru
      _
    // Predicated region
    $region6: #{tpu_custom_call.1} parent=1 // pred_check
      _
    $region7: #{tpu_custom_call.1} parent=1 // pred_check_branch
      %34 = sbr.rel (0) target = $region9
    $region8: #{tpu_custom_call.1} parent=1 // pred_region
      %s36 = ssub.s32 1024, 1024
      %37 = vsyncadd [#allocation6], %s36
      %s38 = sshll.u32 [#allocation5], 4
      %s39 = int_to_ptr.vmem [resolvable:$true] %s38
      %44 = dma.hbm_to_vmem [thread:$0]  %s1, 1024, %s39, [#allocation6], 128, 128, 8
    $region9: #{tpu_custom_call.1} parent=1 // pred_fallthru
      _
    // Predicated region
    $region10: #{tpu_custom_call.1} parent=1 // pred_check
      _
    $region11: #{tpu_custom_call.1} parent=1 // pred_check_branch
      %46 = sbr.rel (0) target = $region13
    $region12: #{tpu_custom_call.1} parent=1 // pred_region
      _
    $region13: #{tpu_custom_call.1} parent=1 // pred_fallthru
      _
    // Predicated region
    $region14: #{tpu_custom_call.1} parent=1 // pred_check
      _
    $region15: #{tpu_custom_call.1} parent=1 // pred_check_branch
      %48 = sbr.rel (0) target = $region17
    $region16: #{tpu_custom_call.1} parent=1 // pred_region
      %s50 = ssub.s32 8192, 8192
      %51 = vsyncadd [#allocation6], %s50
      %s52 = sshll.u32 [#allocation7], 4
      %s53 = int_to_ptr.vmem [resolvable:$true] %s52
      %58 = dma.hbm_to_vmem [thread:$0]  %s3, 8192, %s53, [#allocation6], 256, 256, 16
    $region17: #{tpu_custom_call.1} parent=1 // pred_fallthru
      _
    // Predicated region
    $region18: #{tpu_custom_call.1} parent=1 // pred_check
      _
    $region19: #{tpu_custom_call.1} parent=1 // pred_check_branch
      %60 = sbr.rel (0) target = $region21
    $region20: #{tpu_custom_call.1} parent=1 // pred_region
      _
    $region21: #{tpu_custom_call.1} parent=1 // pred_fallthru
      _
    // Predicated region
    $region22: #{tpu_custom_call.1} parent=1 // pred_check
      _
    $region23: #{tpu_custom_call.1} parent=1 // pred_check_branch
      %62 = sbr.rel (0) target = $region25
    $region24: #{tpu_custom_call.1} parent=1 // pred_region
      %s64 = ssub.s32 16384, 16384
      %65 = vsyncadd [#allocation9], %s64
      %s66 = sshll.u32 [#allocation8], 4
      %s67 = int_to_ptr.vmem [resolvable:$true] %s66
      %72 = dma.hbm_to_vmem [thread:$0]  %s5, 16384, %s67, [#allocation9], 256, 256, 16
    $region25: #{tpu_custom_call.1} parent=1 // pred_fallthru
      _
    // Predicated region
    $region26: #{tpu_custom_call.1} parent=1 // pred_check
      _
    $region27: #{tpu_custom_call.1} parent=1 // pred_check_branch
      %74 = sbr.rel (0) target = $region29
    $region28: #{tpu_custom_call.1} parent=1 // pred_region
      _
    $region29: #{tpu_custom_call.1} parent=1 // pred_fallthru
      _
    // Predicated region
    $region30: #{tpu_custom_call.1} parent=1 // pred_check
      _
    $region31: #{tpu_custom_call.1} parent=1 // pred_check_branch
      %76 = sbr.rel (0) target = $region33
    $region32: #{tpu_custom_call.1} parent=1 // pred_region
      %s78 = ssub.s32 16384, 16384
      %79 = vsyncadd [#allocation9], %s78
      %s80 = sshll.u32 [#allocation10], 4
      %s81 = int_to_ptr.vmem [resolvable:$true] %s80
      %86 = dma.hbm_to_vmem [thread:$0]  %s7, 16384, %s81, [#allocation9], 256, 256, 16
    $region33: #{tpu_custom_call.1} parent=1 // pred_fallthru
      _
    // Predicated region
    $region34: #{tpu_custom_call.1} parent=1 // pred_check
      _
    $region35: #{tpu_custom_call.1} parent=1 // pred_check_branch
      %88 = sbr.rel (0) target = $region37
    $region36: #{tpu_custom_call.1} parent=1 // pred_region
      _
    $region37: #{tpu_custom_call.1} parent=1 // pred_fallthru
      _
    // Predicated region
    $region38: #{tpu_custom_call.1} parent=1 // pred_check
      _
    $region39: #{tpu_custom_call.1} parent=1 // pred_check_branch
      %90 = sbr.rel (0) target = $region41
    $region40: #{tpu_custom_call.1} parent=1 // pred_region
      %s92 = ssub.s32 16384, 16384
      %93 = vsyncadd [#allocation12], %s92
      %s94 = sshll.u32 [#allocation11], 4
      %s95 = int_to_ptr.vmem [resolvable:$true] %s94
      %100 = dma.hbm_to_vmem [thread:$0]  %s9, 16384, %s95, [#allocation12], 256, 256, 16
    $region41: #{tpu_custom_call.1} parent=1 // pred_fallthru
      _
    // Predicated region
    $region42: #{tpu_custom_call.1} parent=1 // pred_check
      _
    $region43: #{tpu_custom_call.1} parent=1 // pred_check_branch
      %102 = sbr.rel (0) target = $region45
    $region44: #{tpu_custom_call.1} parent=1 // pred_region
      _
    $region45: #{tpu_custom_call.1} parent=1 // pred_fallthru
      _
    // Predicated region
    $region46: #{tpu_custom_call.1} parent=1 // pred_check
      _
    $region47: #{tpu_custom_call.1} parent=1 // pred_check_branch
      %104 = sbr.rel (0) target = $region49
    $region48: #{tpu_custom_call.1} parent=1 // pred_region
      %s106 = ssub.s32 8192, 8192
      %107 = vsyncadd [#allocation12], %s106
      %s108 = sshll.u32 [#allocation13], 4
      %s109 = int_to_ptr.vmem [resolvable:$true] %s108
      %114 = dma.hbm_to_vmem [thread:$0]  %s11, 8192, %s109, [#allocation12], 128, 128, 8
    $region49: #{tpu_custom_call.1} parent=1 // pred_fallthru
      _
    // Predicated region
    $region50: #{tpu_custom_call.1} parent=1 // pred_check
      _
    $region51: #{tpu_custom_call.1} parent=1 // pred_check_branch
      %116 = sbr.rel (0) target = $region53
    $region52: #{tpu_custom_call.1} parent=1 // pred_region
      _
    $region53: #{tpu_custom_call.1} parent=1 // pred_fallthru
      _
    // Predicated region
    $region54: #{tpu_custom_call.1} parent=1 // pred_check
      _
    $region55: #{tpu_custom_call.1} parent=1 // pred_check_branch
      %118 = sbr.rel (0) target = $region57
    $region56: #{tpu_custom_call.1} parent=1 // pred_region
      %119 = dma.done [#allocation3], 64
    $region57: #{tpu_custom_call.1} parent=1 // pred_fallthru
      _
    // Predicated region
    $region58: #{tpu_custom_call.1} parent=1 // pred_check
      _
    $region59: #{tpu_custom_call.1} parent=1 // pred_check_branch
      %121 = sbr.rel (0) target = $region61
    $region60: #{tpu_custom_call.1} parent=1 // pred_region
      %122 = dma.done [#allocation6], 1024
    $region61: #{tpu_custom_call.1} parent=1 // pred_fallthru
      _
    // Predicated region
    $region62: #{tpu_custom_call.1} parent=1 // pred_check
      _
    $region63: #{tpu_custom_call.1} parent=1 // pred_check_branch
      %124 = sbr.rel (0) target = $region65
    $region64: #{tpu_custom_call.1} parent=1 // pred_region
      %125 = dma.done [#allocation6], 8192
    $region65: #{tpu_custom_call.1} parent=1 // pred_fallthru
      _
    // Predicated region
    $region66: #{tpu_custom_call.1} parent=1 // pred_check
      _
    $region67: #{tpu_custom_call.1} parent=1 // pred_check_branch
      %127 = sbr.rel (0) target = $region69
    $region68: #{tpu_custom_call.1} parent=1 // pred_region
      %128 = dma.done [#allocation9], 16384
    $region69: #{tpu_custom_call.1} parent=1 // pred_fallthru
      _
    // Predicated region
    $region70: #{tpu_custom_call.1} parent=1 // pred_check
      _
    $region71: #{tpu_custom_call.1} parent=1 // pred_check_branch
      %130 = sbr.rel (0) target = $region73
    $region72: #{tpu_custom_call.1} parent=1 // pred_region
      %131 = dma.done [#allocation9], 16384
    $region73: #{tpu_custom_call.1} parent=1 // pred_fallthru
      _
    // Predicated region
    $region74: #{tpu_custom_call.1} parent=1 // pred_check
      _
    $region75: #{tpu_custom_call.1} parent=1 // pred_check_branch
      %133 = sbr.rel (0) target = $region77
    $region76: #{tpu_custom_call.1} parent=1 // pred_region
      %134 = dma.done [#allocation12], 16384
    $region77: #{tpu_custom_call.1} parent=1 // pred_fallthru
      _
    // Predicated region
    $region78: #{tpu_custom_call.1} parent=1 // pred_check
      _
    $region79: #{tpu_custom_call.1} parent=1 // pred_check_branch
      %136 = sbr.rel (0) target = $region81
    $region80: #{tpu_custom_call.1} parent=1 // pred_region
      %137 = dma.done [#allocation12], 8192
    $region81: #{tpu_custom_call.1} parent=1 // pred_fallthru
      _
    %v139 = vld [vmem:[#allocation2] sm:$0xf]
    %v140 = vld [vmem:[#allocation5] sm:$0xff]
    %v141 = vld [vmem:[#allocation5 + $0x8] sm:$0xff]
    %v142 = vld [vmem:[#allocation5 + $0x10] sm:$0xff]
    %v143 = vld [vmem:[#allocation5 + $0x18] sm:$0xff]
    %v144 = vld [vmem:[#allocation5 + $0x20] sm:$0xff]
    %v145 = vld [vmem:[#allocation5 + $0x28] sm:$0xff]
    %v146 = vld [vmem:[#allocation5 + $0x30] sm:$0xff]
    %v147 = vld [vmem:[#allocation5 + $0x38] sm:$0xff]
    %v148 = vld [vmem:[%s2] sm:$0x3]
    %v150 = vlaneseq
    %v151 = vshrl.u32 %v150, 7
    %v152 = vsub.s32 0, %v151
    %v153 = vrot.slane %v148, %v152
    %v154 = vlaneseq
    %v155 = vshrl.u32 %v154, 7
    %v156 = vsub.s32 1, %v155
    %v157 = vrot.slane %v148, %v156
    %v168 = vunpack.c.l.b16 %v140
    %v169 = vunpack.c.h.b16 %v140
    %v170 = vunpack.c.l.b16 %v141
    %v171 = vunpack.c.h.b16 %v141
    %v172 = vunpack.c.l.b16 %v142
    %v173 = vunpack.c.h.b16 %v142
    %v174 = vunpack.c.l.b16 %v143
    %v175 = vunpack.c.h.b16 %v143
    %v176 = vunpack.c.l.b16 %v144
    %v177 = vunpack.c.h.b16 %v144
    %v178 = vunpack.c.l.b16 %v145
    %v179 = vunpack.c.h.b16 %v145
    %v180 = vunpack.c.l.b16 %v146
    %v181 = vunpack.c.h.b16 %v146
    %v182 = vunpack.c.l.b16 %v147
    %v183 = vunpack.c.h.b16 %v147
    %v184 = vpack.c.b16 %v170, %v168
    %v185 = vpack.c.b16 %v171, %v169
    %v186 = vpack.c.b16 %v174, %v172
    %v187 = vpack.c.b16 %v175, %v173
    %v188 = vpack.c.b16 %v178, %v176
    %v189 = vpack.c.b16 %v179, %v177
    %v190 = vpack.c.b16 %v182, %v180
    %v191 = vpack.c.b16 %v183, %v181
    %vm200 = vcmask 523264
    %v202 = vsel %vm200, %v139, 0
    %204 = vmatprep.subr.bf16.mxu0 %v185
    %205 = vmatpush1.bf16.msra.mxu0 %v184
    %206 = vmatprep.subr.bf16.mxu0 %v187
    %207 = vmatpush1.bf16.msra.mxu0 %v186
    %208 = vmatprep.subr.bf16.mxu0 %v189
    %209 = vmatpush1.bf16.msra.mxu0 %v188
    %210 = vmatprep.subr.bf16.mxu0 %v191
    %211 = vmatpush1.bf16.msra.mxu0 %v190
    %212 = vmatprep.subr.bf16.mxu0 0
    %213 = vmatpush1.bf16.msra.mxu0 0
    %214 = vmatprep.subr.bf16.mxu0 0
    %215 = vmatpush1.bf16.msra.mxu0 0
    %216 = vmatprep.subr.bf16.mxu0 0
    %217 = vmatpush1.bf16.msra.mxu0 0
    %218 = vmatprep.subr.bf16.mxu0 0
    %219 = vmatpush1.bf16.msra.mxu0 0
    %220 = vmatprep.subr.bf16.mxu0 0
    %221 = vmatpush1.bf16.msra.mxu0 0
    %222 = vmatprep.subr.bf16.mxu0 0
    %223 = vmatpush1.bf16.msra.mxu0 0
    %224 = vmatprep.subr.bf16.mxu0 0
    %225 = vmatpush1.bf16.msra.mxu0 0
    %226 = vmatprep.subr.bf16.mxu0 0
    %227 = vmatpush1.bf16.msra.mxu0 0
    %228 = vmatprep.subr.bf16.mxu0 0
    %229 = vmatpush1.bf16.msra.mxu0 0
    %230 = vmatprep.subr.bf16.mxu0 0
    %231 = vmatpush1.bf16.msra.mxu0 0
    %232 = vmatprep.subr.bf16.mxu0 0
    %233 = vmatpush1.bf16.msra.mxu0 0
    %234 = vmatprep.subr.bf16.mxu0 0
    %235 = vmatpush1.bf16.msra.mxu0 0
    %236 = vmatprep.mubr.bf16.mxu0 0
    %237 = vmatmul.mubr.bf16.gmra.mrb[0].mxu0 %v202
    %v238 = vpop.f32.mrb[0].mxu0
    %v239 = vadd.f32 %v153, %v238
    %v240 = vpop.f32.mrb[0].mxu0
    %v241 = vadd.f32 %v157, %v240
    %v242 = vpop.f32.mrb[0].mxu0
    %v243 = vpop.f32.mrb[0].mxu0
    %244 = vdwg.mxu0
    %v245 = vmax.f32 %v239, 0.0
    %v246 = vmax.f32 %v241, 0.0
    %v247 = vpack.c.bf16 %v245, %v245
    %v248 = vpack.c.bf16 %v246, %v246
    %v249 = vld [vmem:[#allocation7] sm:$0xff]
    %v250 = vld [vmem:[#allocation7 + $0x8] sm:$0xff]
    %v251 = vld [vmem:[#allocation7 + $0x10] sm:$0xff]
    %v252 = vld [vmem:[#allocation7 + $0x18] sm:$0xff]
    %v253 = vld [vmem:[#allocation7 + $0x20] sm:$0xff]
    %v254 = vld [vmem:[#allocation7 + $0x28] sm:$0xff]
    %v255 = vld [vmem:[#allocation7 + $0x30] sm:$0xff]
    %v256 = vld [vmem:[#allocation7 + $0x38] sm:$0xff]
    %v257 = vld [vmem:[#allocation7 + $0x40] sm:$0xff]
    %v258 = vld [vmem:[#allocation7 + $0x48] sm:$0xff]
    %v259 = vld [vmem:[#allocation7 + $0x50] sm:$0xff]
    %v260 = vld [vmem:[#allocation7 + $0x58] sm:$0xff]
    %v261 = vld [vmem:[#allocation7 + $0x60] sm:$0xff]
    %v262 = vld [vmem:[#allocation7 + $0x68] sm:$0xff]
    %v263 = vld [vmem:[#allocation7 + $0x70] sm:$0xff]
    %v264 = vld [vmem:[#allocation7 + $0x78] sm:$0xff]
    %v265 = vld [vmem:[#allocation7 + $0x80] sm:$0xff]
    %v266 = vld [vmem:[#allocation7 + $0x88] sm:$0xff]
    %v267 = vld [vmem:[#allocation7 + $0x90] sm:$0xff]
    %v268 = vld [vmem:[#allocation7 + $0x98] sm:$0xff]
    %v269 = vld [vmem:[#allocation7 + $0xa0] sm:$0xff]
    %v270 = vld [vmem:[#allocation7 + $0xa8] sm:$0xff]
    %v271 = vld [vmem:[#allocation7 + $0xb0] sm:$0xff]
    %v272 = vld [vmem:[#allocation7 + $0xb8] sm:$0xff]
    %v273 = vld [vmem:[#allocation7 + $0xc0] sm:$0xff]
    %v274 = vld [vmem:[#allocation7 + $0xc8] sm:$0xff]
    %v275 = vld [vmem:[#allocation7 + $0xd0] sm:$0xff]
    %v276 = vld [vmem:[#allocation7 + $0xd8] sm:$0xff]
    %v277 = vld [vmem:[#allocation7 + $0xe0] sm:$0xff]
    %v278 = vld [vmem:[#allocation7 + $0xe8] sm:$0xff]
    %v279 = vld [vmem:[#allocation7 + $0xf0] sm:$0xff]
    %v280 = vld [vmem:[#allocation7 + $0xf8] sm:$0xff]
    %v281 = vld [vmem:[#allocation7 + $0x100] sm:$0xff]
    %v282 = vld [vmem:[#allocation7 + $0x108] sm:$0xff]
    %v283 = vld [vmem:[#allocation7 + $0x110] sm:$0xff]
    %v284 = vld [vmem:[#allocation7 + $0x118] sm:$0xff]
    %v285 = vld [vmem:[#allocation7 + $0x120] sm:$0xff]
    %v286 = vld [vmem:[#allocation7 + $0x128] sm:$0xff]
    %v287 = vld [vmem:[#allocation7 + $0x130] sm:$0xff]
    %v288 = vld [vmem:[#allocation7 + $0x138] sm:$0xff]
    %v289 = vld [vmem:[#allocation7 + $0x140] sm:$0xff]
    %v290 = vld [vmem:[#allocation7 + $0x148] sm:$0xff]
    %v291 = vld [vmem:[#allocation7 + $0x150] sm:$0xff]
    %v292 = vld [vmem:[#allocation7 + $0x158] sm:$0xff]
    %v293 = vld [vmem:[#allocation7 + $0x160] sm:$0xff]
    %v294 = vld [vmem:[#allocation7 + $0x168] sm:$0xff]
    %v295 = vld [vmem:[#allocation7 + $0x170] sm:$0xff]
    %v296 = vld [vmem:[#allocation7 + $0x178] sm:$0xff]
    %v297 = vld [vmem:[#allocation7 + $0x180] sm:$0xff]
    %v298 = vld [vmem:[#allocation7 + $0x188] sm:$0xff]
    %v299 = vld [vmem:[#allocation7 + $0x190] sm:$0xff]
    %v300 = vld [vmem:[#allocation7 + $0x198] sm:$0xff]
    %v301 = vld [vmem:[#allocation7 + $0x1a0] sm:$0xff]
    %v302 = vld [vmem:[#allocation7 + $0x1a8] sm:$0xff]
    %v303 = vld [vmem:[#allocation7 + $0x1b0] sm:$0xff]
    %v304 = vld [vmem:[#allocation7 + $0x1b8] sm:$0xff]
    %v305 = vld [vmem:[#allocation7 + $0x1c0] sm:$0xff]
    %v306 = vld [vmem:[#allocation7 + $0x1c8] sm:$0xff]
    %v307 = vld [vmem:[#allocation7 + $0x1d0] sm:$0xff]
    %v308 = vld [vmem:[#allocation7 + $0x1d8] sm:$0xff]
    %v309 = vld [vmem:[#allocation7 + $0x1e0] sm:$0xff]
    %v310 = vld [vmem:[#allocation7 + $0x1e8] sm:$0xff]
    %v311 = vld [vmem:[#allocation7 + $0x1f0] sm:$0xff]
    %v312 = vld [vmem:[#allocation7 + $0x1f8] sm:$0xff]
    %v313 = vld [vmem:[%s4] sm:$0xf]
    %v315 = vlaneseq
    %v316 = vshrl.u32 %v315, 7
    %v317 = vsub.s32 0, %v316
    %v318 = vrot.slane %v313, %v317
    %v319 = vlaneseq
    %v320 = vshrl.u32 %v319, 7
    %v321 = vsub.s32 1, %v320
    %v322 = vrot.slane %v313, %v321
    %v323 = vlaneseq
    %v324 = vshrl.u32 %v323, 7
    %v325 = vsub.s32 2, %v324
    %v326 = vrot.slane %v313, %v325
    %v327 = vlaneseq
    %v328 = vshrl.u32 %v327, 7
    %v329 = vsub.s32 3, %v328
    %v330 = vrot.slane %v313, %v329
    %v399 = vunpack.c.l.b16 %v249
    %v400 = vunpack.c.h.b16 %v249
    %v401 = vunpack.c.l.b16 %v250
    %v402 = vunpack.c.h.b16 %v250
    %v403 = vunpack.c.l.b16 %v251
    %v404 = vunpack.c.h.b16 %v251
    %v405 = vunpack.c.l.b16 %v252
    %v406 = vunpack.c.h.b16 %v252
    %v407 = vunpack.c.l.b16 %v253
    %v408 = vunpack.c.h.b16 %v253
    %v409 = vunpack.c.l.b16 %v254
    %v410 = vunpack.c.h.b16 %v254
    %v411 = vunpack.c.l.b16 %v255
    %v412 = vunpack.c.h.b16 %v255
    %v413 = vunpack.c.l.b16 %v256
    %v414 = vunpack.c.h.b16 %v256
    %v415 = vunpack.c.l.b16 %v257
    %v416 = vunpack.c.h.b16 %v257
    %v417 = vunpack.c.l.b16 %v258
    %v418 = vunpack.c.h.b16 %v258
    %v419 = vunpack.c.l.b16 %v259
    %v420 = vunpack.c.h.b16 %v259
    %v421 = vunpack.c.l.b16 %v260
    %v422 = vunpack.c.h.b16 %v260
    %v423 = vunpack.c.l.b16 %v261
    %v424 = vunpack.c.h.b16 %v261
    %v425 = vunpack.c.l.b16 %v262
    %v426 = vunpack.c.h.b16 %v262
    %v427 = vunpack.c.l.b16 %v263
    %v428 = vunpack.c.h.b16 %v263
    %v429 = vunpack.c.l.b16 %v264
    %v430 = vunpack.c.h.b16 %v264
    %v431 = vunpack.c.l.b16 %v265
    %v432 = vunpack.c.h.b16 %v265
    %v433 = vunpack.c.l.b16 %v266
    %v434 = vunpack.c.h.b16 %v266
    %v435 = vunpack.c.l.b16 %v267
    %v436 = vunpack.c.h.b16 %v267
    %v437 = vunpack.c.l.b16 %v268
    %v438 = vunpack.c.h.b16 %v268
    %v439 = vunpack.c.l.b16 %v269
    %v440 = vunpack.c.h.b16 %v269
    %v441 = vunpack.c.l.b16 %v270
    %v442 = vunpack.c.h.b16 %v270
    %v443 = vunpack.c.l.b16 %v271
    %v444 = vunpack.c.h.b16 %v271
    %v445 = vunpack.c.l.b16 %v272
    %v446 = vunpack.c.h.b16 %v272
    %v447 = vunpack.c.l.b16 %v273
    %v448 = vunpack.c.h.b16 %v273
    %v449 = vunpack.c.l.b16 %v274
    %v450 = vunpack.c.h.b16 %v274
    %v451 = vunpack.c.l.b16 %v275
    %v452 = vunpack.c.h.b16 %v275
    %v453 = vunpack.c.l.b16 %v276
    %v454 = vunpack.c.h.b16 %v276
    %v455 = vunpack.c.l.b16 %v277
    %v456 = vunpack.c.h.b16 %v277
    %v457 = vunpack.c.l.b16 %v278
    %v458 = vunpack.c.h.b16 %v278
    %v459 = vunpack.c.l.b16 %v279
    %v460 = vunpack.c.h.b16 %v279
    %v461 = vunpack.c.l.b16 %v280
    %v462 = vunpack.c.h.b16 %v280
    %v463 = vunpack.c.l.b16 %v281
    %v464 = vunpack.c.h.b16 %v281
    %v465 = vunpack.c.l.b16 %v282
    %v466 = vunpack.c.h.b16 %v282
    %v467 = vunpack.c.l.b16 %v283
    %v468 = vunpack.c.h.b16 %v283
    %v469 = vunpack.c.l.b16 %v284
    %v470 = vunpack.c.h.b16 %v284
    %v471 = vunpack.c.l.b16 %v285
    %v472 = vunpack.c.h.b16 %v285
    %v473 = vunpack.c.l.b16 %v286
    %v474 = vunpack.c.h.b16 %v286
    %v475 = vunpack.c.l.b16 %v287
    %v476 = vunpack.c.h.b16 %v287
    %v477 = vunpack.c.l.b16 %v288
    %v478 = vunpack.c.h.b16 %v288
    %v479 = vunpack.c.l.b16 %v289
    %v480 = vunpack.c.h.b16 %v289
    %v481 = vunpack.c.l.b16 %v290
    %v482 = vunpack.c.h.b16 %v290
    %v483 = vunpack.c.l.b16 %v291
    %v484 = vunpack.c.h.b16 %v291
    %v485 = vunpack.c.l.b16 %v292
    %v486 = vunpack.c.h.b16 %v292
    %v487 = vunpack.c.l.b16 %v293
    %v488 = vunpack.c.h.b16 %v293
    %v489 = vunpack.c.l.b16 %v294
    %v490 = vunpack.c.h.b16 %v294
    %v491 = vunpack.c.l.b16 %v295
    %v492 = vunpack.c.h.b16 %v295
    %v493 = vunpack.c.l.b16 %v296
    %v494 = vunpack.c.h.b16 %v296
    %v495 = vunpack.c.l.b16 %v297
    %v496 = vunpack.c.h.b16 %v297
    %v497 = vunpack.c.l.b16 %v298
    %v498 = vunpack.c.h.b16 %v298
    %v499 = vunpack.c.l.b16 %v299
    %v500 = vunpack.c.h.b16 %v299
    %v501 = vunpack.c.l.b16 %v300
    %v502 = vunpack.c.h.b16 %v300
    %v503 = vunpack.c.l.b16 %v301
    %v504 = vunpack.c.h.b16 %v301
    %v505 = vunpack.c.l.b16 %v302
    %v506 = vunpack.c.h.b16 %v302
    %v507 = vunpack.c.l.b16 %v303
    %v508 = vunpack.c.h.b16 %v303
    %v509 = vunpack.c.l.b16 %v304
    %v510 = vunpack.c.h.b16 %v304
    %v511 = vunpack.c.l.b16 %v305
    %v512 = vunpack.c.h.b16 %v305
    %v513 = vunpack.c.l.b16 %v306
    %v514 = vunpack.c.h.b16 %v306
    %v515 = vunpack.c.l.b16 %v307
    %v516 = vunpack.c.h.b16 %v307
    %v517 = vunpack.c.l.b16 %v308
    %v518 = vunpack.c.h.b16 %v308
    %v519 = vunpack.c.l.b16 %v309
    %v520 = vunpack.c.h.b16 %v309
    %v521 = vunpack.c.l.b16 %v310
    %v522 = vunpack.c.h.b16 %v310
    %v523 = vunpack.c.l.b16 %v311
    %v524 = vunpack.c.h.b16 %v311
    %v525 = vunpack.c.l.b16 %v312
    %v526 = vunpack.c.h.b16 %v312
    %v527 = vpack.c.b16 %v403, %v399
    %v528 = vpack.c.b16 %v404, %v400
    %v529 = vpack.c.b16 %v405, %v401
    %v530 = vpack.c.b16 %v406, %v402
    %v531 = vpack.c.b16 %v411, %v407
    %v532 = vpack.c.b16 %v412, %v408
    %v533 = vpack.c.b16 %v413, %v409
    %v534 = vpack.c.b16 %v414, %v410
    %v535 = vpack.c.b16 %v419, %v415
    %v536 = vpack.c.b16 %v420, %v416
    %v537 = vpack.c.b16 %v421, %v417
    %v538 = vpack.c.b16 %v422, %v418
    %v539 = vpack.c.b16 %v427, %v423
    %v540 = vpack.c.b16 %v428, %v424
    %v541 = vpack.c.b16 %v429, %v425
    %v542 = vpack.c.b16 %v430, %v426
    %v543 = vpack.c.b16 %v435, %v431
    %v544 = vpack.c.b16 %v436, %v432
    %v545 = vpack.c.b16 %v437, %v433
    %v546 = vpack.c.b16 %v438, %v434
    %v547 = vpack.c.b16 %v443, %v439
    %v548 = vpack.c.b16 %v444, %v440
    %v549 = vpack.c.b16 %v445, %v441
    %v550 = vpack.c.b16 %v446, %v442
    %v551 = vpack.c.b16 %v451, %v447
    %v552 = vpack.c.b16 %v452, %v448
    %v553 = vpack.c.b16 %v453, %v449
    %v554 = vpack.c.b16 %v454, %v450
    %v555 = vpack.c.b16 %v459, %v455
    %v556 = vpack.c.b16 %v460, %v456
    %v557 = vpack.c.b16 %v461, %v457
    %v558 = vpack.c.b16 %v462, %v458
    %v559 = vpack.c.b16 %v467, %v463
    %v560 = vpack.c.b16 %v468, %v464
    %v561 = vpack.c.b16 %v469, %v465
    %v562 = vpack.c.b16 %v470, %v466
    %v563 = vpack.c.b16 %v475, %v471
    %v564 = vpack.c.b16 %v476, %v472
    %v565 = vpack.c.b16 %v477, %v473
    %v566 = vpack.c.b16 %v478, %v474
    %v567 = vpack.c.b16 %v483, %v479
    %v568 = vpack.c.b16 %v484, %v480
    %v569 = vpack.c.b16 %v485, %v481
    %v570 = vpack.c.b16 %v486, %v482
    %v571 = vpack.c.b16 %v491, %v487
    %v572 = vpack.c.b16 %v492, %v488
    %v573 = vpack.c.b16 %v493, %v489
    %v574 = vpack.c.b16 %v494, %v490
    %v575 = vpack.c.b16 %v499, %v495
    %v576 = vpack.c.b16 %v500, %v496
    %v577 = vpack.c.b16 %v501, %v497
    %v578 = vpack.c.b16 %v502, %v498
    %v579 = vpack.c.b16 %v507, %v503
    %v580 = vpack.c.b16 %v508, %v504
    %v581 = vpack.c.b16 %v509, %v505
    %v582 = vpack.c.b16 %v510, %v506
    %v583 = vpack.c.b16 %v515, %v511
    %v584 = vpack.c.b16 %v516, %v512
    %v585 = vpack.c.b16 %v517, %v513
    %v586 = vpack.c.b16 %v518, %v514
    %v587 = vpack.c.b16 %v523, %v519
    %v588 = vpack.c.b16 %v524, %v520
    %v589 = vpack.c.b16 %v525, %v521
    %v590 = vpack.c.b16 %v526, %v522
    %655 = vmatprep.subr.bf16.mxu0 %v528
    %656 = vmatpush1.bf16.msra.mxu0 %v527
    %657 = vmatprep.subr.bf16.mxu0 %v532
    %658 = vmatpush1.bf16.msra.mxu0 %v531
    %659 = vmatprep.subr.bf16.mxu0 %v536
    %660 = vmatpush1.bf16.msra.mxu0 %v535
    %661 = vmatprep.subr.bf16.mxu0 %v540
    %662 = vmatpush1.bf16.msra.mxu0 %v539
    %663 = vmatprep.subr.bf16.mxu0 %v544
    %664 = vmatpush1.bf16.msra.mxu0 %v543
    %665 = vmatprep.subr.bf16.mxu0 %v548
    %666 = vmatpush1.bf16.msra.mxu0 %v547
    %667 = vmatprep.subr.bf16.mxu0 %v552
    %668 = vmatpush1.bf16.msra.mxu0 %v551
    %669 = vmatprep.subr.bf16.mxu0 %v556
    %670 = vmatpush1.bf16.msra.mxu0 %v555
    %671 = vmatprep.subr.bf16.mxu0 %v560
    %672 = vmatpush1.bf16.msra.mxu0 %v559
    %673 = vmatprep.subr.bf16.mxu0 %v564
    %674 = vmatpush1.bf16.msra.mxu0 %v563
    %675 = vmatprep.subr.bf16.mxu0 %v568
    %676 = vmatpush1.bf16.msra.mxu0 %v567
    %677 = vmatprep.subr.bf16.mxu0 %v572
    %678 = vmatpush1.bf16.msra.mxu0 %v571
    %679 = vmatprep.subr.bf16.mxu0 %v576
    %680 = vmatpush1.bf16.msra.mxu0 %v575
    %681 = vmatprep.subr.bf16.mxu0 %v580
    %682 = vmatpush1.bf16.msra.mxu0 %v579
    %683 = vmatprep.subr.bf16.mxu0 %v584
    %684 = vmatpush1.bf16.msra.mxu0 %v583
    %685 = vmatprep.subr.bf16.mxu0 %v588
    %686 = vmatpush1.bf16.msra.mxu0 %v587
    %687 = vmatprep.mubr.bf16.mxu0 %v248
    %688 = vmatmul.mubr.bf16.gmra.mrb[0].mxu0 %v247
    %v689 = vpop.f32.mrb[0].mxu0
    %v690 = vadd.f32 %v318, %v689
    %v691 = vpop.f32.mrb[0].mxu0
    %v692 = vadd.f32 %v322, %v691
    %v693 = vpop.f32.mrb[0].mxu0
    %v694 = vpop.f32.mrb[0].mxu0
    %695 = vdwg.mxu0
    %696 = vmatprep.subr.bf16.mxu0 %v530
    %697 = vmatpush1.bf16.msra.mxu0 %v529
    %698 = vmatprep.subr.bf16.mxu0 %v534
    %699 = vmatpush1.bf16.msra.mxu0 %v533
    %700 = vmatprep.subr.bf16.mxu0 %v538
    %701 = vmatpush1.bf16.msra.mxu0 %v537
    %702 = vmatprep.subr.bf16.mxu0 %v542
    %703 = vmatpush1.bf16.msra.mxu0 %v541
    %704 = vmatprep.subr.bf16.mxu0 %v546
    %705 = vmatpush1.bf16.msra.mxu0 %v545
    %706 = vmatprep.subr.bf16.mxu0 %v550
    %707 = vmatpush1.bf16.msra.mxu0 %v549
    %708 = vmatprep.subr.bf16.mxu0 %v554
    %709 = vmatpush1.bf16.msra.mxu0 %v553
    %710 = vmatprep.subr.bf16.mxu0 %v558
    %711 = vmatpush1.bf16.msra.mxu0 %v557
    %712 = vmatprep.subr.bf16.mxu0 %v562
    %713 = vmatpush1.bf16.msra.mxu0 %v561
    %714 = vmatprep.subr.bf16.mxu0 %v566
    %715 = vmatpush1.bf16.msra.mxu0 %v565
    %716 = vmatprep.subr.bf16.mxu0 %v570
    %717 = vmatpush1.bf16.msra.mxu0 %v569
    %718 = vmatprep.subr.bf16.mxu0 %v574
    %719 = vmatpush1.bf16.msra.mxu0 %v573
    %720 = vmatprep.subr.bf16.mxu0 %v578
    %721 = vmatpush1.bf16.msra.mxu0 %v577
    %722 = vmatprep.subr.bf16.mxu0 %v582
    %723 = vmatpush1.bf16.msra.mxu0 %v581
    %724 = vmatprep.subr.bf16.mxu0 %v586
    %725 = vmatpush1.bf16.msra.mxu0 %v585
    %726 = vmatprep.subr.bf16.mxu0 %v590
    %727 = vmatpush1.bf16.msra.mxu0 %v589
    %728 = vmatprep.mubr.bf16.mxu0 %v248
    %729 = vmatmul.mubr.bf16.gmra.mrb[0].mxu0 %v247
    %v730 = vpop.f32.mrb[0].mxu0
    %v731 = vadd.f32 %v326, %v730
    %v732 = vpop.f32.mrb[0].mxu0
    %v733 = vadd.f32 %v330, %v732
    %v734 = vpop.f32.mrb[0].mxu0
    %v735 = vpop.f32.mrb[0].mxu0
    %736 = vdwg.mxu0
    %v737 = vmax.f32 %v690, 0.0
    %v738 = vmax.f32 %v692, 0.0
    %v739 = vmax.f32 %v731, 0.0
    %v740 = vmax.f32 %v733, 0.0
    %v741 = vpack.c.bf16 %v737, %v737
    %v742 = vpack.c.bf16 %v738, %v738
    %v743 = vpack.c.bf16 %v739, %v739
    %v744 = vpack.c.bf16 %v740, %v740
    %v745 = vld [vmem:[#allocation8] sm:$0xff]
    %v746 = vld [vmem:[#allocation8 + $0x8] sm:$0xff]
    %v747 = vld [vmem:[#allocation8 + $0x10] sm:$0xff]
    %v748 = vld [vmem:[#allocation8 + $0x18] sm:$0xff]
    %v749 = vld [vmem:[#allocation8 + $0x20] sm:$0xff]
    %v750 = vld [vmem:[#allocation8 + $0x28] sm:$0xff]
    %v751 = vld [vmem:[#allocation8 + $0x30] sm:$0xff]
    %v752 = vld [vmem:[#allocation8 + $0x38] sm:$0xff]
    %v753 = vld [vmem:[#allocation8 + $0x40] sm:$0xff]
    %v754 = vld [vmem:[#allocation8 + $0x48] sm:$0xff]
    %v755 = vld [vmem:[#allocation8 + $0x50] sm:$0xff]
    %v756 = vld [vmem:[#allocation8 + $0x58] sm:$0xff]
    %v757 = vld [vmem:[#allocation8 + $0x60] sm:$0xff]
    %v758 = vld [vmem:[#allocation8 + $0x68] sm:$0xff]
    %v759 = vld [vmem:[#allocation8 + $0x70] sm:$0xff]
    %v760 = vld [vmem:[#allocation8 + $0x78] sm:$0xff]
    %v761 = vld [vmem:[#allocation8 + $0x80] sm:$0xff]
    %v762 = vld [vmem:[#allocation8 + $0x88] sm:$0xff]
    %v763 = vld [vmem:[#allocation8 + $0x90] sm:$0xff]
    %v764 = vld [vmem:[#allocation8 + $0x98] sm:$0xff]
    %v765 = vld [vmem:[#allocation8 + $0xa0] sm:$0xff]
    %v766 = vld [vmem:[#allocation8 + $0xa8] sm:$0xff]
    %v767 = vld [vmem:[#allocation8 + $0xb0] sm:$0xff]
    %v768 = vld [vmem:[#allocation8 + $0xb8] sm:$0xff]
    %v769 = vld [vmem:[#allocation8 + $0xc0] sm:$0xff]
    %v770 = vld [vmem:[#allocation8 + $0xc8] sm:$0xff]
    %v771 = vld [vmem:[#allocation8 + $0xd0] sm:$0xff]
    %v772 = vld [vmem:[#allocation8 + $0xd8] sm:$0xff]
    %v773 = vld [vmem:[#allocation8 + $0xe0] sm:$0xff]
    %v774 = vld [vmem:[#allocation8 + $0xe8] sm:$0xff]
    %v775 = vld [vmem:[#allocation8 + $0xf0] sm:$0xff]
    %v776 = vld [vmem:[#allocation8 + $0xf8] sm:$0xff]
    %v777 = vld [vmem:[#allocation8 + $0x100] sm:$0xff]
    %v778 = vld [vmem:[#allocation8 + $0x108] sm:$0xff]
    %v779 = vld [vmem:[#allocation8 + $0x110] sm:$0xff]
    %v780 = vld [vmem:[#allocation8 + $0x118] sm:$0xff]
    %v781 = vld [vmem:[#allocation8 + $0x120] sm:$0xff]
    %v782 = vld [vmem:[#allocation8 + $0x128] sm:$0xff]
    %v783 = vld [vmem:[#allocation8 + $0x130] sm:$0xff]
    %v784 = vld [vmem:[#allocation8 + $0x138] sm:$0xff]
    %v785 = vld [vmem:[#allocation8 + $0x140] sm:$0xff]
    %v786 = vld [vmem:[#allocation8 + $0x148] sm:$0xff]
    %v787 = vld [vmem:[#allocation8 + $0x150] sm:$0xff]
    %v788 = vld [vmem:[#allocation8 + $0x158] sm:$0xff]
    %v789 = vld [vmem:[#allocation8 + $0x160] sm:$0xff]
    %v790 = vld [vmem:[#allocation8 + $0x168] sm:$0xff]
    %v791 = vld [vmem:[#allocation8 + $0x170] sm:$0xff]
    %v792 = vld [vmem:[#allocation8 + $0x178] sm:$0xff]
    %v793 = vld [vmem:[#allocation8 + $0x180] sm:$0xff]
    %v794 = vld [vmem:[#allocation8 + $0x188] sm:$0xff]
    %v795 = vld [vmem:[#allocation8 + $0x190] sm:$0xff]
    %v796 = vld [vmem:[#allocation8 + $0x198] sm:$0xff]
    %v797 = vld [vmem:[#allocation8 + $0x1a0] sm:$0xff]
    %v798 = vld [vmem:[#allocation8 + $0x1a8] sm:$0xff]
    %v799 = vld [vmem:[#allocation8 + $0x1b0] sm:$0xff]
    %v800 = vld [vmem:[#allocation8 + $0x1b8] sm:$0xff]
    %v801 = vld [vmem:[#allocation8 + $0x1c0] sm:$0xff]
    %v802 = vld [vmem:[#allocation8 + $0x1c8] sm:$0xff]
    %v803 = vld [vmem:[#allocation8 + $0x1d0] sm:$0xff]
    %v804 = vld [vmem:[#allocation8 + $0x1d8] sm:$0xff]
    %v805 = vld [vmem:[#allocation8 + $0x1e0] sm:$0xff]
    %v806 = vld [vmem:[#allocation8 + $0x1e8] sm:$0xff]
    %v807 = vld [vmem:[#allocation8 + $0x1f0] sm:$0xff]
    %v808 = vld [vmem:[#allocation8 + $0x1f8] sm:$0xff]
    %v809 = vld [vmem:[#allocation8 + $0x200] sm:$0xff]
    %v810 = vld [vmem:[#allocation8 + $0x208] sm:$0xff]
    %v811 = vld [vmem:[#allocation8 + $0x210] sm:$0xff]
    %v812 = vld [vmem:[#allocation8 + $0x218] sm:$0xff]
    %v813 = vld [vmem:[#allocation8 + $0x220] sm:$0xff]
    %v814 = vld [vmem:[#allocation8 + $0x228] sm:$0xff]
    %v815 = vld [vmem:[#allocation8 + $0x230] sm:$0xff]
    %v816 = vld [vmem:[#allocation8 + $0x238] sm:$0xff]
    %v817 = vld [vmem:[#allocation8 + $0x240] sm:$0xff]
    %v818 = vld [vmem:[#allocation8 + $0x248] sm:$0xff]
    %v819 = vld [vmem:[#allocation8 + $0x250] sm:$0xff]
    %v820 = vld [vmem:[#allocation8 + $0x258] sm:$0xff]
    %v821 = vld [vmem:[#allocation8 + $0x260] sm:$0xff]
    %v822 = vld [vmem:[#allocation8 + $0x268] sm:$0xff]
    %v823 = vld [vmem:[#allocation8 + $0x270] sm:$0xff]
    %v824 = vld [vmem:[#allocation8 + $0x278] sm:$0xff]
    %v825 = vld [vmem:[#allocation8 + $0x280] sm:$0xff]
    %v826 = vld [vmem:[#allocation8 + $0x288] sm:$0xff]
    %v827 = vld [vmem:[#allocation8 + $0x290] sm:$0xff]
    %v828 = vld [vmem:[#allocation8 + $0x298] sm:$0xff]
    %v829 = vld [vmem:[#allocation8 + $0x2a0] sm:$0xff]
    %v830 = vld [vmem:[#allocation8 + $0x2a8] sm:$0xff]
    %v831 = vld [vmem:[#allocation8 + $0x2b0] sm:$0xff]
    %v832 = vld [vmem:[#allocation8 + $0x2b8] sm:$0xff]
    %v833 = vld [vmem:[#allocation8 + $0x2c0] sm:$0xff]
    %v834 = vld [vmem:[#allocation8 + $0x2c8] sm:$0xff]
    %v835 = vld [vmem:[#allocation8 + $0x2d0] sm:$0xff]
    %v836 = vld [vmem:[#allocation8 + $0x2d8] sm:$0xff]
    %v837 = vld [vmem:[#allocation8 + $0x2e0] sm:$0xff]
    %v838 = vld [vmem:[#allocation8 + $0x2e8] sm:$0xff]
    %v839 = vld [vmem:[#allocation8 + $0x2f0] sm:$0xff]
    %v840 = vld [vmem:[#allocation8 + $0x2f8] sm:$0xff]
    %v841 = vld [vmem:[#allocation8 + $0x300] sm:$0xff]
    %v842 = vld [vmem:[#allocation8 + $0x308] sm:$0xff]
    %v843 = vld [vmem:[#allocation8 + $0x310] sm:$0xff]
    %v844 = vld [vmem:[#allocation8 + $0x318] sm:$0xff]
    %v845 = vld [vmem:[#allocation8 + $0x320] sm:$0xff]
    %v846 = vld [vmem:[#allocation8 + $0x328] sm:$0xff]
    %v847 = vld [vmem:[#allocation8 + $0x330] sm:$0xff]
    %v848 = vld [vmem:[#allocation8 + $0x338] sm:$0xff]
    %v849 = vld [vmem:[#allocation8 + $0x340] sm:$0xff]
    %v850 = vld [vmem:[#allocation8 + $0x348] sm:$0xff]
    %v851 = vld [vmem:[#allocation8 + $0x350] sm:$0xff]
    %v852 = vld [vmem:[#allocation8 + $0x358] sm:$0xff]
    %v853 = vld [vmem:[#allocation8 + $0x360] sm:$0xff]
    %v854 = vld [vmem:[#allocation8 + $0x368] sm:$0xff]
    %v855 = vld [vmem:[#allocation8 + $0x370] sm:$0xff]
    %v856 = vld [vmem:[#allocation8 + $0x378] sm:$0xff]
    %v857 = vld [vmem:[#allocation8 + $0x380] sm:$0xff]
    %v858 = vld [vmem:[#allocation8 + $0x388] sm:$0xff]
    %v859 = vld [vmem:[#allocation8 + $0x390] sm:$0xff]
    %v860 = vld [vmem:[#allocation8 + $0x398] sm:$0xff]
    %v861 = vld [vmem:[#allocation8 + $0x3a0] sm:$0xff]
    %v862 = vld [vmem:[#allocation8 + $0x3a8] sm:$0xff]
    %v863 = vld [vmem:[#allocation8 + $0x3b0] sm:$0xff]
    %v864 = vld [vmem:[#allocation8 + $0x3b8] sm:$0xff]
    %v865 = vld [vmem:[#allocation8 + $0x3c0] sm:$0xff]
    %v866 = vld [vmem:[#allocation8 + $0x3c8] sm:$0xff]
    %v867 = vld [vmem:[#allocation8 + $0x3d0] sm:$0xff]
    %v868 = vld [vmem:[#allocation8 + $0x3d8] sm:$0xff]
    %v869 = vld [vmem:[#allocation8 + $0x3e0] sm:$0xff]
    %v870 = vld [vmem:[#allocation8 + $0x3e8] sm:$0xff]
    %v871 = vld [vmem:[#allocation8 + $0x3f0] sm:$0xff]
    %v872 = vld [vmem:[#allocation8 + $0x3f8] sm:$0xff]
    %v873 = vld [vmem:[%s6] sm:$0xf]
    %v875 = vlaneseq
    %v876 = vshrl.u32 %v875, 7
    %v877 = vsub.s32 0, %v876
    %v878 = vrot.slane %v873, %v877
    %v879 = vlaneseq
    %v880 = vshrl.u32 %v879, 7
    %v881 = vsub.s32 1, %v880
    %v882 = vrot.slane %v873, %v881
    %v883 = vlaneseq
    %v884 = vshrl.u32 %v883, 7
    %v885 = vsub.s32 2, %v884
    %v886 = vrot.slane %v873, %v885
    %v887 = vlaneseq
    %v888 = vshrl.u32 %v887, 7
    %v889 = vsub.s32 3, %v888
    %v890 = vrot.slane %v873, %v889
    %v1023 = vunpack.c.l.b16 %v745
    %v1024 = vunpack.c.h.b16 %v745
    %v1025 = vunpack.c.l.b16 %v746
    %v1026 = vunpack.c.h.b16 %v746
    %v1027 = vunpack.c.l.b16 %v747
    %v1028 = vunpack.c.h.b16 %v747
    %v1029 = vunpack.c.l.b16 %v748
    %v1030 = vunpack.c.h.b16 %v748
    %v1031 = vunpack.c.l.b16 %v749
    %v1032 = vunpack.c.h.b16 %v749
    %v1033 = vunpack.c.l.b16 %v750
    %v1034 = vunpack.c.h.b16 %v750
    %v1035 = vunpack.c.l.b16 %v751
    %v1036 = vunpack.c.h.b16 %v751
    %v1037 = vunpack.c.l.b16 %v752
    %v1038 = vunpack.c.h.b16 %v752
    %v1039 = vunpack.c.l.b16 %v753
    %v1040 = vunpack.c.h.b16 %v753
    %v1041 = vunpack.c.l.b16 %v754
    %v1042 = vunpack.c.h.b16 %v754
    %v1043 = vunpack.c.l.b16 %v755
    %v1044 = vunpack.c.h.b16 %v755
    %v1045 = vunpack.c.l.b16 %v756
    %v1046 = vunpack.c.h.b16 %v756
    %v1047 = vunpack.c.l.b16 %v757
    %v1048 = vunpack.c.h.b16 %v757
    %v1049 = vunpack.c.l.b16 %v758
    %v1050 = vunpack.c.h.b16 %v758
    %v1051 = vunpack.c.l.b16 %v759
    %v1052 = vunpack.c.h.b16 %v759
    %v1053 = vunpack.c.l.b16 %v760
    %v1054 = vunpack.c.h.b16 %v760
    %v1055 = vunpack.c.l.b16 %v761
    %v1056 = vunpack.c.h.b16 %v761
    %v1057 = vunpack.c.l.b16 %v762
    %v1058 = vunpack.c.h.b16 %v762
    %v1059 = vunpack.c.l.b16 %v763
    %v1060 = vunpack.c.h.b16 %v763
    %v1061 = vunpack.c.l.b16 %v764
    %v1062 = vunpack.c.h.b16 %v764
    %v1063 = vunpack.c.l.b16 %v765
    %v1064 = vunpack.c.h.b16 %v765
    %v1065 = vunpack.c.l.b16 %v766
    %v1066 = vunpack.c.h.b16 %v766
    %v1067 = vunpack.c.l.b16 %v767
    %v1068 = vunpack.c.h.b16 %v767
    %v1069 = vunpack.c.l.b16 %v768
    %v1070 = vunpack.c.h.b16 %v768
    %v1071 = vunpack.c.l.b16 %v769
    %v1072 = vunpack.c.h.b16 %v769
    %v1073 = vunpack.c.l.b16 %v770
    %v1074 = vunpack.c.h.b16 %v770
    %v1075 = vunpack.c.l.b16 %v771
    %v1076 = vunpack.c.h.b16 %v771
    %v1077 = vunpack.c.l.b16 %v772
    %v1078 = vunpack.c.h.b16 %v772
    %v1079 = vunpack.c.l.b16 %v773
    %v1080 = vunpack.c.h.b16 %v773
    %v1081 = vunpack.c.l.b16 %v774
    %v1082 = vunpack.c.h.b16 %v774
    %v1083 = vunpack.c.l.b16 %v775
    %v1084 = vunpack.c.h.b16 %v775
    %v1085 = vunpack.c.l.b16 %v776
    %v1086 = vunpack.c.h.b16 %v776
    %v1087 = vunpack.c.l.b16 %v777
    %v1088 = vunpack.c.h.b16 %v777
    %v1089 = vunpack.c.l.b16 %v778
    %v1090 = vunpack.c.h.b16 %v778
    %v1091 = vunpack.c.l.b16 %v779
    %v1092 = vunpack.c.h.b16 %v779
    %v1093 = vunpack.c.l.b16 %v780
    %v1094 = vunpack.c.h.b16 %v780
    %v1095 = vunpack.c.l.b16 %v781
    %v1096 = vunpack.c.h.b16 %v781
    %v1097 = vunpack.c.l.b16 %v782
    %v1098 = vunpack.c.h.b16 %v782
    %v1099 = vunpack.c.l.b16 %v783
    %v1100 = vunpack.c.h.b16 %v783
    %v1101 = vunpack.c.l.b16 %v784
    %v1102 = vunpack.c.h.b16 %v784
    %v1103 = vunpack.c.l.b16 %v785
    %v1104 = vunpack.c.h.b16 %v785
    %v1105 = vunpack.c.l.b16 %v786
    %v1106 = vunpack.c.h.b16 %v786
    %v1107 = vunpack.c.l.b16 %v787
    %v1108 = vunpack.c.h.b16 %v787
    %v1109 = vunpack.c.l.b16 %v788
    %v1110 = vunpack.c.h.b16 %v788
    %v1111 = vunpack.c.l.b16 %v789
    %v1112 = vunpack.c.h.b16 %v789
    %v1113 = vunpack.c.l.b16 %v790
    %v1114 = vunpack.c.h.b16 %v790
    %v1115 = vunpack.c.l.b16 %v791
    %v1116 = vunpack.c.h.b16 %v791
    %v1117 = vunpack.c.l.b16 %v792
    %v1118 = vunpack.c.h.b16 %v792
    %v1119 = vunpack.c.l.b16 %v793
    %v1120 = vunpack.c.h.b16 %v793
    %v1121 = vunpack.c.l.b16 %v794
    %v1122 = vunpack.c.h.b16 %v794
    %v1123 = vunpack.c.l.b16 %v795
    %v1124 = vunpack.c.h.b16 %v795
    %v1125 = vunpack.c.l.b16 %v796
    %v1126 = vunpack.c.h.b16 %v796
    %v1127 = vunpack.c.l.b16 %v797
    %v1128 = vunpack.c.h.b16 %v797
    %v1129 = vunpack.c.l.b16 %v798
    %v1130 = vunpack.c.h.b16 %v798
    %v1131 = vunpack.c.l.b16 %v799
    %v1132 = vunpack.c.h.b16 %v799
    %v1133 = vunpack.c.l.b16 %v800
    %v1134 = vunpack.c.h.b16 %v800
    %v1135 = vunpack.c.l.b16 %v801
    %v1136 = vunpack.c.h.b16 %v801
    %v1137 = vunpack.c.l.b16 %v802
    %v1138 = vunpack.c.h.b16 %v802
    %v1139 = vunpack.c.l.b16 %v803
    %v1140 = vunpack.c.h.b16 %v803
    %v1141 = vunpack.c.l.b16 %v804
    %v1142 = vunpack.c.h.b16 %v804
    %v1143 = vunpack.c.l.b16 %v805
    %v1144 = vunpack.c.h.b16 %v805
    %v1145 = vunpack.c.l.b16 %v806
    %v1146 = vunpack.c.h.b16 %v806
    %v1147 = vunpack.c.l.b16 %v807
    %v1148 = vunpack.c.h.b16 %v807
    %v1149 = vunpack.c.l.b16 %v808
    %v1150 = vunpack.c.h.b16 %v808
    %v1151 = vunpack.c.l.b16 %v809
    %v1152 = vunpack.c.h.b16 %v809
    %v1153 = vunpack.c.l.b16 %v810
    %v1154 = vunpack.c.h.b16 %v810
    %v1155 = vunpack.c.l.b16 %v811
    %v1156 = vunpack.c.h.b16 %v811
    %v1157 = vunpack.c.l.b16 %v812
    %v1158 = vunpack.c.h.b16 %v812
    %v1159 = vunpack.c.l.b16 %v813
    %v1160 = vunpack.c.h.b16 %v813
    %v1161 = vunpack.c.l.b16 %v814
    %v1162 = vunpack.c.h.b16 %v814
    %v1163 = vunpack.c.l.b16 %v815
    %v1164 = vunpack.c.h.b16 %v815
    %v1165 = vunpack.c.l.b16 %v816
    %v1166 = vunpack.c.h.b16 %v816
    %v1167 = vunpack.c.l.b16 %v817
    %v1168 = vunpack.c.h.b16 %v817
    %v1169 = vunpack.c.l.b16 %v818
    %v1170 = vunpack.c.h.b16 %v818
    %v1171 = vunpack.c.l.b16 %v819
    %v1172 = vunpack.c.h.b16 %v819
    %v1173 = vunpack.c.l.b16 %v820
    %v1174 = vunpack.c.h.b16 %v820
    %v1175 = vunpack.c.l.b16 %v821
    %v1176 = vunpack.c.h.b16 %v821
    %v1177 = vunpack.c.l.b16 %v822
    %v1178 = vunpack.c.h.b16 %v822
    %v1179 = vunpack.c.l.b16 %v823
    %v1180 = vunpack.c.h.b16 %v823
    %v1181 = vunpack.c.l.b16 %v824
    %v1182 = vunpack.c.h.b16 %v824
    %v1183 = vunpack.c.l.b16 %v825
    %v1184 = vunpack.c.h.b16 %v825
    %v1185 = vunpack.c.l.b16 %v826
    %v1186 = vunpack.c.h.b16 %v826
    %v1187 = vunpack.c.l.b16 %v827
    %v1188 = vunpack.c.h.b16 %v827
    %v1189 = vunpack.c.l.b16 %v828
    %v1190 = vunpack.c.h.b16 %v828
    %v1191 = vunpack.c.l.b16 %v829
    %v1192 = vunpack.c.h.b16 %v829
    %v1193 = vunpack.c.l.b16 %v830
    %v1194 = vunpack.c.h.b16 %v830
    %v1195 = vunpack.c.l.b16 %v831
    %v1196 = vunpack.c.h.b16 %v831
    %v1197 = vunpack.c.l.b16 %v832
    %v1198 = vunpack.c.h.b16 %v832
    %v1199 = vunpack.c.l.b16 %v833
    %v1200 = vunpack.c.h.b16 %v833
    %v1201 = vunpack.c.l.b16 %v834
    %v1202 = vunpack.c.h.b16 %v834
    %v1203 = vunpack.c.l.b16 %v835
    %v1204 = vunpack.c.h.b16 %v835
    %v1205 = vunpack.c.l.b16 %v836
    %v1206 = vunpack.c.h.b16 %v836
    %v1207 = vunpack.c.l.b16 %v837
    %v1208 = vunpack.c.h.b16 %v837
    %v1209 = vunpack.c.l.b16 %v838
    %v1210 = vunpack.c.h.b16 %v838
    %v1211 = vunpack.c.l.b16 %v839
    %v1212 = vunpack.c.h.b16 %v839
    %v1213 = vunpack.c.l.b16 %v840
    %v1214 = vunpack.c.h.b16 %v840
    %v1215 = vunpack.c.l.b16 %v841
    %v1216 = vunpack.c.h.b16 %v841
    %v1217 = vunpack.c.l.b16 %v842
    %v1218 = vunpack.c.h.b16 %v842
    %v1219 = vunpack.c.l.b16 %v843
    %v1220 = vunpack.c.h.b16 %v843
    %v1221 = vunpack.c.l.b16 %v844
    %v1222 = vunpack.c.h.b16 %v844
    %v1223 = vunpack.c.l.b16 %v845
    %v1224 = vunpack.c.h.b16 %v845
    %v1225 = vunpack.c.l.b16 %v846
    %v1226 = vunpack.c.h.b16 %v846
    %v1227 = vunpack.c.l.b16 %v847
    %v1228 = vunpack.c.h.b16 %v847
    %v1229 = vunpack.c.l.b16 %v848
    %v1230 = vunpack.c.h.b16 %v848
    %v1231 = vunpack.c.l.b16 %v849
    %v1232 = vunpack.c.h.b16 %v849
    %v1233 = vunpack.c.l.b16 %v850
    %v1234 = vunpack.c.h.b16 %v850
    %v1235 = vunpack.c.l.b16 %v851
    %v1236 = vunpack.c.h.b16 %v851
    %v1237 = vunpack.c.l.b16 %v852
    %v1238 = vunpack.c.h.b16 %v852
    %v1239 = vunpack.c.l.b16 %v853
    %v1240 = vunpack.c.h.b16 %v853
    %v1241 = vunpack.c.l.b16 %v854
    %v1242 = vunpack.c.h.b16 %v854
    %v1243 = vunpack.c.l.b16 %v855
    %v1244 = vunpack.c.h.b16 %v855
    %v1245 = vunpack.c.l.b16 %v856
    %v1246 = vunpack.c.h.b16 %v856
    %v1247 = vunpack.c.l.b16 %v857
    %v1248 = vunpack.c.h.b16 %v857
    %v1249 = vunpack.c.l.b16 %v858
    %v1250 = vunpack.c.h.b16 %v858
    %v1251 = vunpack.c.l.b16 %v859
    %v1252 = vunpack.c.h.b16 %v859
    %v1253 = vunpack.c.l.b16 %v860
    %v1254 = vunpack.c.h.b16 %v860
    %v1255 = vunpack.c.l.b16 %v861
    %v1256 = vunpack.c.h.b16 %v861
    %v1257 = vunpack.c.l.b16 %v862
    %v1258 = vunpack.c.h.b16 %v862
    %v1259 = vunpack.c.l.b16 %v863
    %v1260 = vunpack.c.h.b16 %v863
    %v1261 = vunpack.c.l.b16 %v864
    %v1262 = vunpack.c.h.b16 %v864
    %v1263 = vunpack.c.l.b16 %v865
    %v1264 = vunpack.c.h.b16 %v865
    %v1265 = vunpack.c.l.b16 %v866
    %v1266 = vunpack.c.h.b16 %v866
    %v1267 = vunpack.c.l.b16 %v867
    %v1268 = vunpack.c.h.b16 %v867
    %v1269 = vunpack.c.l.b16 %v868
    %v1270 = vunpack.c.h.b16 %v868
    %v1271 = vunpack.c.l.b16 %v869
    %v1272 = vunpack.c.h.b16 %v869
    %v1273 = vunpack.c.l.b16 %v870
    %v1274 = vunpack.c.h.b16 %v870
    %v1275 = vunpack.c.l.b16 %v871
    %v1276 = vunpack.c.h.b16 %v871
    %v1277 = vunpack.c.l.b16 %v872
    %v1278 = vunpack.c.h.b16 %v872
    %v1279 = vpack.c.b16 %v1027, %v1023
    %v1280 = vpack.c.b16 %v1028, %v1024
    %v1281 = vpack.c.b16 %v1029, %v1025
    %v1282 = vpack.c.b16 %v1030, %v1026
    %v1283 = vpack.c.b16 %v1035, %v1031
    %v1284 = vpack.c.b16 %v1036, %v1032
    %v1285 = vpack.c.b16 %v1037, %v1033
    %v1286 = vpack.c.b16 %v1038, %v1034
    %v1287 = vpack.c.b16 %v1043, %v1039
    %v1288 = vpack.c.b16 %v1044, %v1040
    %v1289 = vpack.c.b16 %v1045, %v1041
    %v1290 = vpack.c.b16 %v1046, %v1042
    %v1291 = vpack.c.b16 %v1051, %v1047
    %v1292 = vpack.c.b16 %v1052, %v1048
    %v1293 = vpack.c.b16 %v1053, %v1049
    %v1294 = vpack.c.b16 %v1054, %v1050
    %v1295 = vpack.c.b16 %v1059, %v1055
    %v1296 = vpack.c.b16 %v1060, %v1056
    %v1297 = vpack.c.b16 %v1061, %v1057
    %v1298 = vpack.c.b16 %v1062, %v1058
    %v1299 = vpack.c.b16 %v1067, %v1063
    %v1300 = vpack.c.b16 %v1068, %v1064
    %v1301 = vpack.c.b16 %v1069, %v1065
    %v1302 = vpack.c.b16 %v1070, %v1066
    %v1303 = vpack.c.b16 %v1075, %v1071
    %v1304 = vpack.c.b16 %v1076, %v1072
    %v1305 = vpack.c.b16 %v1077, %v1073
    %v1306 = vpack.c.b16 %v1078, %v1074
    %v1307 = vpack.c.b16 %v1083, %v1079
    %v1308 = vpack.c.b16 %v1084, %v1080
    %v1309 = vpack.c.b16 %v1085, %v1081
    %v1310 = vpack.c.b16 %v1086, %v1082
    %v1311 = vpack.c.b16 %v1091, %v1087
    %v1312 = vpack.c.b16 %v1092, %v1088
    %v1313 = vpack.c.b16 %v1093, %v1089
    %v1314 = vpack.c.b16 %v1094, %v1090
    %v1315 = vpack.c.b16 %v1099, %v1095
    %v1316 = vpack.c.b16 %v1100, %v1096
    %v1317 = vpack.c.b16 %v1101, %v1097
    %v1318 = vpack.c.b16 %v1102, %v1098
    %v1319 = vpack.c.b16 %v1107, %v1103
    %v1320 = vpack.c.b16 %v1108, %v1104
    %v1321 = vpack.c.b16 %v1109, %v1105
    %v1322 = vpack.c.b16 %v1110, %v1106
    %v1323 = vpack.c.b16 %v1115, %v1111
    %v1324 = vpack.c.b16 %v1116, %v1112
    %v1325 = vpack.c.b16 %v1117, %v1113
    %v1326 = vpack.c.b16 %v1118, %v1114
    %v1327 = vpack.c.b16 %v1123, %v1119
    %v1328 = vpack.c.b16 %v1124, %v1120
    %v1329 = vpack.c.b16 %v1125, %v1121
    %v1330 = vpack.c.b16 %v1126, %v1122
    %v1331 = vpack.c.b16 %v1131, %v1127
    %v1332 = vpack.c.b16 %v1132, %v1128
    %v1333 = vpack.c.b16 %v1133, %v1129
    %v1334 = vpack.c.b16 %v1134, %v1130
    %v1335 = vpack.c.b16 %v1139, %v1135
    %v1336 = vpack.c.b16 %v1140, %v1136
    %v1337 = vpack.c.b16 %v1141, %v1137
    %v1338 = vpack.c.b16 %v1142, %v1138
    %v1339 = vpack.c.b16 %v1147, %v1143
    %v1340 = vpack.c.b16 %v1148, %v1144
    %v1341 = vpack.c.b16 %v1149, %v1145
    %v1342 = vpack.c.b16 %v1150, %v1146
    %v1343 = vpack.c.b16 %v1155, %v1151
    %v1344 = vpack.c.b16 %v1156, %v1152
    %v1345 = vpack.c.b16 %v1157, %v1153
    %v1346 = vpack.c.b16 %v1158, %v1154
    %v1347 = vpack.c.b16 %v1163, %v1159
    %v1348 = vpack.c.b16 %v1164, %v1160
    %v1349 = vpack.c.b16 %v1165, %v1161
    %v1350 = vpack.c.b16 %v1166, %v1162
    %v1351 = vpack.c.b16 %v1171, %v1167
    %v1352 = vpack.c.b16 %v1172, %v1168
    %v1353 = vpack.c.b16 %v1173, %v1169
    %v1354 = vpack.c.b16 %v1174, %v1170
    %v1355 = vpack.c.b16 %v1179, %v1175
    %v1356 = vpack.c.b16 %v1180, %v1176
    %v1357 = vpack.c.b16 %v1181, %v1177
    %v1358 = vpack.c.b16 %v1182, %v1178
    %v1359 = vpack.c.b16 %v1187, %v1183
    %v1360 = vpack.c.b16 %v1188, %v1184
    %v1361 = vpack.c.b16 %v1189, %v1185
    %v1362 = vpack.c.b16 %v1190, %v1186
    %v1363 = vpack.c.b16 %v1195, %v1191
    %v1364 = vpack.c.b16 %v1196, %v1192
    %v1365 = vpack.c.b16 %v1197, %v1193
    %v1366 = vpack.c.b16 %v1198, %v1194
    %v1367 = vpack.c.b16 %v1203, %v1199
    %v1368 = vpack.c.b16 %v1204, %v1200
    %v1369 = vpack.c.b16 %v1205, %v1201
    %v1370 = vpack.c.b16 %v1206, %v1202
    %v1371 = vpack.c.b16 %v1211, %v1207
    %v1372 = vpack.c.b16 %v1212, %v1208
    %v1373 = vpack.c.b16 %v1213, %v1209
    %v1374 = vpack.c.b16 %v1214, %v1210
    %v1375 = vpack.c.b16 %v1219, %v1215
    %v1376 = vpack.c.b16 %v1220, %v1216
    %v1377 = vpack.c.b16 %v1221, %v1217
    %v1378 = vpack.c.b16 %v1222, %v1218
    %v1379 = vpack.c.b16 %v1227, %v1223
    %v1380 = vpack.c.b16 %v1228, %v1224
    %v1381 = vpack.c.b16 %v1229, %v1225
    %v1382 = vpack.c.b16 %v1230, %v1226
    %v1383 = vpack.c.b16 %v1235, %v1231
    %v1384 = vpack.c.b16 %v1236, %v1232
    %v1385 = vpack.c.b16 %v1237, %v1233
    %v1386 = vpack.c.b16 %v1238, %v1234
    %v1387 = vpack.c.b16 %v1243, %v1239
    %v1388 = vpack.c.b16 %v1244, %v1240
    %v1389 = vpack.c.b16 %v1245, %v1241
    %v1390 = vpack.c.b16 %v1246, %v1242
    %v1391 = vpack.c.b16 %v1251, %v1247
    %v1392 = vpack.c.b16 %v1252, %v1248
    %v1393 = vpack.c.b16 %v1253, %v1249
    %v1394 = vpack.c.b16 %v1254, %v1250
    %v1395 = vpack.c.b16 %v1259, %v1255
    %v1396 = vpack.c.b16 %v1260, %v1256
    %v1397 = vpack.c.b16 %v1261, %v1257
    %v1398 = vpack.c.b16 %v1262, %v1258
    %v1399 = vpack.c.b16 %v1267, %v1263
    %v1400 = vpack.c.b16 %v1268, %v1264
    %v1401 = vpack.c.b16 %v1269, %v1265
    %v1402 = vpack.c.b16 %v1270, %v1266
    %v1403 = vpack.c.b16 %v1275, %v1271
    %v1404 = vpack.c.b16 %v1276, %v1272
    %v1405 = vpack.c.b16 %v1277, %v1273
    %v1406 = vpack.c.b16 %v1278, %v1274
    %1535 = vmatprep.subr.bf16.mxu0 %v1280
    %1536 = vmatpush1.bf16.msra.mxu0 %v1279
    %1537 = vmatprep.subr.bf16.mxu0 %v1284
    %1538 = vmatpush1.bf16.msra.mxu0 %v1283
    %1539 = vmatprep.subr.bf16.mxu0 %v1288
    %1540 = vmatpush1.bf16.msra.mxu0 %v1287
    %1541 = vmatprep.subr.bf16.mxu0 %v1292
    %1542 = vmatpush1.bf16.msra.mxu0 %v1291
    %1543 = vmatprep.subr.bf16.mxu0 %v1296
    %1544 = vmatpush1.bf16.msra.mxu0 %v1295
    %1545 = vmatprep.subr.bf16.mxu0 %v1300
    %1546 = vmatpush1.bf16.msra.mxu0 %v1299
    %1547 = vmatprep.subr.bf16.mxu0 %v1304
    %1548 = vmatpush1.bf16.msra.mxu0 %v1303
    %1549 = vmatprep.subr.bf16.mxu0 %v1308
    %1550 = vmatpush1.bf16.msra.mxu0 %v1307
    %1551 = vmatprep.subr.bf16.mxu0 %v1312
    %1552 = vmatpush1.bf16.msra.mxu0 %v1311
    %1553 = vmatprep.subr.bf16.mxu0 %v1316
    %1554 = vmatpush1.bf16.msra.mxu0 %v1315
    %1555 = vmatprep.subr.bf16.mxu0 %v1320
    %1556 = vmatpush1.bf16.msra.mxu0 %v1319
    %1557 = vmatprep.subr.bf16.mxu0 %v1324
    %1558 = vmatpush1.bf16.msra.mxu0 %v1323
    %1559 = vmatprep.subr.bf16.mxu0 %v1328
    %1560 = vmatpush1.bf16.msra.mxu0 %v1327
    %1561 = vmatprep.subr.bf16.mxu0 %v1332
    %1562 = vmatpush1.bf16.msra.mxu0 %v1331
    %1563 = vmatprep.subr.bf16.mxu0 %v1336
    %1564 = vmatpush1.bf16.msra.mxu0 %v1335
    %1565 = vmatprep.subr.bf16.mxu0 %v1340
    %1566 = vmatpush1.bf16.msra.mxu0 %v1339
    %1567 = vmatprep.mubr.bf16.mxu0 %v742
    %1568 = vmatmul.mubr.bf16.gmra.mrb[0].mxu0 %v741
    %v1569 = vpop.f32.mrb[0].mxu0
    %v1570 = vadd.f32 %v878, %v1569
    %v1571 = vpop.f32.mrb[0].mxu0
    %v1572 = vadd.f32 %v882, %v1571
    %v1573 = vpop.f32.mrb[0].mxu0
    %v1574 = vpop.f32.mrb[0].mxu0
    %1575 = vdwg.mxu0
    %1576 = vmatprep.subr.bf16.mxu0 %v1344
    %1577 = vmatpush1.bf16.msra.mxu0 %v1343
    %1578 = vmatprep.subr.bf16.mxu0 %v1348
    %1579 = vmatpush1.bf16.msra.mxu0 %v1347
    %1580 = vmatprep.subr.bf16.mxu0 %v1352
    %1581 = vmatpush1.bf16.msra.mxu0 %v1351
    %1582 = vmatprep.subr.bf16.mxu0 %v1356
    %1583 = vmatpush1.bf16.msra.mxu0 %v1355
    %1584 = vmatprep.subr.bf16.mxu0 %v1360
    %1585 = vmatpush1.bf16.msra.mxu0 %v1359
    %1586 = vmatprep.subr.bf16.mxu0 %v1364
    %1587 = vmatpush1.bf16.msra.mxu0 %v1363
    %1588 = vmatprep.subr.bf16.mxu0 %v1368
    %1589 = vmatpush1.bf16.msra.mxu0 %v1367
    %1590 = vmatprep.subr.bf16.mxu0 %v1372
    %1591 = vmatpush1.bf16.msra.mxu0 %v1371
    %1592 = vmatprep.subr.bf16.mxu0 %v1376
    %1593 = vmatpush1.bf16.msra.mxu0 %v1375
    %1594 = vmatprep.subr.bf16.mxu0 %v1380
    %1595 = vmatpush1.bf16.msra.mxu0 %v1379
    %1596 = vmatprep.subr.bf16.mxu0 %v1384
    %1597 = vmatpush1.bf16.msra.mxu0 %v1383
    %1598 = vmatprep.subr.bf16.mxu0 %v1388
    %1599 = vmatpush1.bf16.msra.mxu0 %v1387
    %1600 = vmatprep.subr.bf16.mxu0 %v1392
    %1601 = vmatpush1.bf16.msra.mxu0 %v1391
    %1602 = vmatprep.subr.bf16.mxu0 %v1396
    %1603 = vmatpush1.bf16.msra.mxu0 %v1395
    %1604 = vmatprep.subr.bf16.mxu0 %v1400
    %1605 = vmatpush1.bf16.msra.mxu0 %v1399
    %1606 = vmatprep.subr.bf16.mxu0 %v1404
    %1607 = vmatpush1.bf16.msra.mxu0 %v1403
    %1608 = vmatprep.mubr.bf16.mxu0 %v744
    %1609 = vmatmul.mubr.bf16.gmra.mrb[0].mxu0 %v743
    %v1610 = vpop.f32.mrb[0].mxu0
    %v1611 = vadd.f32 %v1570, %v1610
    %v1612 = vpop.f32.mrb[0].mxu0
    %v1613 = vadd.f32 %v1572, %v1612
    %v1614 = vpop.f32.mrb[0].mxu0
    %v1615 = vpop.f32.mrb[0].mxu0
    %1616 = vdwg.mxu0
    %1617 = vmatprep.subr.bf16.mxu0 %v1282
    %1618 = vmatpush1.bf16.msra.mxu0 %v1281
    %1619 = vmatprep.subr.bf16.mxu0 %v1286
    %1620 = vmatpush1.bf16.msra.mxu0 %v1285
    %1621 = vmatprep.subr.bf16.mxu0 %v1290
    %1622 = vmatpush1.bf16.msra.mxu0 %v1289
    %1623 = vmatprep.subr.bf16.mxu0 %v1294
    %1624 = vmatpush1.bf16.msra.mxu0 %v1293
    %1625 = vmatprep.subr.bf16.mxu0 %v1298
    %1626 = vmatpush1.bf16.msra.mxu0 %v1297
    %1627 = vmatprep.subr.bf16.mxu0 %v1302
    %1628 = vmatpush1.bf16.msra.mxu0 %v1301
    %1629 = vmatprep.subr.bf16.mxu0 %v1306
    %1630 = vmatpush1.bf16.msra.mxu0 %v1305
    %1631 = vmatprep.subr.bf16.mxu0 %v1310
    %1632 = vmatpush1.bf16.msra.mxu0 %v1309
    %1633 = vmatprep.subr.bf16.mxu0 %v1314
    %1634 = vmatpush1.bf16.msra.mxu0 %v1313
    %1635 = vmatprep.subr.bf16.mxu0 %v1318
    %1636 = vmatpush1.bf16.msra.mxu0 %v1317
    %1637 = vmatprep.subr.bf16.mxu0 %v1322
    %1638 = vmatpush1.bf16.msra.mxu0 %v1321
    %1639 = vmatprep.subr.bf16.mxu0 %v1326
    %1640 = vmatpush1.bf16.msra.mxu0 %v1325
    %1641 = vmatprep.subr.bf16.mxu0 %v1330
    %1642 = vmatpush1.bf16.msra.mxu0 %v1329
    %1643 = vmatprep.subr.bf16.mxu0 %v1334
    %1644 = vmatpush1.bf16.msra.mxu0 %v1333
    %1645 = vmatprep.subr.bf16.mxu0 %v1338
    %1646 = vmatpush1.bf16.msra.mxu0 %v1337
    %1647 = vmatprep.subr.bf16.mxu0 %v1342
    %1648 = vmatpush1.bf16.msra.mxu0 %v1341
    %1649 = vmatprep.mubr.bf16.mxu0 %v742
    %1650 = vmatmul.mubr.bf16.gmra.mrb[0].mxu0 %v741
    %v1651 = vpop.f32.mrb[0].mxu0
    %v1652 = vadd.f32 %v886, %v1651
    %v1653 = vpop.f32.mrb[0].mxu0
    %v1654 = vadd.f32 %v890, %v1653
    %v1655 = vpop.f32.mrb[0].mxu0
    %v1656 = vpop.f32.mrb[0].mxu0
    %1657 = vdwg.mxu0
    %1658 = vmatprep.subr.bf16.mxu0 %v1346
    %1659 = vmatpush1.bf16.msra.mxu0 %v1345
    %1660 = vmatprep.subr.bf16.mxu0 %v1350
    %1661 = vmatpush1.bf16.msra.mxu0 %v1349
    %1662 = vmatprep.subr.bf16.mxu0 %v1354
    %1663 = vmatpush1.bf16.msra.mxu0 %v1353
    %1664 = vmatprep.subr.bf16.mxu0 %v1358
    %1665 = vmatpush1.bf16.msra.mxu0 %v1357
    %1666 = vmatprep.subr.bf16.mxu0 %v1362
    %1667 = vmatpush1.bf16.msra.mxu0 %v1361
    %1668 = vmatprep.subr.bf16.mxu0 %v1366
    %1669 = vmatpush1.bf16.msra.mxu0 %v1365
    %1670 = vmatprep.subr.bf16.mxu0 %v1370
    %1671 = vmatpush1.bf16.msra.mxu0 %v1369
    %1672 = vmatprep.subr.bf16.mxu0 %v1374
    %1673 = vmatpush1.bf16.msra.mxu0 %v1373
    %1674 = vmatprep.subr.bf16.mxu0 %v1378
    %1675 = vmatpush1.bf16.msra.mxu0 %v1377
    %1676 = vmatprep.subr.bf16.mxu0 %v1382
    %1677 = vmatpush1.bf16.msra.mxu0 %v1381
    %1678 = vmatprep.subr.bf16.mxu0 %v1386
    %1679 = vmatpush1.bf16.msra.mxu0 %v1385
    %1680 = vmatprep.subr.bf16.mxu0 %v1390
    %1681 = vmatpush1.bf16.msra.mxu0 %v1389
    %1682 = vmatprep.subr.bf16.mxu0 %v1394
    %1683 = vmatpush1.bf16.msra.mxu0 %v1393
    %1684 = vmatprep.subr.bf16.mxu0 %v1398
    %1685 = vmatpush1.bf16.msra.mxu0 %v1397
    %1686 = vmatprep.subr.bf16.mxu0 %v1402
    %1687 = vmatpush1.bf16.msra.mxu0 %v1401
    %1688 = vmatprep.subr.bf16.mxu0 %v1406
    %1689 = vmatpush1.bf16.msra.mxu0 %v1405
    %1690 = vmatprep.mubr.bf16.mxu0 %v744
    %1691 = vmatmul.mubr.bf16.gmra.mrb[0].mxu0 %v743
    %v1692 = vpop.f32.mrb[0].mxu0
    %v1693 = vadd.f32 %v1652, %v1692
    %v1694 = vpop.f32.mrb[0].mxu0
    %v1695 = vadd.f32 %v1654, %v1694
    %v1696 = vpop.f32.mrb[0].mxu0
    %v1697 = vpop.f32.mrb[0].mxu0
    %1698 = vdwg.mxu0
    %v1699 = vmax.f32 %v1611, 0.0
    %v1700 = vmax.f32 %v1613, 0.0
    %v1701 = vmax.f32 %v1693, 0.0
    %v1702 = vmax.f32 %v1695, 0.0
    %v1703 = vpack.c.bf16 %v1699, %v1699
    %v1704 = vpack.c.bf16 %v1700, %v1700
    %v1705 = vpack.c.bf16 %v1701, %v1701
    %v1706 = vpack.c.bf16 %v1702, %v1702
    %v1707 = vld [vmem:[#allocation10] sm:$0xff]
    %v1708 = vld [vmem:[#allocation10 + $0x8] sm:$0xff]
    %v1709 = vld [vmem:[#allocation10 + $0x10] sm:$0xff]
    %v1710 = vld [vmem:[#allocation10 + $0x18] sm:$0xff]
    %v1711 = vld [vmem:[#allocation10 + $0x20] sm:$0xff]
    %v1712 = vld [vmem:[#allocation10 + $0x28] sm:$0xff]
    %v1713 = vld [vmem:[#allocation10 + $0x30] sm:$0xff]
    %v1714 = vld [vmem:[#allocation10 + $0x38] sm:$0xff]
    %v1715 = vld [vmem:[#allocation10 + $0x40] sm:$0xff]
    %v1716 = vld [vmem:[#allocation10 + $0x48] sm:$0xff]
    %v1717 = vld [vmem:[#allocation10 + $0x50] sm:$0xff]
    %v1718 = vld [vmem:[#allocation10 + $0x58] sm:$0xff]
    %v1719 = vld [vmem:[#allocation10 + $0x60] sm:$0xff]
    %v1720 = vld [vmem:[#allocation10 + $0x68] sm:$0xff]
    %v1721 = vld [vmem:[#allocation10 + $0x70] sm:$0xff]
    %v1722 = vld [vmem:[#allocation10 + $0x78] sm:$0xff]
    %v1723 = vld [vmem:[#allocation10 + $0x80] sm:$0xff]
    %v1724 = vld [vmem:[#allocation10 + $0x88] sm:$0xff]
    %v1725 = vld [vmem:[#allocation10 + $0x90] sm:$0xff]
    %v1726 = vld [vmem:[#allocation10 + $0x98] sm:$0xff]
    %v1727 = vld [vmem:[#allocation10 + $0xa0] sm:$0xff]
    %v1728 = vld [vmem:[#allocation10 + $0xa8] sm:$0xff]
    %v1729 = vld [vmem:[#allocation10 + $0xb0] sm:$0xff]
    %v1730 = vld [vmem:[#allocation10 + $0xb8] sm:$0xff]
    %v1731 = vld [vmem:[#allocation10 + $0xc0] sm:$0xff]
    %v1732 = vld [vmem:[#allocation10 + $0xc8] sm:$0xff]
    %v1733 = vld [vmem:[#allocation10 + $0xd0] sm:$0xff]
    %v1734 = vld [vmem:[#allocation10 + $0xd8] sm:$0xff]
    %v1735 = vld [vmem:[#allocation10 + $0xe0] sm:$0xff]
    %v1736 = vld [vmem:[#allocation10 + $0xe8] sm:$0xff]
    %v1737 = vld [vmem:[#allocation10 + $0xf0] sm:$0xff]
    %v1738 = vld [vmem:[#allocation10 + $0xf8] sm:$0xff]
    %v1739 = vld [vmem:[#allocation10 + $0x100] sm:$0xff]
    %v1740 = vld [vmem:[#allocation10 + $0x108] sm:$0xff]
    %v1741 = vld [vmem:[#allocation10 + $0x110] sm:$0xff]
    %v1742 = vld [vmem:[#allocation10 + $0x118] sm:$0xff]
    %v1743 = vld [vmem:[#allocation10 + $0x120] sm:$0xff]
    %v1744 = vld [vmem:[#allocation10 + $0x128] sm:$0xff]
    %v1745 = vld [vmem:[#allocation10 + $0x130] sm:$0xff]
    %v1746 = vld [vmem:[#allocation10 + $0x138] sm:$0xff]
    %v1747 = vld [vmem:[#allocation10 + $0x140] sm:$0xff]
    %v1748 = vld [vmem:[#allocation10 + $0x148] sm:$0xff]
    %v1749 = vld [vmem:[#allocation10 + $0x150] sm:$0xff]
    %v1750 = vld [vmem:[#allocation10 + $0x158] sm:$0xff]
    %v1751 = vld [vmem:[#allocation10 + $0x160] sm:$0xff]
    %v1752 = vld [vmem:[#allocation10 + $0x168] sm:$0xff]
    %v1753 = vld [vmem:[#allocation10 + $0x170] sm:$0xff]
    %v1754 = vld [vmem:[#allocation10 + $0x178] sm:$0xff]
    %v1755 = vld [vmem:[#allocation10 + $0x180] sm:$0xff]
    %v1756 = vld [vmem:[#allocation10 + $0x188] sm:$0xff]
    %v1757 = vld [vmem:[#allocation10 + $0x190] sm:$0xff]
    %v1758 = vld [vmem:[#allocation10 + $0x198] sm:$0xff]
    %v1759 = vld [vmem:[#allocation10 + $0x1a0] sm:$0xff]
    %v1760 = vld [vmem:[#allocation10 + $0x1a8] sm:$0xff]
    %v1761 = vld [vmem:[#allocation10 + $0x1b0] sm:$0xff]
    %v1762 = vld [vmem:[#allocation10 + $0x1b8] sm:$0xff]
    %v1763 = vld [vmem:[#allocation10 + $0x1c0] sm:$0xff]
    %v1764 = vld [vmem:[#allocation10 + $0x1c8] sm:$0xff]
    %v1765 = vld [vmem:[#allocation10 + $0x1d0] sm:$0xff]
    %v1766 = vld [vmem:[#allocation10 + $0x1d8] sm:$0xff]
    %v1767 = vld [vmem:[#allocation10 + $0x1e0] sm:$0xff]
    %v1768 = vld [vmem:[#allocation10 + $0x1e8] sm:$0xff]
    %v1769 = vld [vmem:[#allocation10 + $0x1f0] sm:$0xff]
    %v1770 = vld [vmem:[#allocation10 + $0x1f8] sm:$0xff]
    %v1771 = vld [vmem:[#allocation10 + $0x200] sm:$0xff]
    %v1772 = vld [vmem:[#allocation10 + $0x208] sm:$0xff]
    %v1773 = vld [vmem:[#allocation10 + $0x210] sm:$0xff]
    %v1774 = vld [vmem:[#allocation10 + $0x218] sm:$0xff]
    %v1775 = vld [vmem:[#allocation10 + $0x220] sm:$0xff]
    %v1776 = vld [vmem:[#allocation10 + $0x228] sm:$0xff]
    %v1777 = vld [vmem:[#allocation10 + $0x230] sm:$0xff]
    %v1778 = vld [vmem:[#allocation10 + $0x238] sm:$0xff]
    %v1779 = vld [vmem:[#allocation10 + $0x240] sm:$0xff]
    %v1780 = vld [vmem:[#allocation10 + $0x248] sm:$0xff]
    %v1781 = vld [vmem:[#allocation10 + $0x250] sm:$0xff]
    %v1782 = vld [vmem:[#allocation10 + $0x258] sm:$0xff]
    %v1783 = vld [vmem:[#allocation10 + $0x260] sm:$0xff]
    %v1784 = vld [vmem:[#allocation10 + $0x268] sm:$0xff]
    %v1785 = vld [vmem:[#allocation10 + $0x270] sm:$0xff]
    %v1786 = vld [vmem:[#allocation10 + $0x278] sm:$0xff]
    %v1787 = vld [vmem:[#allocation10 + $0x280] sm:$0xff]
    %v1788 = vld [vmem:[#allocation10 + $0x288] sm:$0xff]
    %v1789 = vld [vmem:[#allocation10 + $0x290] sm:$0xff]
    %v1790 = vld [vmem:[#allocation10 + $0x298] sm:$0xff]
    %v1791 = vld [vmem:[#allocation10 + $0x2a0] sm:$0xff]
    %v1792 = vld [vmem:[#allocation10 + $0x2a8] sm:$0xff]
    %v1793 = vld [vmem:[#allocation10 + $0x2b0] sm:$0xff]
    %v1794 = vld [vmem:[#allocation10 + $0x2b8] sm:$0xff]
    %v1795 = vld [vmem:[#allocation10 + $0x2c0] sm:$0xff]
    %v1796 = vld [vmem:[#allocation10 + $0x2c8] sm:$0xff]
    %v1797 = vld [vmem:[#allocation10 + $0x2d0] sm:$0xff]
    %v1798 = vld [vmem:[#allocation10 + $0x2d8] sm:$0xff]
    %v1799 = vld [vmem:[#allocation10 + $0x2e0] sm:$0xff]
    %v1800 = vld [vmem:[#allocation10 + $0x2e8] sm:$0xff]
    %v1801 = vld [vmem:[#allocation10 + $0x2f0] sm:$0xff]
    %v1802 = vld [vmem:[#allocation10 + $0x2f8] sm:$0xff]
    %v1803 = vld [vmem:[#allocation10 + $0x300] sm:$0xff]
    %v1804 = vld [vmem:[#allocation10 + $0x308] sm:$0xff]
    %v1805 = vld [vmem:[#allocation10 + $0x310] sm:$0xff]
    %v1806 = vld [vmem:[#allocation10 + $0x318] sm:$0xff]
    %v1807 = vld [vmem:[#allocation10 + $0x320] sm:$0xff]
    %v1808 = vld [vmem:[#allocation10 + $0x328] sm:$0xff]
    %v1809 = vld [vmem:[#allocation10 + $0x330] sm:$0xff]
    %v1810 = vld [vmem:[#allocation10 + $0x338] sm:$0xff]
    %v1811 = vld [vmem:[#allocation10 + $0x340] sm:$0xff]
    %v1812 = vld [vmem:[#allocation10 + $0x348] sm:$0xff]
    %v1813 = vld [vmem:[#allocation10 + $0x350] sm:$0xff]
    %v1814 = vld [vmem:[#allocation10 + $0x358] sm:$0xff]
    %v1815 = vld [vmem:[#allocation10 + $0x360] sm:$0xff]
    %v1816 = vld [vmem:[#allocation10 + $0x368] sm:$0xff]
    %v1817 = vld [vmem:[#allocation10 + $0x370] sm:$0xff]
    %v1818 = vld [vmem:[#allocation10 + $0x378] sm:$0xff]
    %v1819 = vld [vmem:[#allocation10 + $0x380] sm:$0xff]
    %v1820 = vld [vmem:[#allocation10 + $0x388] sm:$0xff]
    %v1821 = vld [vmem:[#allocation10 + $0x390] sm:$0xff]
    %v1822 = vld [vmem:[#allocation10 + $0x398] sm:$0xff]
    %v1823 = vld [vmem:[#allocation10 + $0x3a0] sm:$0xff]
    %v1824 = vld [vmem:[#allocation10 + $0x3a8] sm:$0xff]
    %v1825 = vld [vmem:[#allocation10 + $0x3b0] sm:$0xff]
    %v1826 = vld [vmem:[#allocation10 + $0x3b8] sm:$0xff]
    %v1827 = vld [vmem:[#allocation10 + $0x3c0] sm:$0xff]
    %v1828 = vld [vmem:[#allocation10 + $0x3c8] sm:$0xff]
    %v1829 = vld [vmem:[#allocation10 + $0x3d0] sm:$0xff]
    %v1830 = vld [vmem:[#allocation10 + $0x3d8] sm:$0xff]
    %v1831 = vld [vmem:[#allocation10 + $0x3e0] sm:$0xff]
    %v1832 = vld [vmem:[#allocation10 + $0x3e8] sm:$0xff]
    %v1833 = vld [vmem:[#allocation10 + $0x3f0] sm:$0xff]
    %v1834 = vld [vmem:[#allocation10 + $0x3f8] sm:$0xff]
    %v1835 = vld [vmem:[%s8] sm:$0xf]
    %v1837 = vlaneseq
    %v1838 = vshrl.u32 %v1837, 7
    %v1839 = vsub.s32 0, %v1838
    %v1840 = vrot.slane %v1835, %v1839
    %v1841 = vlaneseq
    %v1842 = vshrl.u32 %v1841, 7
    %v1843 = vsub.s32 1, %v1842
    %v1844 = vrot.slane %v1835, %v1843
    %v1845 = vlaneseq
    %v1846 = vshrl.u32 %v1845, 7
    %v1847 = vsub.s32 2, %v1846
    %v1848 = vrot.slane %v1835, %v1847
    %v1849 = vlaneseq
    %v1850 = vshrl.u32 %v1849, 7
    %v1851 = vsub.s32 3, %v1850
    %v1852 = vrot.slane %v1835, %v1851
    %v1985 = vunpack.c.l.b16 %v1707
    %v1986 = vunpack.c.h.b16 %v1707
    %v1987 = vunpack.c.l.b16 %v1708
    %v1988 = vunpack.c.h.b16 %v1708
    %v1989 = vunpack.c.l.b16 %v1709
    %v1990 = vunpack.c.h.b16 %v1709
    %v1991 = vunpack.c.l.b16 %v1710
    %v1992 = vunpack.c.h.b16 %v1710
    %v1993 = vunpack.c.l.b16 %v1711
    %v1994 = vunpack.c.h.b16 %v1711
    %v1995 = vunpack.c.l.b16 %v1712
    %v1996 = vunpack.c.h.b16 %v1712
    %v1997 = vunpack.c.l.b16 %v1713
    %v1998 = vunpack.c.h.b16 %v1713
    %v1999 = vunpack.c.l.b16 %v1714
    %v2000 = vunpack.c.h.b16 %v1714
    %v2001 = vunpack.c.l.b16 %v1715
    %v2002 = vunpack.c.h.b16 %v1715
    %v2003 = vunpack.c.l.b16 %v1716
    %v2004 = vunpack.c.h.b16 %v1716
    %v2005 = vunpack.c.l.b16 %v1717
    %v2006 = vunpack.c.h.b16 %v1717
    %v2007 = vunpack.c.l.b16 %v1718
    %v2008 = vunpack.c.h.b16 %v1718
    %v2009 = vunpack.c.l.b16 %v1719
    %v2010 = vunpack.c.h.b16 %v1719
    %v2011 = vunpack.c.l.b16 %v1720
    %v2012 = vunpack.c.h.b16 %v1720
    %v2013 = vunpack.c.l.b16 %v1721
    %v2014 = vunpack.c.h.b16 %v1721
    %v2015 = vunpack.c.l.b16 %v1722
    %v2016 = vunpack.c.h.b16 %v1722
    %v2017 = vunpack.c.l.b16 %v1723
    %v2018 = vunpack.c.h.b16 %v1723
    %v2019 = vunpack.c.l.b16 %v1724
    %v2020 = vunpack.c.h.b16 %v1724
    %v2021 = vunpack.c.l.b16 %v1725
    %v2022 = vunpack.c.h.b16 %v1725
    %v2023 = vunpack.c.l.b16 %v1726
    %v2024 = vunpack.c.h.b16 %v1726
    %v2025 = vunpack.c.l.b16 %v1727
    %v2026 = vunpack.c.h.b16 %v1727
    %v2027 = vunpack.c.l.b16 %v1728
    %v2028 = vunpack.c.h.b16 %v1728
    %v2029 = vunpack.c.l.b16 %v1729
    %v2030 = vunpack.c.h.b16 %v1729
    %v2031 = vunpack.c.l.b16 %v1730
    %v2032 = vunpack.c.h.b16 %v1730
    %v2033 = vunpack.c.l.b16 %v1731
    %v2034 = vunpack.c.h.b16 %v1731
    %v2035 = vunpack.c.l.b16 %v1732
    %v2036 = vunpack.c.h.b16 %v1732
    %v2037 = vunpack.c.l.b16 %v1733
    %v2038 = vunpack.c.h.b16 %v1733
    %v2039 = vunpack.c.l.b16 %v1734
    %v2040 = vunpack.c.h.b16 %v1734
    %v2041 = vunpack.c.l.b16 %v1735
    %v2042 = vunpack.c.h.b16 %v1735
    %v2043 = vunpack.c.l.b16 %v1736
    %v2044 = vunpack.c.h.b16 %v1736
    %v2045 = vunpack.c.l.b16 %v1737
    %v2046 = vunpack.c.h.b16 %v1737
    %v2047 = vunpack.c.l.b16 %v1738
    %v2048 = vunpack.c.h.b16 %v1738
    %v2049 = vunpack.c.l.b16 %v1739
    %v2050 = vunpack.c.h.b16 %v1739
    %v2051 = vunpack.c.l.b16 %v1740
    %v2052 = vunpack.c.h.b16 %v1740
    %v2053 = vunpack.c.l.b16 %v1741
    %v2054 = vunpack.c.h.b16 %v1741
    %v2055 = vunpack.c.l.b16 %v1742
    %v2056 = vunpack.c.h.b16 %v1742
    %v2057 = vunpack.c.l.b16 %v1743
    %v2058 = vunpack.c.h.b16 %v1743
    %v2059 = vunpack.c.l.b16 %v1744
    %v2060 = vunpack.c.h.b16 %v1744
    %v2061 = vunpack.c.l.b16 %v1745
    %v2062 = vunpack.c.h.b16 %v1745
    %v2063 = vunpack.c.l.b16 %v1746
    %v2064 = vunpack.c.h.b16 %v1746
    %v2065 = vunpack.c.l.b16 %v1747
    %v2066 = vunpack.c.h.b16 %v1747
    %v2067 = vunpack.c.l.b16 %v1748
    %v2068 = vunpack.c.h.b16 %v1748
    %v2069 = vunpack.c.l.b16 %v1749
    %v2070 = vunpack.c.h.b16 %v1749
    %v2071 = vunpack.c.l.b16 %v1750
    %v2072 = vunpack.c.h.b16 %v1750
    %v2073 = vunpack.c.l.b16 %v1751
    %v2074 = vunpack.c.h.b16 %v1751
    %v2075 = vunpack.c.l.b16 %v1752
    %v2076 = vunpack.c.h.b16 %v1752
    %v2077 = vunpack.c.l.b16 %v1753
    %v2078 = vunpack.c.h.b16 %v1753
    %v2079 = vunpack.c.l.b16 %v1754
    %v2080 = vunpack.c.h.b16 %v1754
    %v2081 = vunpack.c.l.b16 %v1755
    %v2082 = vunpack.c.h.b16 %v1755
    %v2083 = vunpack.c.l.b16 %v1756
    %v2084 = vunpack.c.h.b16 %v1756
    %v2085 = vunpack.c.l.b16 %v1757
    %v2086 = vunpack.c.h.b16 %v1757
    %v2087 = vunpack.c.l.b16 %v1758
    %v2088 = vunpack.c.h.b16 %v1758
    %v2089 = vunpack.c.l.b16 %v1759
    %v2090 = vunpack.c.h.b16 %v1759
    %v2091 = vunpack.c.l.b16 %v1760
    %v2092 = vunpack.c.h.b16 %v1760
    %v2093 = vunpack.c.l.b16 %v1761
    %v2094 = vunpack.c.h.b16 %v1761
    %v2095 = vunpack.c.l.b16 %v1762
    %v2096 = vunpack.c.h.b16 %v1762
    %v2097 = vunpack.c.l.b16 %v1763
    %v2098 = vunpack.c.h.b16 %v1763
    %v2099 = vunpack.c.l.b16 %v1764
    %v2100 = vunpack.c.h.b16 %v1764
    %v2101 = vunpack.c.l.b16 %v1765
    %v2102 = vunpack.c.h.b16 %v1765
    %v2103 = vunpack.c.l.b16 %v1766
    %v2104 = vunpack.c.h.b16 %v1766
    %v2105 = vunpack.c.l.b16 %v1767
    %v2106 = vunpack.c.h.b16 %v1767
    %v2107 = vunpack.c.l.b16 %v1768
    %v2108 = vunpack.c.h.b16 %v1768
    %v2109 = vunpack.c.l.b16 %v1769
    %v2110 = vunpack.c.h.b16 %v1769
    %v2111 = vunpack.c.l.b16 %v1770
    %v2112 = vunpack.c.h.b16 %v1770
    %v2113 = vunpack.c.l.b16 %v1771
    %v2114 = vunpack.c.h.b16 %v1771
    %v2115 = vunpack.c.l.b16 %v1772
    %v2116 = vunpack.c.h.b16 %v1772
    %v2117 = vunpack.c.l.b16 %v1773
    %v2118 = vunpack.c.h.b16 %v1773
    %v2119 = vunpack.c.l.b16 %v1774
    %v2120 = vunpack.c.h.b16 %v1774
    %v2121 = vunpack.c.l.b16 %v1775
    %v2122 = vunpack.c.h.b16 %v1775
    %v2123 = vunpack.c.l.b16 %v1776
    %v2124 = vunpack.c.h.b16 %v1776
    %v2125 = vunpack.c.l.b16 %v1777
    %v2126 = vunpack.c.h.b16 %v1777
    %v2127 = vunpack.c.l.b16 %v1778
    %v2128 = vunpack.c.h.b16 %v1778
    %v2129 = vunpack.c.l.b16 %v1779
    %v2130 = vunpack.c.h.b16 %v1779
    %v2131 = vunpack.c.l.b16 %v1780
    %v2132 = vunpack.c.h.b16 %v1780
    %v2133 = vunpack.c.l.b16 %v1781
    %v2134 = vunpack.c.h.b16 %v1781
    %v2135 = vunpack.c.l.b16 %v1782
    %v2136 = vunpack.c.h.b16 %v1782
    %v2137 = vunpack.c.l.b16 %v1783
    %v2138 = vunpack.c.h.b16 %v1783
    %v2139 = vunpack.c.l.b16 %v1784
    %v2140 = vunpack.c.h.b16 %v1784
    %v2141 = vunpack.c.l.b16 %v1785
    %v2142 = vunpack.c.h.b16 %v1785
    %v2143 = vunpack.c.l.b16 %v1786
    %v2144 = vunpack.c.h.b16 %v1786
    %v2145 = vunpack.c.l.b16 %v1787
    %v2146 = vunpack.c.h.b16 %v1787
    %v2147 = vunpack.c.l.b16 %v1788
    %v2148 = vunpack.c.h.b16 %v1788
    %v2149 = vunpack.c.l.b16 %v1789
    %v2150 = vunpack.c.h.b16 %v1789
    %v2151 = vunpack.c.l.b16 %v1790
    %v2152 = vunpack.c.h.b16 %v1790
    %v2153 = vunpack.c.l.b16 %v1791
    %v2154 = vunpack.c.h.b16 %v1791
    %v2155 = vunpack.c.l.b16 %v1792
    %v2156 = vunpack.c.h.b16 %v1792
    %v2157 = vunpack.c.l.b16 %v1793
    %v2158 = vunpack.c.h.b16 %v1793
    %v2159 = vunpack.c.l.b16 %v1794
    %v2160 = vunpack.c.h.b16 %v1794
    %v2161 = vunpack.c.l.b16 %v1795
    %v2162 = vunpack.c.h.b16 %v1795
    %v2163 = vunpack.c.l.b16 %v1796
    %v2164 = vunpack.c.h.b16 %v1796
    %v2165 = vunpack.c.l.b16 %v1797
    %v2166 = vunpack.c.h.b16 %v1797
    %v2167 = vunpack.c.l.b16 %v1798
    %v2168 = vunpack.c.h.b16 %v1798
    %v2169 = vunpack.c.l.b16 %v1799
    %v2170 = vunpack.c.h.b16 %v1799
    %v2171 = vunpack.c.l.b16 %v1800
    %v2172 = vunpack.c.h.b16 %v1800
    %v2173 = vunpack.c.l.b16 %v1801
    %v2174 = vunpack.c.h.b16 %v1801
    %v2175 = vunpack.c.l.b16 %v1802
    %v2176 = vunpack.c.h.b16 %v1802
    %v2177 = vunpack.c.l.b16 %v1803
    %v2178 = vunpack.c.h.b16 %v1803
    %v2179 = vunpack.c.l.b16 %v1804
    %v2180 = vunpack.c.h.b16 %v1804
    %v2181 = vunpack.c.l.b16 %v1805
    %v2182 = vunpack.c.h.b16 %v1805
    %v2183 = vunpack.c.l.b16 %v1806
    %v2184 = vunpack.c.h.b16 %v1806
    %v2185 = vunpack.c.l.b16 %v1807
    %v2186 = vunpack.c.h.b16 %v1807
    %v2187 = vunpack.c.l.b16 %v1808
    %v2188 = vunpack.c.h.b16 %v1808
    %v2189 = vunpack.c.l.b16 %v1809
    %v2190 = vunpack.c.h.b16 %v1809
    %v2191 = vunpack.c.l.b16 %v1810
    %v2192 = vunpack.c.h.b16 %v1810
    %v2193 = vunpack.c.l.b16 %v1811
    %v2194 = vunpack.c.h.b16 %v1811
    %v2195 = vunpack.c.l.b16 %v1812
    %v2196 = vunpack.c.h.b16 %v1812
    %v2197 = vunpack.c.l.b16 %v1813
    %v2198 = vunpack.c.h.b16 %v1813
    %v2199 = vunpack.c.l.b16 %v1814
    %v2200 = vunpack.c.h.b16 %v1814
    %v2201 = vunpack.c.l.b16 %v1815
    %v2202 = vunpack.c.h.b16 %v1815
    %v2203 = vunpack.c.l.b16 %v1816
    %v2204 = vunpack.c.h.b16 %v1816
    %v2205 = vunpack.c.l.b16 %v1817
    %v2206 = vunpack.c.h.b16 %v1817
    %v2207 = vunpack.c.l.b16 %v1818
    %v2208 = vunpack.c.h.b16 %v1818
    %v2209 = vunpack.c.l.b16 %v1819
    %v2210 = vunpack.c.h.b16 %v1819
    %v2211 = vunpack.c.l.b16 %v1820
    %v2212 = vunpack.c.h.b16 %v1820
    %v2213 = vunpack.c.l.b16 %v1821
    %v2214 = vunpack.c.h.b16 %v1821
    %v2215 = vunpack.c.l.b16 %v1822
    %v2216 = vunpack.c.h.b16 %v1822
    %v2217 = vunpack.c.l.b16 %v1823
    %v2218 = vunpack.c.h.b16 %v1823
    %v2219 = vunpack.c.l.b16 %v1824
    %v2220 = vunpack.c.h.b16 %v1824
    %v2221 = vunpack.c.l.b16 %v1825
    %v2222 = vunpack.c.h.b16 %v1825
    %v2223 = vunpack.c.l.b16 %v1826
    %v2224 = vunpack.c.h.b16 %v1826
    %v2225 = vunpack.c.l.b16 %v1827
    %v2226 = vunpack.c.h.b16 %v1827
    %v2227 = vunpack.c.l.b16 %v1828
    %v2228 = vunpack.c.h.b16 %v1828
    %v2229 = vunpack.c.l.b16 %v1829
    %v2230 = vunpack.c.h.b16 %v1829
    %v2231 = vunpack.c.l.b16 %v1830
    %v2232 = vunpack.c.h.b16 %v1830
    %v2233 = vunpack.c.l.b16 %v1831
    %v2234 = vunpack.c.h.b16 %v1831
    %v2235 = vunpack.c.l.b16 %v1832
    %v2236 = vunpack.c.h.b16 %v1832
    %v2237 = vunpack.c.l.b16 %v1833
    %v2238 = vunpack.c.h.b16 %v1833
    %v2239 = vunpack.c.l.b16 %v1834
    %v2240 = vunpack.c.h.b16 %v1834
    %v2241 = vpack.c.b16 %v1989, %v1985
    %v2242 = vpack.c.b16 %v1990, %v1986
    %v2243 = vpack.c.b16 %v1991, %v1987
    %v2244 = vpack.c.b16 %v1992, %v1988
    %v2245 = vpack.c.b16 %v1997, %v1993
    %v2246 = vpack.c.b16 %v1998, %v1994
    %v2247 = vpack.c.b16 %v1999, %v1995
    %v2248 = vpack.c.b16 %v2000, %v1996
    %v2249 = vpack.c.b16 %v2005, %v2001
    %v2250 = vpack.c.b16 %v2006, %v2002
    %v2251 = vpack.c.b16 %v2007, %v2003
    %v2252 = vpack.c.b16 %v2008, %v2004
    %v2253 = vpack.c.b16 %v2013, %v2009
    %v2254 = vpack.c.b16 %v2014, %v2010
    %v2255 = vpack.c.b16 %v2015, %v2011
    %v2256 = vpack.c.b16 %v2016, %v2012
    %v2257 = vpack.c.b16 %v2021, %v2017
    %v2258 = vpack.c.b16 %v2022, %v2018
    %v2259 = vpack.c.b16 %v2023, %v2019
    %v2260 = vpack.c.b16 %v2024, %v2020
    %v2261 = vpack.c.b16 %v2029, %v2025
    %v2262 = vpack.c.b16 %v2030, %v2026
    %v2263 = vpack.c.b16 %v2031, %v2027
    %v2264 = vpack.c.b16 %v2032, %v2028
    %v2265 = vpack.c.b16 %v2037, %v2033
    %v2266 = vpack.c.b16 %v2038, %v2034
    %v2267 = vpack.c.b16 %v2039, %v2035
    %v2268 = vpack.c.b16 %v2040, %v2036
    %v2269 = vpack.c.b16 %v2045, %v2041
    %v2270 = vpack.c.b16 %v2046, %v2042
    %v2271 = vpack.c.b16 %v2047, %v2043
    %v2272 = vpack.c.b16 %v2048, %v2044
    %v2273 = vpack.c.b16 %v2053, %v2049
    %v2274 = vpack.c.b16 %v2054, %v2050
    %v2275 = vpack.c.b16 %v2055, %v2051
    %v2276 = vpack.c.b16 %v2056, %v2052
    %v2277 = vpack.c.b16 %v2061, %v2057
    %v2278 = vpack.c.b16 %v2062, %v2058
    %v2279 = vpack.c.b16 %v2063, %v2059
    %v2280 = vpack.c.b16 %v2064, %v2060
    %v2281 = vpack.c.b16 %v2069, %v2065
    %v2282 = vpack.c.b16 %v2070, %v2066
    %v2283 = vpack.c.b16 %v2071, %v2067
    %v2284 = vpack.c.b16 %v2072, %v2068
    %v2285 = vpack.c.b16 %v2077, %v2073
    %v2286 = vpack.c.b16 %v2078, %v2074
    %v2287 = vpack.c.b16 %v2079, %v2075
    %v2288 = vpack.c.b16 %v2080, %v2076
    %v2289 = vpack.c.b16 %v2085, %v2081
    %v2290 = vpack.c.b16 %v2086, %v2082
    %v2291 = vpack.c.b16 %v2087, %v2083
    %v2292 = vpack.c.b16 %v2088, %v2084
    %v2293 = vpack.c.b16 %v2093, %v2089
    %v2294 = vpack.c.b16 %v2094, %v2090
    %v2295 = vpack.c.b16 %v2095, %v2091
    %v2296 = vpack.c.b16 %v2096, %v2092
    %v2297 = vpack.c.b16 %v2101, %v2097
    %v2298 = vpack.c.b16 %v2102, %v2098
    %v2299 = vpack.c.b16 %v2103, %v2099
    %v2300 = vpack.c.b16 %v2104, %v2100
    %v2301 = vpack.c.b16 %v2109, %v2105
    %v2302 = vpack.c.b16 %v2110, %v2106
    %v2303 = vpack.c.b16 %v2111, %v2107
    %v2304 = vpack.c.b16 %v2112, %v2108
    %v2305 = vpack.c.b16 %v2117, %v2113
    %v2306 = vpack.c.b16 %v2118, %v2114
    %v2307 = vpack.c.b16 %v2119, %v2115
    %v2308 = vpack.c.b16 %v2120, %v2116
    %v2309 = vpack.c.b16 %v2125, %v2121
    %v2310 = vpack.c.b16 %v2126, %v2122
    %v2311 = vpack.c.b16 %v2127, %v2123
    %v2312 = vpack.c.b16 %v2128, %v2124
    %v2313 = vpack.c.b16 %v2133, %v2129
    %v2314 = vpack.c.b16 %v2134, %v2130
    %v2315 = vpack.c.b16 %v2135, %v2131
    %v2316 = vpack.c.b16 %v2136, %v2132
    %v2317 = vpack.c.b16 %v2141, %v2137
    %v2318 = vpack.c.b16 %v2142, %v2138
    %v2319 = vpack.c.b16 %v2143, %v2139
    %v2320 = vpack.c.b16 %v2144, %v2140
    %v2321 = vpack.c.b16 %v2149, %v2145
    %v2322 = vpack.c.b16 %v2150, %v2146
    %v2323 = vpack.c.b16 %v2151, %v2147
    %v2324 = vpack.c.b16 %v2152, %v2148
    %v2325 = vpack.c.b16 %v2157, %v2153
    %v2326 = vpack.c.b16 %v2158, %v2154
    %v2327 = vpack.c.b16 %v2159, %v2155
    %v2328 = vpack.c.b16 %v2160, %v2156
    %v2329 = vpack.c.b16 %v2165, %v2161
    %v2330 = vpack.c.b16 %v2166, %v2162
    %v2331 = vpack.c.b16 %v2167, %v2163
    %v2332 = vpack.c.b16 %v2168, %v2164
    %v2333 = vpack.c.b16 %v2173, %v2169
    %v2334 = vpack.c.b16 %v2174, %v2170
    %v2335 = vpack.c.b16 %v2175, %v2171
    %v2336 = vpack.c.b16 %v2176, %v2172
    %v2337 = vpack.c.b16 %v2181, %v2177
    %v2338 = vpack.c.b16 %v2182, %v2178
    %v2339 = vpack.c.b16 %v2183, %v2179
    %v2340 = vpack.c.b16 %v2184, %v2180
    %v2341 = vpack.c.b16 %v2189, %v2185
    %v2342 = vpack.c.b16 %v2190, %v2186
    %v2343 = vpack.c.b16 %v2191, %v2187
    %v2344 = vpack.c.b16 %v2192, %v2188
    %v2345 = vpack.c.b16 %v2197, %v2193
    %v2346 = vpack.c.b16 %v2198, %v2194
    %v2347 = vpack.c.b16 %v2199, %v2195
    %v2348 = vpack.c.b16 %v2200, %v2196
    %v2349 = vpack.c.b16 %v2205, %v2201
    %v2350 = vpack.c.b16 %v2206, %v2202
    %v2351 = vpack.c.b16 %v2207, %v2203
    %v2352 = vpack.c.b16 %v2208, %v2204
    %v2353 = vpack.c.b16 %v2213, %v2209
    %v2354 = vpack.c.b16 %v2214, %v2210
    %v2355 = vpack.c.b16 %v2215, %v2211
    %v2356 = vpack.c.b16 %v2216, %v2212
    %v2357 = vpack.c.b16 %v2221, %v2217
    %v2358 = vpack.c.b16 %v2222, %v2218
    %v2359 = vpack.c.b16 %v2223, %v2219
    %v2360 = vpack.c.b16 %v2224, %v2220
    %v2361 = vpack.c.b16 %v2229, %v2225
    %v2362 = vpack.c.b16 %v2230, %v2226
    %v2363 = vpack.c.b16 %v2231, %v2227
    %v2364 = vpack.c.b16 %v2232, %v2228
    %v2365 = vpack.c.b16 %v2237, %v2233
    %v2366 = vpack.c.b16 %v2238, %v2234
    %v2367 = vpack.c.b16 %v2239, %v2235
    %v2368 = vpack.c.b16 %v2240, %v2236
    %2497 = vmatprep.subr.bf16.mxu0 %v2242
    %2498 = vmatpush1.bf16.msra.mxu0 %v2241
    %2499 = vmatprep.subr.bf16.mxu0 %v2246
    %2500 = vmatpush1.bf16.msra.mxu0 %v2245
    %2501 = vmatprep.subr.bf16.mxu0 %v2250
    %2502 = vmatpush1.bf16.msra.mxu0 %v2249
    %2503 = vmatprep.subr.bf16.mxu0 %v2254
    %2504 = vmatpush1.bf16.msra.mxu0 %v2253
    %2505 = vmatprep.subr.bf16.mxu0 %v2258
    %2506 = vmatpush1.bf16.msra.mxu0 %v2257
    %2507 = vmatprep.subr.bf16.mxu0 %v2262
    %2508 = vmatpush1.bf16.msra.mxu0 %v2261
    %2509 = vmatprep.subr.bf16.mxu0 %v2266
    %2510 = vmatpush1.bf16.msra.mxu0 %v2265
    %2511 = vmatprep.subr.bf16.mxu0 %v2270
    %2512 = vmatpush1.bf16.msra.mxu0 %v2269
    %2513 = vmatprep.subr.bf16.mxu0 %v2274
    %2514 = vmatpush1.bf16.msra.mxu0 %v2273
    %2515 = vmatprep.subr.bf16.mxu0 %v2278
    %2516 = vmatpush1.bf16.msra.mxu0 %v2277
    %2517 = vmatprep.subr.bf16.mxu0 %v2282
    %2518 = vmatpush1.bf16.msra.mxu0 %v2281
    %2519 = vmatprep.subr.bf16.mxu0 %v2286
    %2520 = vmatpush1.bf16.msra.mxu0 %v2285
    %2521 = vmatprep.subr.bf16.mxu0 %v2290
    %2522 = vmatpush1.bf16.msra.mxu0 %v2289
    %2523 = vmatprep.subr.bf16.mxu0 %v2294
    %2524 = vmatpush1.bf16.msra.mxu0 %v2293
    %2525 = vmatprep.subr.bf16.mxu0 %v2298
    %2526 = vmatpush1.bf16.msra.mxu0 %v2297
    %2527 = vmatprep.subr.bf16.mxu0 %v2302
    %2528 = vmatpush1.bf16.msra.mxu0 %v2301
    %2529 = vmatprep.mubr.bf16.mxu0 %v1704
    %2530 = vmatmul.mubr.bf16.gmra.mrb[0].mxu0 %v1703
    %v2531 = vpop.f32.mrb[0].mxu0
    %v2532 = vadd.f32 %v1840, %v2531
    %v2533 = vpop.f32.mrb[0].mxu0
    %v2534 = vadd.f32 %v1844, %v2533
    %v2535 = vpop.f32.mrb[0].mxu0
    %v2536 = vpop.f32.mrb[0].mxu0
    %2537 = vdwg.mxu0
    %2538 = vmatprep.subr.bf16.mxu0 %v2306
    %2539 = vmatpush1.bf16.msra.mxu0 %v2305
    %2540 = vmatprep.subr.bf16.mxu0 %v2310
    %2541 = vmatpush1.bf16.msra.mxu0 %v2309
    %2542 = vmatprep.subr.bf16.mxu0 %v2314
    %2543 = vmatpush1.bf16.msra.mxu0 %v2313
    %2544 = vmatprep.subr.bf16.mxu0 %v2318
    %2545 = vmatpush1.bf16.msra.mxu0 %v2317
    %2546 = vmatprep.subr.bf16.mxu0 %v2322
    %2547 = vmatpush1.bf16.msra.mxu0 %v2321
    %2548 = vmatprep.subr.bf16.mxu0 %v2326
    %2549 = vmatpush1.bf16.msra.mxu0 %v2325
    %2550 = vmatprep.subr.bf16.mxu0 %v2330
    %2551 = vmatpush1.bf16.msra.mxu0 %v2329
    %2552 = vmatprep.subr.bf16.mxu0 %v2334
    %2553 = vmatpush1.bf16.msra.mxu0 %v2333
    %2554 = vmatprep.subr.bf16.mxu0 %v2338
    %2555 = vmatpush1.bf16.msra.mxu0 %v2337
    %2556 = vmatprep.subr.bf16.mxu0 %v2342
    %2557 = vmatpush1.bf16.msra.mxu0 %v2341
    %2558 = vmatprep.subr.bf16.mxu0 %v2346
    %2559 = vmatpush1.bf16.msra.mxu0 %v2345
    %2560 = vmatprep.subr.bf16.mxu0 %v2350
    %2561 = vmatpush1.bf16.msra.mxu0 %v2349
    %2562 = vmatprep.subr.bf16.mxu0 %v2354
    %2563 = vmatpush1.bf16.msra.mxu0 %v2353
    %2564 = vmatprep.subr.bf16.mxu0 %v2358
    %2565 = vmatpush1.bf16.msra.mxu0 %v2357
    %2566 = vmatprep.subr.bf16.mxu0 %v2362
    %2567 = vmatpush1.bf16.msra.mxu0 %v2361
    %2568 = vmatprep.subr.bf16.mxu0 %v2366
    %2569 = vmatpush1.bf16.msra.mxu0 %v2365
    %2570 = vmatprep.mubr.bf16.mxu0 %v1706
    %2571 = vmatmul.mubr.bf16.gmra.mrb[0].mxu0 %v1705
    %v2572 = vpop.f32.mrb[0].mxu0
    %v2573 = vadd.f32 %v2532, %v2572
    %v2574 = vpop.f32.mrb[0].mxu0
    %v2575 = vadd.f32 %v2534, %v2574
    %v2576 = vpop.f32.mrb[0].mxu0
    %v2577 = vpop.f32.mrb[0].mxu0
    %2578 = vdwg.mxu0
    %2579 = vmatprep.subr.bf16.mxu0 %v2244
    %2580 = vmatpush1.bf16.msra.mxu0 %v2243
    %2581 = vmatprep.subr.bf16.mxu0 %v2248
    %2582 = vmatpush1.bf16.msra.mxu0 %v2247
    %2583 = vmatprep.subr.bf16.mxu0 %v2252
    %2584 = vmatpush1.bf16.msra.mxu0 %v2251
    %2585 = vmatprep.subr.bf16.mxu0 %v2256
    %2586 = vmatpush1.bf16.msra.mxu0 %v2255
    %2587 = vmatprep.subr.bf16.mxu0 %v2260
    %2588 = vmatpush1.bf16.msra.mxu0 %v2259
    %2589 = vmatprep.subr.bf16.mxu0 %v2264
    %2590 = vmatpush1.bf16.msra.mxu0 %v2263
    %2591 = vmatprep.subr.bf16.mxu0 %v2268
    %2592 = vmatpush1.bf16.msra.mxu0 %v2267
    %2593 = vmatprep.subr.bf16.mxu0 %v2272
    %2594 = vmatpush1.bf16.msra.mxu0 %v2271
    %2595 = vmatprep.subr.bf16.mxu0 %v2276
    %2596 = vmatpush1.bf16.msra.mxu0 %v2275
    %2597 = vmatprep.subr.bf16.mxu0 %v2280
    %2598 = vmatpush1.bf16.msra.mxu0 %v2279
    %2599 = vmatprep.subr.bf16.mxu0 %v2284
    %2600 = vmatpush1.bf16.msra.mxu0 %v2283
    %2601 = vmatprep.subr.bf16.mxu0 %v2288
    %2602 = vmatpush1.bf16.msra.mxu0 %v2287
    %2603 = vmatprep.subr.bf16.mxu0 %v2292
    %2604 = vmatpush1.bf16.msra.mxu0 %v2291
    %2605 = vmatprep.subr.bf16.mxu0 %v2296
    %2606 = vmatpush1.bf16.msra.mxu0 %v2295
    %2607 = vmatprep.subr.bf16.mxu0 %v2300
    %2608 = vmatpush1.bf16.msra.mxu0 %v2299
    %2609 = vmatprep.subr.bf16.mxu0 %v2304
    %2610 = vmatpush1.bf16.msra.mxu0 %v2303
    %2611 = vmatprep.mubr.bf16.mxu0 %v1704
    %2612 = vmatmul.mubr.bf16.gmra.mrb[0].mxu0 %v1703
    %v2613 = vpop.f32.mrb[0].mxu0
    %v2614 = vadd.f32 %v1848, %v2613
    %v2615 = vpop.f32.mrb[0].mxu0
    %v2616 = vadd.f32 %v1852, %v2615
    %v2617 = vpop.f32.mrb[0].mxu0
    %v2618 = vpop.f32.mrb[0].mxu0
    %2619 = vdwg.mxu0
    %2620 = vmatprep.subr.bf16.mxu0 %v2308
    %2621 = vmatpush1.bf16.msra.mxu0 %v2307
    %2622 = vmatprep.subr.bf16.mxu0 %v2312
    %2623 = vmatpush1.bf16.msra.mxu0 %v2311
    %2624 = vmatprep.subr.bf16.mxu0 %v2316
    %2625 = vmatpush1.bf16.msra.mxu0 %v2315
    %2626 = vmatprep.subr.bf16.mxu0 %v2320
    %2627 = vmatpush1.bf16.msra.mxu0 %v2319
    %2628 = vmatprep.subr.bf16.mxu0 %v2324
    %2629 = vmatpush1.bf16.msra.mxu0 %v2323
    %2630 = vmatprep.subr.bf16.mxu0 %v2328
    %2631 = vmatpush1.bf16.msra.mxu0 %v2327
    %2632 = vmatprep.subr.bf16.mxu0 %v2332
    %2633 = vmatpush1.bf16.msra.mxu0 %v2331
    %2634 = vmatprep.subr.bf16.mxu0 %v2336
    %2635 = vmatpush1.bf16.msra.mxu0 %v2335
    %2636 = vmatprep.subr.bf16.mxu0 %v2340
    %2637 = vmatpush1.bf16.msra.mxu0 %v2339
    %2638 = vmatprep.subr.bf16.mxu0 %v2344
    %2639 = vmatpush1.bf16.msra.mxu0 %v2343
    %2640 = vmatprep.subr.bf16.mxu0 %v2348
    %2641 = vmatpush1.bf16.msra.mxu0 %v2347
    %2642 = vmatprep.subr.bf16.mxu0 %v2352
    %2643 = vmatpush1.bf16.msra.mxu0 %v2351
    %2644 = vmatprep.subr.bf16.mxu0 %v2356
    %2645 = vmatpush1.bf16.msra.mxu0 %v2355
    %2646 = vmatprep.subr.bf16.mxu0 %v2360
    %2647 = vmatpush1.bf16.msra.mxu0 %v2359
    %2648 = vmatprep.subr.bf16.mxu0 %v2364
    %2649 = vmatpush1.bf16.msra.mxu0 %v2363
    %2650 = vmatprep.subr.bf16.mxu0 %v2368
    %2651 = vmatpush1.bf16.msra.mxu0 %v2367
    %2652 = vmatprep.mubr.bf16.mxu0 %v1706
    %2653 = vmatmul.mubr.bf16.gmra.mrb[0].mxu0 %v1705
    %v2654 = vpop.f32.mrb[0].mxu0
    %v2655 = vadd.f32 %v2614, %v2654
    %v2656 = vpop.f32.mrb[0].mxu0
    %v2657 = vadd.f32 %v2616, %v2656
    %v2658 = vpop.f32.mrb[0].mxu0
    %v2659 = vpop.f32.mrb[0].mxu0
    %2660 = vdwg.mxu0
    %v2661 = vmax.f32 %v2573, 0.0
    %v2662 = vmax.f32 %v2575, 0.0
    %v2663 = vmax.f32 %v2655, 0.0
    %v2664 = vmax.f32 %v2657, 0.0
    %v2665 = vpack.c.bf16 %v2661, %v2661
    %v2666 = vpack.c.bf16 %v2662, %v2662
    %v2667 = vpack.c.bf16 %v2663, %v2663
    %v2668 = vpack.c.bf16 %v2664, %v2664
    %v2669 = vld [vmem:[#allocation11] sm:$0xff]
    %v2670 = vld [vmem:[#allocation11 + $0x8] sm:$0xff]
    %v2671 = vld [vmem:[#allocation11 + $0x10] sm:$0xff]
    %v2672 = vld [vmem:[#allocation11 + $0x18] sm:$0xff]
    %v2673 = vld [vmem:[#allocation11 + $0x20] sm:$0xff]
    %v2674 = vld [vmem:[#allocation11 + $0x28] sm:$0xff]
    %v2675 = vld [vmem:[#allocation11 + $0x30] sm:$0xff]
    %v2676 = vld [vmem:[#allocation11 + $0x38] sm:$0xff]
    %v2677 = vld [vmem:[#allocation11 + $0x40] sm:$0xff]
    %v2678 = vld [vmem:[#allocation11 + $0x48] sm:$0xff]
    %v2679 = vld [vmem:[#allocation11 + $0x50] sm:$0xff]
    %v2680 = vld [vmem:[#allocation11 + $0x58] sm:$0xff]
    %v2681 = vld [vmem:[#allocation11 + $0x60] sm:$0xff]
    %v2682 = vld [vmem:[#allocation11 + $0x68] sm:$0xff]
    %v2683 = vld [vmem:[#allocation11 + $0x70] sm:$0xff]
    %v2684 = vld [vmem:[#allocation11 + $0x78] sm:$0xff]
    %v2685 = vld [vmem:[#allocation11 + $0x80] sm:$0xff]
    %v2686 = vld [vmem:[#allocation11 + $0x88] sm:$0xff]
    %v2687 = vld [vmem:[#allocation11 + $0x90] sm:$0xff]
    %v2688 = vld [vmem:[#allocation11 + $0x98] sm:$0xff]
    %v2689 = vld [vmem:[#allocation11 + $0xa0] sm:$0xff]
    %v2690 = vld [vmem:[#allocation11 + $0xa8] sm:$0xff]
    %v2691 = vld [vmem:[#allocation11 + $0xb0] sm:$0xff]
    %v2692 = vld [vmem:[#allocation11 + $0xb8] sm:$0xff]
    %v2693 = vld [vmem:[#allocation11 + $0xc0] sm:$0xff]
    %v2694 = vld [vmem:[#allocation11 + $0xc8] sm:$0xff]
    %v2695 = vld [vmem:[#allocation11 + $0xd0] sm:$0xff]
    %v2696 = vld [vmem:[#allocation11 + $0xd8] sm:$0xff]
    %v2697 = vld [vmem:[#allocation11 + $0xe0] sm:$0xff]
    %v2698 = vld [vmem:[#allocation11 + $0xe8] sm:$0xff]
    %v2699 = vld [vmem:[#allocation11 + $0xf0] sm:$0xff]
    %v2700 = vld [vmem:[#allocation11 + $0xf8] sm:$0xff]
    %v2701 = vld [vmem:[#allocation11 + $0x100] sm:$0xff]
    %v2702 = vld [vmem:[#allocation11 + $0x108] sm:$0xff]
    %v2703 = vld [vmem:[#allocation11 + $0x110] sm:$0xff]
    %v2704 = vld [vmem:[#allocation11 + $0x118] sm:$0xff]
    %v2705 = vld [vmem:[#allocation11 + $0x120] sm:$0xff]
    %v2706 = vld [vmem:[#allocation11 + $0x128] sm:$0xff]
    %v2707 = vld [vmem:[#allocation11 + $0x130] sm:$0xff]
    %v2708 = vld [vmem:[#allocation11 + $0x138] sm:$0xff]
    %v2709 = vld [vmem:[#allocation11 + $0x140] sm:$0xff]
    %v2710 = vld [vmem:[#allocation11 + $0x148] sm:$0xff]
    %v2711 = vld [vmem:[#allocation11 + $0x150] sm:$0xff]
    %v2712 = vld [vmem:[#allocation11 + $0x158] sm:$0xff]
    %v2713 = vld [vmem:[#allocation11 + $0x160] sm:$0xff]
    %v2714 = vld [vmem:[#allocation11 + $0x168] sm:$0xff]
    %v2715 = vld [vmem:[#allocation11 + $0x170] sm:$0xff]
    %v2716 = vld [vmem:[#allocation11 + $0x178] sm:$0xff]
    %v2717 = vld [vmem:[#allocation11 + $0x180] sm:$0xff]
    %v2718 = vld [vmem:[#allocation11 + $0x188] sm:$0xff]
    %v2719 = vld [vmem:[#allocation11 + $0x190] sm:$0xff]
    %v2720 = vld [vmem:[#allocation11 + $0x198] sm:$0xff]
    %v2721 = vld [vmem:[#allocation11 + $0x1a0] sm:$0xff]
    %v2722 = vld [vmem:[#allocation11 + $0x1a8] sm:$0xff]
    %v2723 = vld [vmem:[#allocation11 + $0x1b0] sm:$0xff]
    %v2724 = vld [vmem:[#allocation11 + $0x1b8] sm:$0xff]
    %v2725 = vld [vmem:[#allocation11 + $0x1c0] sm:$0xff]
    %v2726 = vld [vmem:[#allocation11 + $0x1c8] sm:$0xff]
    %v2727 = vld [vmem:[#allocation11 + $0x1d0] sm:$0xff]
    %v2728 = vld [vmem:[#allocation11 + $0x1d8] sm:$0xff]
    %v2729 = vld [vmem:[#allocation11 + $0x1e0] sm:$0xff]
    %v2730 = vld [vmem:[#allocation11 + $0x1e8] sm:$0xff]
    %v2731 = vld [vmem:[#allocation11 + $0x1f0] sm:$0xff]
    %v2732 = vld [vmem:[#allocation11 + $0x1f8] sm:$0xff]
    %v2733 = vld [vmem:[#allocation11 + $0x200] sm:$0xff]
    %v2734 = vld [vmem:[#allocation11 + $0x208] sm:$0xff]
    %v2735 = vld [vmem:[#allocation11 + $0x210] sm:$0xff]
    %v2736 = vld [vmem:[#allocation11 + $0x218] sm:$0xff]
    %v2737 = vld [vmem:[#allocation11 + $0x220] sm:$0xff]
    %v2738 = vld [vmem:[#allocation11 + $0x228] sm:$0xff]
    %v2739 = vld [vmem:[#allocation11 + $0x230] sm:$0xff]
    %v2740 = vld [vmem:[#allocation11 + $0x238] sm:$0xff]
    %v2741 = vld [vmem:[#allocation11 + $0x240] sm:$0xff]
    %v2742 = vld [vmem:[#allocation11 + $0x248] sm:$0xff]
    %v2743 = vld [vmem:[#allocation11 + $0x250] sm:$0xff]
    %v2744 = vld [vmem:[#allocation11 + $0x258] sm:$0xff]
    %v2745 = vld [vmem:[#allocation11 + $0x260] sm:$0xff]
    %v2746 = vld [vmem:[#allocation11 + $0x268] sm:$0xff]
    %v2747 = vld [vmem:[#allocation11 + $0x270] sm:$0xff]
    %v2748 = vld [vmem:[#allocation11 + $0x278] sm:$0xff]
    %v2749 = vld [vmem:[#allocation11 + $0x280] sm:$0xff]
    %v2750 = vld [vmem:[#allocation11 + $0x288] sm:$0xff]
    %v2751 = vld [vmem:[#allocation11 + $0x290] sm:$0xff]
    %v2752 = vld [vmem:[#allocation11 + $0x298] sm:$0xff]
    %v2753 = vld [vmem:[#allocation11 + $0x2a0] sm:$0xff]
    %v2754 = vld [vmem:[#allocation11 + $0x2a8] sm:$0xff]
    %v2755 = vld [vmem:[#allocation11 + $0x2b0] sm:$0xff]
    %v2756 = vld [vmem:[#allocation11 + $0x2b8] sm:$0xff]
    %v2757 = vld [vmem:[#allocation11 + $0x2c0] sm:$0xff]
    %v2758 = vld [vmem:[#allocation11 + $0x2c8] sm:$0xff]
    %v2759 = vld [vmem:[#allocation11 + $0x2d0] sm:$0xff]
    %v2760 = vld [vmem:[#allocation11 + $0x2d8] sm:$0xff]
    %v2761 = vld [vmem:[#allocation11 + $0x2e0] sm:$0xff]
    %v2762 = vld [vmem:[#allocation11 + $0x2e8] sm:$0xff]
    %v2763 = vld [vmem:[#allocation11 + $0x2f0] sm:$0xff]
    %v2764 = vld [vmem:[#allocation11 + $0x2f8] sm:$0xff]
    %v2765 = vld [vmem:[#allocation11 + $0x300] sm:$0xff]
    %v2766 = vld [vmem:[#allocation11 + $0x308] sm:$0xff]
    %v2767 = vld [vmem:[#allocation11 + $0x310] sm:$0xff]
    %v2768 = vld [vmem:[#allocation11 + $0x318] sm:$0xff]
    %v2769 = vld [vmem:[#allocation11 + $0x320] sm:$0xff]
    %v2770 = vld [vmem:[#allocation11 + $0x328] sm:$0xff]
    %v2771 = vld [vmem:[#allocation11 + $0x330] sm:$0xff]
    %v2772 = vld [vmem:[#allocation11 + $0x338] sm:$0xff]
    %v2773 = vld [vmem:[#allocation11 + $0x340] sm:$0xff]
    %v2774 = vld [vmem:[#allocation11 + $0x348] sm:$0xff]
    %v2775 = vld [vmem:[#allocation11 + $0x350] sm:$0xff]
    %v2776 = vld [vmem:[#allocation11 + $0x358] sm:$0xff]
    %v2777 = vld [vmem:[#allocation11 + $0x360] sm:$0xff]
    %v2778 = vld [vmem:[#allocation11 + $0x368] sm:$0xff]
    %v2779 = vld [vmem:[#allocation11 + $0x370] sm:$0xff]
    %v2780 = vld [vmem:[#allocation11 + $0x378] sm:$0xff]
    %v2781 = vld [vmem:[#allocation11 + $0x380] sm:$0xff]
    %v2782 = vld [vmem:[#allocation11 + $0x388] sm:$0xff]
    %v2783 = vld [vmem:[#allocation11 + $0x390] sm:$0xff]
    %v2784 = vld [vmem:[#allocation11 + $0x398] sm:$0xff]
    %v2785 = vld [vmem:[#allocation11 + $0x3a0] sm:$0xff]
    %v2786 = vld [vmem:[#allocation11 + $0x3a8] sm:$0xff]
    %v2787 = vld [vmem:[#allocation11 + $0x3b0] sm:$0xff]
    %v2788 = vld [vmem:[#allocation11 + $0x3b8] sm:$0xff]
    %v2789 = vld [vmem:[#allocation11 + $0x3c0] sm:$0xff]
    %v2790 = vld [vmem:[#allocation11 + $0x3c8] sm:$0xff]
    %v2791 = vld [vmem:[#allocation11 + $0x3d0] sm:$0xff]
    %v2792 = vld [vmem:[#allocation11 + $0x3d8] sm:$0xff]
    %v2793 = vld [vmem:[#allocation11 + $0x3e0] sm:$0xff]
    %v2794 = vld [vmem:[#allocation11 + $0x3e8] sm:$0xff]
    %v2795 = vld [vmem:[#allocation11 + $0x3f0] sm:$0xff]
    %v2796 = vld [vmem:[#allocation11 + $0x3f8] sm:$0xff]
    %v2797 = vld [vmem:[%s10] sm:$0xf]
    %v2799 = vlaneseq
    %v2800 = vshrl.u32 %v2799, 7
    %v2801 = vsub.s32 0, %v2800
    %v2802 = vrot.slane %v2797, %v2801
    %v2803 = vlaneseq
    %v2804 = vshrl.u32 %v2803, 7
    %v2805 = vsub.s32 1, %v2804
    %v2806 = vrot.slane %v2797, %v2805
    %v2807 = vlaneseq
    %v2808 = vshrl.u32 %v2807, 7
    %v2809 = vsub.s32 2, %v2808
    %v2810 = vrot.slane %v2797, %v2809
    %v2811 = vlaneseq
    %v2812 = vshrl.u32 %v2811, 7
    %v2813 = vsub.s32 3, %v2812
    %v2814 = vrot.slane %v2797, %v2813
    %v2947 = vunpack.c.l.b16 %v2669
    %v2948 = vunpack.c.h.b16 %v2669
    %v2949 = vunpack.c.l.b16 %v2670
    %v2950 = vunpack.c.h.b16 %v2670
    %v2951 = vunpack.c.l.b16 %v2671
    %v2952 = vunpack.c.h.b16 %v2671
    %v2953 = vunpack.c.l.b16 %v2672
    %v2954 = vunpack.c.h.b16 %v2672
    %v2955 = vunpack.c.l.b16 %v2673
    %v2956 = vunpack.c.h.b16 %v2673
    %v2957 = vunpack.c.l.b16 %v2674
    %v2958 = vunpack.c.h.b16 %v2674
    %v2959 = vunpack.c.l.b16 %v2675
    %v2960 = vunpack.c.h.b16 %v2675
    %v2961 = vunpack.c.l.b16 %v2676
    %v2962 = vunpack.c.h.b16 %v2676
    %v2963 = vunpack.c.l.b16 %v2677
    %v2964 = vunpack.c.h.b16 %v2677
    %v2965 = vunpack.c.l.b16 %v2678
    %v2966 = vunpack.c.h.b16 %v2678
    %v2967 = vunpack.c.l.b16 %v2679
    %v2968 = vunpack.c.h.b16 %v2679
    %v2969 = vunpack.c.l.b16 %v2680
    %v2970 = vunpack.c.h.b16 %v2680
    %v2971 = vunpack.c.l.b16 %v2681
    %v2972 = vunpack.c.h.b16 %v2681
    %v2973 = vunpack.c.l.b16 %v2682
    %v2974 = vunpack.c.h.b16 %v2682
    %v2975 = vunpack.c.l.b16 %v2683
    %v2976 = vunpack.c.h.b16 %v2683
    %v2977 = vunpack.c.l.b16 %v2684
    %v2978 = vunpack.c.h.b16 %v2684
    %v2979 = vunpack.c.l.b16 %v2685
    %v2980 = vunpack.c.h.b16 %v2685
    %v2981 = vunpack.c.l.b16 %v2686
    %v2982 = vunpack.c.h.b16 %v2686
    %v2983 = vunpack.c.l.b16 %v2687
    %v2984 = vunpack.c.h.b16 %v2687
    %v2985 = vunpack.c.l.b16 %v2688
    %v2986 = vunpack.c.h.b16 %v2688
    %v2987 = vunpack.c.l.b16 %v2689
    %v2988 = vunpack.c.h.b16 %v2689
    %v2989 = vunpack.c.l.b16 %v2690
    %v2990 = vunpack.c.h.b16 %v2690
    %v2991 = vunpack.c.l.b16 %v2691
    %v2992 = vunpack.c.h.b16 %v2691
    %v2993 = vunpack.c.l.b16 %v2692
    %v2994 = vunpack.c.h.b16 %v2692
    %v2995 = vunpack.c.l.b16 %v2693
    %v2996 = vunpack.c.h.b16 %v2693
    %v2997 = vunpack.c.l.b16 %v2694
    %v2998 = vunpack.c.h.b16 %v2694
    %v2999 = vunpack.c.l.b16 %v2695
    %v3000 = vunpack.c.h.b16 %v2695
    %v3001 = vunpack.c.l.b16 %v2696
    %v3002 = vunpack.c.h.b16 %v2696
    %v3003 = vunpack.c.l.b16 %v2697
    %v3004 = vunpack.c.h.b16 %v2697
    %v3005 = vunpack.c.l.b16 %v2698
    %v3006 = vunpack.c.h.b16 %v2698
    %v3007 = vunpack.c.l.b16 %v2699
    %v3008 = vunpack.c.h.b16 %v2699
    %v3009 = vunpack.c.l.b16 %v2700
    %v3010 = vunpack.c.h.b16 %v2700
    %v3011 = vunpack.c.l.b16 %v2701
    %v3012 = vunpack.c.h.b16 %v2701
    %v3013 = vunpack.c.l.b16 %v2702
    %v3014 = vunpack.c.h.b16 %v2702
    %v3015 = vunpack.c.l.b16 %v2703
    %v3016 = vunpack.c.h.b16 %v2703
    %v3017 = vunpack.c.l.b16 %v2704
    %v3018 = vunpack.c.h.b16 %v2704
    %v3019 = vunpack.c.l.b16 %v2705
    %v3020 = vunpack.c.h.b16 %v2705
    %v3021 = vunpack.c.l.b16 %v2706
    %v3022 = vunpack.c.h.b16 %v2706
    %v3023 = vunpack.c.l.b16 %v2707
    %v3024 = vunpack.c.h.b16 %v2707
    %v3025 = vunpack.c.l.b16 %v2708
    %v3026 = vunpack.c.h.b16 %v2708
    %v3027 = vunpack.c.l.b16 %v2709
    %v3028 = vunpack.c.h.b16 %v2709
    %v3029 = vunpack.c.l.b16 %v2710
    %v3030 = vunpack.c.h.b16 %v2710
    %v3031 = vunpack.c.l.b16 %v2711
    %v3032 = vunpack.c.h.b16 %v2711
    %v3033 = vunpack.c.l.b16 %v2712
    %v3034 = vunpack.c.h.b16 %v2712
    %v3035 = vunpack.c.l.b16 %v2713
    %v3036 = vunpack.c.h.b16 %v2713
    %v3037 = vunpack.c.l.b16 %v2714
    %v3038 = vunpack.c.h.b16 %v2714
    %v3039 = vunpack.c.l.b16 %v2715
    %v3040 = vunpack.c.h.b16 %v2715
    %v3041 = vunpack.c.l.b16 %v2716
    %v3042 = vunpack.c.h.b16 %v2716
    %v3043 = vunpack.c.l.b16 %v2717
    %v3044 = vunpack.c.h.b16 %v2717
    %v3045 = vunpack.c.l.b16 %v2718
    %v3046 = vunpack.c.h.b16 %v2718
    %v3047 = vunpack.c.l.b16 %v2719
    %v3048 = vunpack.c.h.b16 %v2719
    %v3049 = vunpack.c.l.b16 %v2720
    %v3050 = vunpack.c.h.b16 %v2720
    %v3051 = vunpack.c.l.b16 %v2721
    %v3052 = vunpack.c.h.b16 %v2721
    %v3053 = vunpack.c.l.b16 %v2722
    %v3054 = vunpack.c.h.b16 %v2722
    %v3055 = vunpack.c.l.b16 %v2723
    %v3056 = vunpack.c.h.b16 %v2723
    %v3057 = vunpack.c.l.b16 %v2724
    %v3058 = vunpack.c.h.b16 %v2724
    %v3059 = vunpack.c.l.b16 %v2725
    %v3060 = vunpack.c.h.b16 %v2725
    %v3061 = vunpack.c.l.b16 %v2726
    %v3062 = vunpack.c.h.b16 %v2726
    %v3063 = vunpack.c.l.b16 %v2727
    %v3064 = vunpack.c.h.b16 %v2727
    %v3065 = vunpack.c.l.b16 %v2728
    %v3066 = vunpack.c.h.b16 %v2728
    %v3067 = vunpack.c.l.b16 %v2729
    %v3068 = vunpack.c.h.b16 %v2729
    %v3069 = vunpack.c.l.b16 %v2730
    %v3070 = vunpack.c.h.b16 %v2730
    %v3071 = vunpack.c.l.b16 %v2731
    %v3072 = vunpack.c.h.b16 %v2731
    %v3073 = vunpack.c.l.b16 %v2732
    %v3074 = vunpack.c.h.b16 %v2732
    %v3075 = vunpack.c.l.b16 %v2733
    %v3076 = vunpack.c.h.b16 %v2733
    %v3077 = vunpack.c.l.b16 %v2734
    %v3078 = vunpack.c.h.b16 %v2734
    %v3079 = vunpack.c.l.b16 %v2735
    %v3080 = vunpack.c.h.b16 %v2735
    %v3081 = vunpack.c.l.b16 %v2736
    %v3082 = vunpack.c.h.b16 %v2736
    %v3083 = vunpack.c.l.b16 %v2737
    %v3084 = vunpack.c.h.b16 %v2737
    %v3085 = vunpack.c.l.b16 %v2738
    %v3086 = vunpack.c.h.b16 %v2738
    %v3087 = vunpack.c.l.b16 %v2739
    %v3088 = vunpack.c.h.b16 %v2739
    %v3089 = vunpack.c.l.b16 %v2740
    %v3090 = vunpack.c.h.b16 %v2740
    %v3091 = vunpack.c.l.b16 %v2741
    %v3092 = vunpack.c.h.b16 %v2741
    %v3093 = vunpack.c.l.b16 %v2742
    %v3094 = vunpack.c.h.b16 %v2742
    %v3095 = vunpack.c.l.b16 %v2743
    %v3096 = vunpack.c.h.b16 %v2743
    %v3097 = vunpack.c.l.b16 %v2744
    %v3098 = vunpack.c.h.b16 %v2744
    %v3099 = vunpack.c.l.b16 %v2745
    %v3100 = vunpack.c.h.b16 %v2745
    %v3101 = vunpack.c.l.b16 %v2746
    %v3102 = vunpack.c.h.b16 %v2746
    %v3103 = vunpack.c.l.b16 %v2747
    %v3104 = vunpack.c.h.b16 %v2747
    %v3105 = vunpack.c.l.b16 %v2748
    %v3106 = vunpack.c.h.b16 %v2748
    %v3107 = vunpack.c.l.b16 %v2749
    %v3108 = vunpack.c.h.b16 %v2749
    %v3109 = vunpack.c.l.b16 %v2750
    %v3110 = vunpack.c.h.b16 %v2750
    %v3111 = vunpack.c.l.b16 %v2751
    %v3112 = vunpack.c.h.b16 %v2751
    %v3113 = vunpack.c.l.b16 %v2752
    %v3114 = vunpack.c.h.b16 %v2752
    %v3115 = vunpack.c.l.b16 %v2753
    %v3116 = vunpack.c.h.b16 %v2753
    %v3117 = vunpack.c.l.b16 %v2754
    %v3118 = vunpack.c.h.b16 %v2754
    %v3119 = vunpack.c.l.b16 %v2755
    %v3120 = vunpack.c.h.b16 %v2755
    %v3121 = vunpack.c.l.b16 %v2756
    %v3122 = vunpack.c.h.b16 %v2756
    %v3123 = vunpack.c.l.b16 %v2757
    %v3124 = vunpack.c.h.b16 %v2757
    %v3125 = vunpack.c.l.b16 %v2758
    %v3126 = vunpack.c.h.b16 %v2758
    %v3127 = vunpack.c.l.b16 %v2759
    %v3128 = vunpack.c.h.b16 %v2759
    %v3129 = vunpack.c.l.b16 %v2760
    %v3130 = vunpack.c.h.b16 %v2760
    %v3131 = vunpack.c.l.b16 %v2761
    %v3132 = vunpack.c.h.b16 %v2761
    %v3133 = vunpack.c.l.b16 %v2762
    %v3134 = vunpack.c.h.b16 %v2762
    %v3135 = vunpack.c.l.b16 %v2763
    %v3136 = vunpack.c.h.b16 %v2763
    %v3137 = vunpack.c.l.b16 %v2764
    %v3138 = vunpack.c.h.b16 %v2764
    %v3139 = vunpack.c.l.b16 %v2765
    %v3140 = vunpack.c.h.b16 %v2765
    %v3141 = vunpack.c.l.b16 %v2766
    %v3142 = vunpack.c.h.b16 %v2766
    %v3143 = vunpack.c.l.b16 %v2767
    %v3144 = vunpack.c.h.b16 %v2767
    %v3145 = vunpack.c.l.b16 %v2768
    %v3146 = vunpack.c.h.b16 %v2768
    %v3147 = vunpack.c.l.b16 %v2769
    %v3148 = vunpack.c.h.b16 %v2769
    %v3149 = vunpack.c.l.b16 %v2770
    %v3150 = vunpack.c.h.b16 %v2770
    %v3151 = vunpack.c.l.b16 %v2771
    %v3152 = vunpack.c.h.b16 %v2771
    %v3153 = vunpack.c.l.b16 %v2772
    %v3154 = vunpack.c.h.b16 %v2772
    %v3155 = vunpack.c.l.b16 %v2773
    %v3156 = vunpack.c.h.b16 %v2773
    %v3157 = vunpack.c.l.b16 %v2774
    %v3158 = vunpack.c.h.b16 %v2774
    %v3159 = vunpack.c.l.b16 %v2775
    %v3160 = vunpack.c.h.b16 %v2775
    %v3161 = vunpack.c.l.b16 %v2776
    %v3162 = vunpack.c.h.b16 %v2776
    %v3163 = vunpack.c.l.b16 %v2777
    %v3164 = vunpack.c.h.b16 %v2777
    %v3165 = vunpack.c.l.b16 %v2778
    %v3166 = vunpack.c.h.b16 %v2778
    %v3167 = vunpack.c.l.b16 %v2779
    %v3168 = vunpack.c.h.b16 %v2779
    %v3169 = vunpack.c.l.b16 %v2780
    %v3170 = vunpack.c.h.b16 %v2780
    %v3171 = vunpack.c.l.b16 %v2781
    %v3172 = vunpack.c.h.b16 %v2781
    %v3173 = vunpack.c.l.b16 %v2782
    %v3174 = vunpack.c.h.b16 %v2782
    %v3175 = vunpack.c.l.b16 %v2783
    %v3176 = vunpack.c.h.b16 %v2783
    %v3177 = vunpack.c.l.b16 %v2784
    %v3178 = vunpack.c.h.b16 %v2784
    %v3179 = vunpack.c.l.b16 %v2785
    %v3180 = vunpack.c.h.b16 %v2785
    %v3181 = vunpack.c.l.b16 %v2786
    %v3182 = vunpack.c.h.b16 %v2786
    %v3183 = vunpack.c.l.b16 %v2787
    %v3184 = vunpack.c.h.b16 %v2787
    %v3185 = vunpack.c.l.b16 %v2788
    %v3186 = vunpack.c.h.b16 %v2788
    %v3187 = vunpack.c.l.b16 %v2789
    %v3188 = vunpack.c.h.b16 %v2789
    %v3189 = vunpack.c.l.b16 %v2790
    %v3190 = vunpack.c.h.b16 %v2790
    %v3191 = vunpack.c.l.b16 %v2791
    %v3192 = vunpack.c.h.b16 %v2791
    %v3193 = vunpack.c.l.b16 %v2792
    %v3194 = vunpack.c.h.b16 %v2792
    %v3195 = vunpack.c.l.b16 %v2793
    %v3196 = vunpack.c.h.b16 %v2793
    %v3197 = vunpack.c.l.b16 %v2794
    %v3198 = vunpack.c.h.b16 %v2794
    %v3199 = vunpack.c.l.b16 %v2795
    %v3200 = vunpack.c.h.b16 %v2795
    %v3201 = vunpack.c.l.b16 %v2796
    %v3202 = vunpack.c.h.b16 %v2796
    %v3203 = vpack.c.b16 %v2951, %v2947
    %v3204 = vpack.c.b16 %v2952, %v2948
    %v3205 = vpack.c.b16 %v2953, %v2949
    %v3206 = vpack.c.b16 %v2954, %v2950
    %v3207 = vpack.c.b16 %v2959, %v2955
    %v3208 = vpack.c.b16 %v2960, %v2956
    %v3209 = vpack.c.b16 %v2961, %v2957
    %v3210 = vpack.c.b16 %v2962, %v2958
    %v3211 = vpack.c.b16 %v2967, %v2963
    %v3212 = vpack.c.b16 %v2968, %v2964
    %v3213 = vpack.c.b16 %v2969, %v2965
    %v3214 = vpack.c.b16 %v2970, %v2966
    %v3215 = vpack.c.b16 %v2975, %v2971
    %v3216 = vpack.c.b16 %v2976, %v2972
    %v3217 = vpack.c.b16 %v2977, %v2973
    %v3218 = vpack.c.b16 %v2978, %v2974
    %v3219 = vpack.c.b16 %v2983, %v2979
    %v3220 = vpack.c.b16 %v2984, %v2980
    %v3221 = vpack.c.b16 %v2985, %v2981
    %v3222 = vpack.c.b16 %v2986, %v2982
    %v3223 = vpack.c.b16 %v2991, %v2987
    %v3224 = vpack.c.b16 %v2992, %v2988
    %v3225 = vpack.c.b16 %v2993, %v2989
    %v3226 = vpack.c.b16 %v2994, %v2990
    %v3227 = vpack.c.b16 %v2999, %v2995
    %v3228 = vpack.c.b16 %v3000, %v2996
    %v3229 = vpack.c.b16 %v3001, %v2997
    %v3230 = vpack.c.b16 %v3002, %v2998
    %v3231 = vpack.c.b16 %v3007, %v3003
    %v3232 = vpack.c.b16 %v3008, %v3004
    %v3233 = vpack.c.b16 %v3009, %v3005
    %v3234 = vpack.c.b16 %v3010, %v3006
    %v3235 = vpack.c.b16 %v3015, %v3011
    %v3236 = vpack.c.b16 %v3016, %v3012
    %v3237 = vpack.c.b16 %v3017, %v3013
    %v3238 = vpack.c.b16 %v3018, %v3014
    %v3239 = vpack.c.b16 %v3023, %v3019
    %v3240 = vpack.c.b16 %v3024, %v3020
    %v3241 = vpack.c.b16 %v3025, %v3021
    %v3242 = vpack.c.b16 %v3026, %v3022
    %v3243 = vpack.c.b16 %v3031, %v3027
    %v3244 = vpack.c.b16 %v3032, %v3028
    %v3245 = vpack.c.b16 %v3033, %v3029
    %v3246 = vpack.c.b16 %v3034, %v3030
    %v3247 = vpack.c.b16 %v3039, %v3035
    %v3248 = vpack.c.b16 %v3040, %v3036
    %v3249 = vpack.c.b16 %v3041, %v3037
    %v3250 = vpack.c.b16 %v3042, %v3038
    %v3251 = vpack.c.b16 %v3047, %v3043
    %v3252 = vpack.c.b16 %v3048, %v3044
    %v3253 = vpack.c.b16 %v3049, %v3045
    %v3254 = vpack.c.b16 %v3050, %v3046
    %v3255 = vpack.c.b16 %v3055, %v3051
    %v3256 = vpack.c.b16 %v3056, %v3052
    %v3257 = vpack.c.b16 %v3057, %v3053
    %v3258 = vpack.c.b16 %v3058, %v3054
    %v3259 = vpack.c.b16 %v3063, %v3059
    %v3260 = vpack.c.b16 %v3064, %v3060
    %v3261 = vpack.c.b16 %v3065, %v3061
    %v3262 = vpack.c.b16 %v3066, %v3062
    %v3263 = vpack.c.b16 %v3071, %v3067
    %v3264 = vpack.c.b16 %v3072, %v3068
    %v3265 = vpack.c.b16 %v3073, %v3069
    %v3266 = vpack.c.b16 %v3074, %v3070
    %v3267 = vpack.c.b16 %v3079, %v3075
    %v3268 = vpack.c.b16 %v3080, %v3076
    %v3269 = vpack.c.b16 %v3081, %v3077
    %v3270 = vpack.c.b16 %v3082, %v3078
    %v3271 = vpack.c.b16 %v3087, %v3083
    %v3272 = vpack.c.b16 %v3088, %v3084
    %v3273 = vpack.c.b16 %v3089, %v3085
    %v3274 = vpack.c.b16 %v3090, %v3086
    %v3275 = vpack.c.b16 %v3095, %v3091
    %v3276 = vpack.c.b16 %v3096, %v3092
    %v3277 = vpack.c.b16 %v3097, %v3093
    %v3278 = vpack.c.b16 %v3098, %v3094
    %v3279 = vpack.c.b16 %v3103, %v3099
    %v3280 = vpack.c.b16 %v3104, %v3100
    %v3281 = vpack.c.b16 %v3105, %v3101
    %v3282 = vpack.c.b16 %v3106, %v3102
    %v3283 = vpack.c.b16 %v3111, %v3107
    %v3284 = vpack.c.b16 %v3112, %v3108
    %v3285 = vpack.c.b16 %v3113, %v3109
    %v3286 = vpack.c.b16 %v3114, %v3110
    %v3287 = vpack.c.b16 %v3119, %v3115
    %v3288 = vpack.c.b16 %v3120, %v3116
    %v3289 = vpack.c.b16 %v3121, %v3117
    %v3290 = vpack.c.b16 %v3122, %v3118
    %v3291 = vpack.c.b16 %v3127, %v3123
    %v3292 = vpack.c.b16 %v3128, %v3124
    %v3293 = vpack.c.b16 %v3129, %v3125
    %v3294 = vpack.c.b16 %v3130, %v3126
    %v3295 = vpack.c.b16 %v3135, %v3131
    %v3296 = vpack.c.b16 %v3136, %v3132
    %v3297 = vpack.c.b16 %v3137, %v3133
    %v3298 = vpack.c.b16 %v3138, %v3134
    %v3299 = vpack.c.b16 %v3143, %v3139
    %v3300 = vpack.c.b16 %v3144, %v3140
    %v3301 = vpack.c.b16 %v3145, %v3141
    %v3302 = vpack.c.b16 %v3146, %v3142
    %v3303 = vpack.c.b16 %v3151, %v3147
    %v3304 = vpack.c.b16 %v3152, %v3148
    %v3305 = vpack.c.b16 %v3153, %v3149
    %v3306 = vpack.c.b16 %v3154, %v3150
    %v3307 = vpack.c.b16 %v3159, %v3155
    %v3308 = vpack.c.b16 %v3160, %v3156
    %v3309 = vpack.c.b16 %v3161, %v3157
    %v3310 = vpack.c.b16 %v3162, %v3158
    %v3311 = vpack.c.b16 %v3167, %v3163
    %v3312 = vpack.c.b16 %v3168, %v3164
    %v3313 = vpack.c.b16 %v3169, %v3165
    %v3314 = vpack.c.b16 %v3170, %v3166
    %v3315 = vpack.c.b16 %v3175, %v3171
    %v3316 = vpack.c.b16 %v3176, %v3172
    %v3317 = vpack.c.b16 %v3177, %v3173
    %v3318 = vpack.c.b16 %v3178, %v3174
    %v3319 = vpack.c.b16 %v3183, %v3179
    %v3320 = vpack.c.b16 %v3184, %v3180
    %v3321 = vpack.c.b16 %v3185, %v3181
    %v3322 = vpack.c.b16 %v3186, %v3182
    %v3323 = vpack.c.b16 %v3191, %v3187
    %v3324 = vpack.c.b16 %v3192, %v3188
    %v3325 = vpack.c.b16 %v3193, %v3189
    %v3326 = vpack.c.b16 %v3194, %v3190
    %v3327 = vpack.c.b16 %v3199, %v3195
    %v3328 = vpack.c.b16 %v3200, %v3196
    %v3329 = vpack.c.b16 %v3201, %v3197
    %v3330 = vpack.c.b16 %v3202, %v3198
    %3459 = vmatprep.subr.bf16.mxu0 %v3204
    %3460 = vmatpush1.bf16.msra.mxu0 %v3203
    %3461 = vmatprep.subr.bf16.mxu0 %v3208
    %3462 = vmatpush1.bf16.msra.mxu0 %v3207
    %3463 = vmatprep.subr.bf16.mxu0 %v3212
    %3464 = vmatpush1.bf16.msra.mxu0 %v3211
    %3465 = vmatprep.subr.bf16.mxu0 %v3216
    %3466 = vmatpush1.bf16.msra.mxu0 %v3215
    %3467 = vmatprep.subr.bf16.mxu0 %v3220
    %3468 = vmatpush1.bf16.msra.mxu0 %v3219
    %3469 = vmatprep.subr.bf16.mxu0 %v3224
    %3470 = vmatpush1.bf16.msra.mxu0 %v3223
    %3471 = vmatprep.subr.bf16.mxu0 %v3228
    %3472 = vmatpush1.bf16.msra.mxu0 %v3227
    %3473 = vmatprep.subr.bf16.mxu0 %v3232
    %3474 = vmatpush1.bf16.msra.mxu0 %v3231
    %3475 = vmatprep.subr.bf16.mxu0 %v3236
    %3476 = vmatpush1.bf16.msra.mxu0 %v3235
    %3477 = vmatprep.subr.bf16.mxu0 %v3240
    %3478 = vmatpush1.bf16.msra.mxu0 %v3239
    %3479 = vmatprep.subr.bf16.mxu0 %v3244
    %3480 = vmatpush1.bf16.msra.mxu0 %v3243
    %3481 = vmatprep.subr.bf16.mxu0 %v3248
    %3482 = vmatpush1.bf16.msra.mxu0 %v3247
    %3483 = vmatprep.subr.bf16.mxu0 %v3252
    %3484 = vmatpush1.bf16.msra.mxu0 %v3251
    %3485 = vmatprep.subr.bf16.mxu0 %v3256
    %3486 = vmatpush1.bf16.msra.mxu0 %v3255
    %3487 = vmatprep.subr.bf16.mxu0 %v3260
    %3488 = vmatpush1.bf16.msra.mxu0 %v3259
    %3489 = vmatprep.subr.bf16.mxu0 %v3264
    %3490 = vmatpush1.bf16.msra.mxu0 %v3263
    %3491 = vmatprep.mubr.bf16.mxu0 %v2666
    %3492 = vmatmul.mubr.bf16.gmra.mrb[0].mxu0 %v2665
    %v3493 = vpop.f32.mrb[0].mxu0
    %v3494 = vadd.f32 %v2802, %v3493
    %v3495 = vpop.f32.mrb[0].mxu0
    %v3496 = vadd.f32 %v2806, %v3495
    %v3497 = vpop.f32.mrb[0].mxu0
    %v3498 = vpop.f32.mrb[0].mxu0
    %3499 = vdwg.mxu0
    %3500 = vmatprep.subr.bf16.mxu0 %v3268
    %3501 = vmatpush1.bf16.msra.mxu0 %v3267
    %3502 = vmatprep.subr.bf16.mxu0 %v3272
    %3503 = vmatpush1.bf16.msra.mxu0 %v3271
    %3504 = vmatprep.subr.bf16.mxu0 %v3276
    %3505 = vmatpush1.bf16.msra.mxu0 %v3275
    %3506 = vmatprep.subr.bf16.mxu0 %v3280
    %3507 = vmatpush1.bf16.msra.mxu0 %v3279
    %3508 = vmatprep.subr.bf16.mxu0 %v3284
    %3509 = vmatpush1.bf16.msra.mxu0 %v3283
    %3510 = vmatprep.subr.bf16.mxu0 %v3288
    %3511 = vmatpush1.bf16.msra.mxu0 %v3287
    %3512 = vmatprep.subr.bf16.mxu0 %v3292
    %3513 = vmatpush1.bf16.msra.mxu0 %v3291
    %3514 = vmatprep.subr.bf16.mxu0 %v3296
    %3515 = vmatpush1.bf16.msra.mxu0 %v3295
    %3516 = vmatprep.subr.bf16.mxu0 %v3300
    %3517 = vmatpush1.bf16.msra.mxu0 %v3299
    %3518 = vmatprep.subr.bf16.mxu0 %v3304
    %3519 = vmatpush1.bf16.msra.mxu0 %v3303
    %3520 = vmatprep.subr.bf16.mxu0 %v3308
    %3521 = vmatpush1.bf16.msra.mxu0 %v3307
    %3522 = vmatprep.subr.bf16.mxu0 %v3312
    %3523 = vmatpush1.bf16.msra.mxu0 %v3311
    %3524 = vmatprep.subr.bf16.mxu0 %v3316
    %3525 = vmatpush1.bf16.msra.mxu0 %v3315
    %3526 = vmatprep.subr.bf16.mxu0 %v3320
    %3527 = vmatpush1.bf16.msra.mxu0 %v3319
    %3528 = vmatprep.subr.bf16.mxu0 %v3324
    %3529 = vmatpush1.bf16.msra.mxu0 %v3323
    %3530 = vmatprep.subr.bf16.mxu0 %v3328
    %3531 = vmatpush1.bf16.msra.mxu0 %v3327
    %3532 = vmatprep.mubr.bf16.mxu0 %v2668
    %3533 = vmatmul.mubr.bf16.gmra.mrb[0].mxu0 %v2667
    %v3534 = vpop.f32.mrb[0].mxu0
    %v3535 = vadd.f32 %v3494, %v3534
    %v3536 = vpop.f32.mrb[0].mxu0
    %v3537 = vadd.f32 %v3496, %v3536
    %v3538 = vpop.f32.mrb[0].mxu0
    %v3539 = vpop.f32.mrb[0].mxu0
    %3540 = vdwg.mxu0
    %3541 = vmatprep.subr.bf16.mxu0 %v3206
    %3542 = vmatpush1.bf16.msra.mxu0 %v3205
    %3543 = vmatprep.subr.bf16.mxu0 %v3210
    %3544 = vmatpush1.bf16.msra.mxu0 %v3209
    %3545 = vmatprep.subr.bf16.mxu0 %v3214
    %3546 = vmatpush1.bf16.msra.mxu0 %v3213
    %3547 = vmatprep.subr.bf16.mxu0 %v3218
    %3548 = vmatpush1.bf16.msra.mxu0 %v3217
    %3549 = vmatprep.subr.bf16.mxu0 %v3222
    %3550 = vmatpush1.bf16.msra.mxu0 %v3221
    %3551 = vmatprep.subr.bf16.mxu0 %v3226
    %3552 = vmatpush1.bf16.msra.mxu0 %v3225
    %3553 = vmatprep.subr.bf16.mxu0 %v3230
    %3554 = vmatpush1.bf16.msra.mxu0 %v3229
    %3555 = vmatprep.subr.bf16.mxu0 %v3234
    %3556 = vmatpush1.bf16.msra.mxu0 %v3233
    %3557 = vmatprep.subr.bf16.mxu0 %v3238
    %3558 = vmatpush1.bf16.msra.mxu0 %v3237
    %3559 = vmatprep.subr.bf16.mxu0 %v3242
    %3560 = vmatpush1.bf16.msra.mxu0 %v3241
    %3561 = vmatprep.subr.bf16.mxu0 %v3246
    %3562 = vmatpush1.bf16.msra.mxu0 %v3245
    %3563 = vmatprep.subr.bf16.mxu0 %v3250
    %3564 = vmatpush1.bf16.msra.mxu0 %v3249
    %3565 = vmatprep.subr.bf16.mxu0 %v3254
    %3566 = vmatpush1.bf16.msra.mxu0 %v3253
    %3567 = vmatprep.subr.bf16.mxu0 %v3258
    %3568 = vmatpush1.bf16.msra.mxu0 %v3257
    %3569 = vmatprep.subr.bf16.mxu0 %v3262
    %3570 = vmatpush1.bf16.msra.mxu0 %v3261
    %3571 = vmatprep.subr.bf16.mxu0 %v3266
    %3572 = vmatpush1.bf16.msra.mxu0 %v3265
    %3573 = vmatprep.mubr.bf16.mxu0 %v2666
    %3574 = vmatmul.mubr.bf16.gmra.mrb[0].mxu0 %v2665
    %v3575 = vpop.f32.mrb[0].mxu0
    %v3576 = vadd.f32 %v2810, %v3575
    %v3577 = vpop.f32.mrb[0].mxu0
    %v3578 = vadd.f32 %v2814, %v3577
    %v3579 = vpop.f32.mrb[0].mxu0
    %v3580 = vpop.f32.mrb[0].mxu0
    %3581 = vdwg.mxu0
    %3582 = vmatprep.subr.bf16.mxu0 %v3270
    %3583 = vmatpush1.bf16.msra.mxu0 %v3269
    %3584 = vmatprep.subr.bf16.mxu0 %v3274
    %3585 = vmatpush1.bf16.msra.mxu0 %v3273
    %3586 = vmatprep.subr.bf16.mxu0 %v3278
    %3587 = vmatpush1.bf16.msra.mxu0 %v3277
    %3588 = vmatprep.subr.bf16.mxu0 %v3282
    %3589 = vmatpush1.bf16.msra.mxu0 %v3281
    %3590 = vmatprep.subr.bf16.mxu0 %v3286
    %3591 = vmatpush1.bf16.msra.mxu0 %v3285
    %3592 = vmatprep.subr.bf16.mxu0 %v3290
    %3593 = vmatpush1.bf16.msra.mxu0 %v3289
    %3594 = vmatprep.subr.bf16.mxu0 %v3294
    %3595 = vmatpush1.bf16.msra.mxu0 %v3293
    %3596 = vmatprep.subr.bf16.mxu0 %v3298
    %3597 = vmatpush1.bf16.msra.mxu0 %v3297
    %3598 = vmatprep.subr.bf16.mxu0 %v3302
    %3599 = vmatpush1.bf16.msra.mxu0 %v3301
    %3600 = vmatprep.subr.bf16.mxu0 %v3306
    %3601 = vmatpush1.bf16.msra.mxu0 %v3305
    %3602 = vmatprep.subr.bf16.mxu0 %v3310
    %3603 = vmatpush1.bf16.msra.mxu0 %v3309
    %3604 = vmatprep.subr.bf16.mxu0 %v3314
    %3605 = vmatpush1.bf16.msra.mxu0 %v3313
    %3606 = vmatprep.subr.bf16.mxu0 %v3318
    %3607 = vmatpush1.bf16.msra.mxu0 %v3317
    %3608 = vmatprep.subr.bf16.mxu0 %v3322
    %3609 = vmatpush1.bf16.msra.mxu0 %v3321
    %3610 = vmatprep.subr.bf16.mxu0 %v3326
    %3611 = vmatpush1.bf16.msra.mxu0 %v3325
    %3612 = vmatprep.subr.bf16.mxu0 %v3330
    %3613 = vmatpush1.bf16.msra.mxu0 %v3329
    %3614 = vmatprep.mubr.bf16.mxu0 %v2668
    %3615 = vmatmul.mubr.bf16.gmra.mrb[0].mxu0 %v2667
    %v3616 = vpop.f32.mrb[0].mxu0
    %v3617 = vadd.f32 %v3576, %v3616
    %v3618 = vpop.f32.mrb[0].mxu0
    %v3619 = vadd.f32 %v3578, %v3618
    %v3620 = vpop.f32.mrb[0].mxu0
    %v3621 = vpop.f32.mrb[0].mxu0
    %3622 = vdwg.mxu0
    %v3623 = vmax.f32 %v3535, 0.0
    %v3624 = vmax.f32 %v3537, 0.0
    %v3625 = vmax.f32 %v3617, 0.0
    %v3626 = vmax.f32 %v3619, 0.0
    %v3627 = vpack.c.bf16 %v3623, %v3623
    %v3628 = vpack.c.bf16 %v3624, %v3624
    %v3629 = vpack.c.bf16 %v3625, %v3625
    %v3630 = vpack.c.bf16 %v3626, %v3626
    %v3631 = vld [vmem:[#allocation13] sm:$0xff]
    %v3632 = vld [vmem:[#allocation13 + $0x8] sm:$0xff]
    %v3633 = vld [vmem:[#allocation13 + $0x10] sm:$0xff]
    %v3634 = vld [vmem:[#allocation13 + $0x18] sm:$0xff]
    %v3635 = vld [vmem:[#allocation13 + $0x20] sm:$0xff]
    %v3636 = vld [vmem:[#allocation13 + $0x28] sm:$0xff]
    %v3637 = vld [vmem:[#allocation13 + $0x30] sm:$0xff]
    %v3638 = vld [vmem:[#allocation13 + $0x38] sm:$0xff]
    %v3639 = vld [vmem:[#allocation13 + $0x40] sm:$0xff]
    %v3640 = vld [vmem:[#allocation13 + $0x48] sm:$0xff]
    %v3641 = vld [vmem:[#allocation13 + $0x50] sm:$0xff]
    %v3642 = vld [vmem:[#allocation13 + $0x58] sm:$0xff]
    %v3643 = vld [vmem:[#allocation13 + $0x60] sm:$0xff]
    %v3644 = vld [vmem:[#allocation13 + $0x68] sm:$0xff]
    %v3645 = vld [vmem:[#allocation13 + $0x70] sm:$0xff]
    %v3646 = vld [vmem:[#allocation13 + $0x78] sm:$0xff]
    %v3647 = vld [vmem:[#allocation13 + $0x80] sm:$0xff]
    %v3648 = vld [vmem:[#allocation13 + $0x88] sm:$0xff]
    %v3649 = vld [vmem:[#allocation13 + $0x90] sm:$0xff]
    %v3650 = vld [vmem:[#allocation13 + $0x98] sm:$0xff]
    %v3651 = vld [vmem:[#allocation13 + $0xa0] sm:$0xff]
    %v3652 = vld [vmem:[#allocation13 + $0xa8] sm:$0xff]
    %v3653 = vld [vmem:[#allocation13 + $0xb0] sm:$0xff]
    %v3654 = vld [vmem:[#allocation13 + $0xb8] sm:$0xff]
    %v3655 = vld [vmem:[#allocation13 + $0xc0] sm:$0xff]
    %v3656 = vld [vmem:[#allocation13 + $0xc8] sm:$0xff]
    %v3657 = vld [vmem:[#allocation13 + $0xd0] sm:$0xff]
    %v3658 = vld [vmem:[#allocation13 + $0xd8] sm:$0xff]
    %v3659 = vld [vmem:[#allocation13 + $0xe0] sm:$0xff]
    %v3660 = vld [vmem:[#allocation13 + $0xe8] sm:$0xff]
    %v3661 = vld [vmem:[#allocation13 + $0xf0] sm:$0xff]
    %v3662 = vld [vmem:[#allocation13 + $0xf8] sm:$0xff]
    %v3663 = vld [vmem:[#allocation13 + $0x100] sm:$0xff]
    %v3664 = vld [vmem:[#allocation13 + $0x108] sm:$0xff]
    %v3665 = vld [vmem:[#allocation13 + $0x110] sm:$0xff]
    %v3666 = vld [vmem:[#allocation13 + $0x118] sm:$0xff]
    %v3667 = vld [vmem:[#allocation13 + $0x120] sm:$0xff]
    %v3668 = vld [vmem:[#allocation13 + $0x128] sm:$0xff]
    %v3669 = vld [vmem:[#allocation13 + $0x130] sm:$0xff]
    %v3670 = vld [vmem:[#allocation13 + $0x138] sm:$0xff]
    %v3671 = vld [vmem:[#allocation13 + $0x140] sm:$0xff]
    %v3672 = vld [vmem:[#allocation13 + $0x148] sm:$0xff]
    %v3673 = vld [vmem:[#allocation13 + $0x150] sm:$0xff]
    %v3674 = vld [vmem:[#allocation13 + $0x158] sm:$0xff]
    %v3675 = vld [vmem:[#allocation13 + $0x160] sm:$0xff]
    %v3676 = vld [vmem:[#allocation13 + $0x168] sm:$0xff]
    %v3677 = vld [vmem:[#allocation13 + $0x170] sm:$0xff]
    %v3678 = vld [vmem:[#allocation13 + $0x178] sm:$0xff]
    %v3679 = vld [vmem:[#allocation13 + $0x180] sm:$0xff]
    %v3680 = vld [vmem:[#allocation13 + $0x188] sm:$0xff]
    %v3681 = vld [vmem:[#allocation13 + $0x190] sm:$0xff]
    %v3682 = vld [vmem:[#allocation13 + $0x198] sm:$0xff]
    %v3683 = vld [vmem:[#allocation13 + $0x1a0] sm:$0xff]
    %v3684 = vld [vmem:[#allocation13 + $0x1a8] sm:$0xff]
    %v3685 = vld [vmem:[#allocation13 + $0x1b0] sm:$0xff]
    %v3686 = vld [vmem:[#allocation13 + $0x1b8] sm:$0xff]
    %v3687 = vld [vmem:[#allocation13 + $0x1c0] sm:$0xff]
    %v3688 = vld [vmem:[#allocation13 + $0x1c8] sm:$0xff]
    %v3689 = vld [vmem:[#allocation13 + $0x1d0] sm:$0xff]
    %v3690 = vld [vmem:[#allocation13 + $0x1d8] sm:$0xff]
    %v3691 = vld [vmem:[#allocation13 + $0x1e0] sm:$0xff]
    %v3692 = vld [vmem:[#allocation13 + $0x1e8] sm:$0xff]
    %v3693 = vld [vmem:[#allocation13 + $0x1f0] sm:$0xff]
    %v3694 = vld [vmem:[#allocation13 + $0x1f8] sm:$0xff]
    %v3695 = vld [vmem:[%s12] sm:$0x3]
    %v3697 = vlaneseq
    %v3698 = vshrl.u32 %v3697, 7
    %v3699 = vsub.s32 0, %v3698
    %v3700 = vrot.slane %v3695, %v3699
    %v3701 = vlaneseq
    %v3702 = vshrl.u32 %v3701, 7
    %v3703 = vsub.s32 1, %v3702
    %v3704 = vrot.slane %v3695, %v3703
    %v3771 = vunpack.c.l.b16 %v3631
    %v3772 = vunpack.c.h.b16 %v3631
    %v3773 = vunpack.c.l.b16 %v3632
    %v3774 = vunpack.c.h.b16 %v3632
    %v3775 = vunpack.c.l.b16 %v3633
    %v3776 = vunpack.c.h.b16 %v3633
    %v3777 = vunpack.c.l.b16 %v3634
    %v3778 = vunpack.c.h.b16 %v3634
    %v3779 = vunpack.c.l.b16 %v3635
    %v3780 = vunpack.c.h.b16 %v3635
    %v3781 = vunpack.c.l.b16 %v3636
    %v3782 = vunpack.c.h.b16 %v3636
    %v3783 = vunpack.c.l.b16 %v3637
    %v3784 = vunpack.c.h.b16 %v3637
    %v3785 = vunpack.c.l.b16 %v3638
    %v3786 = vunpack.c.h.b16 %v3638
    %v3787 = vunpack.c.l.b16 %v3639
    %v3788 = vunpack.c.h.b16 %v3639
    %v3789 = vunpack.c.l.b16 %v3640
    %v3790 = vunpack.c.h.b16 %v3640
    %v3791 = vunpack.c.l.b16 %v3641
    %v3792 = vunpack.c.h.b16 %v3641
    %v3793 = vunpack.c.l.b16 %v3642
    %v3794 = vunpack.c.h.b16 %v3642
    %v3795 = vunpack.c.l.b16 %v3643
    %v3796 = vunpack.c.h.b16 %v3643
    %v3797 = vunpack.c.l.b16 %v3644
    %v3798 = vunpack.c.h.b16 %v3644
    %v3799 = vunpack.c.l.b16 %v3645
    %v3800 = vunpack.c.h.b16 %v3645
    %v3801 = vunpack.c.l.b16 %v3646
    %v3802 = vunpack.c.h.b16 %v3646
    %v3803 = vunpack.c.l.b16 %v3647
    %v3804 = vunpack.c.h.b16 %v3647
    %v3805 = vunpack.c.l.b16 %v3648
    %v3806 = vunpack.c.h.b16 %v3648
    %v3807 = vunpack.c.l.b16 %v3649
    %v3808 = vunpack.c.h.b16 %v3649
    %v3809 = vunpack.c.l.b16 %v3650
    %v3810 = vunpack.c.h.b16 %v3650
    %v3811 = vunpack.c.l.b16 %v3651
    %v3812 = vunpack.c.h.b16 %v3651
    %v3813 = vunpack.c.l.b16 %v3652
    %v3814 = vunpack.c.h.b16 %v3652
    %v3815 = vunpack.c.l.b16 %v3653
    %v3816 = vunpack.c.h.b16 %v3653
    %v3817 = vunpack.c.l.b16 %v3654
    %v3818 = vunpack.c.h.b16 %v3654
    %v3819 = vunpack.c.l.b16 %v3655
    %v3820 = vunpack.c.h.b16 %v3655
    %v3821 = vunpack.c.l.b16 %v3656
    %v3822 = vunpack.c.h.b16 %v3656
    %v3823 = vunpack.c.l.b16 %v3657
    %v3824 = vunpack.c.h.b16 %v3657
    %v3825 = vunpack.c.l.b16 %v3658
    %v3826 = vunpack.c.h.b16 %v3658
    %v3827 = vunpack.c.l.b16 %v3659
    %v3828 = vunpack.c.h.b16 %v3659
    %v3829 = vunpack.c.l.b16 %v3660
    %v3830 = vunpack.c.h.b16 %v3660
    %v3831 = vunpack.c.l.b16 %v3661
    %v3832 = vunpack.c.h.b16 %v3661
    %v3833 = vunpack.c.l.b16 %v3662
    %v3834 = vunpack.c.h.b16 %v3662
    %v3835 = vunpack.c.l.b16 %v3663
    %v3836 = vunpack.c.h.b16 %v3663
    %v3837 = vunpack.c.l.b16 %v3664
    %v3838 = vunpack.c.h.b16 %v3664
    %v3839 = vunpack.c.l.b16 %v3665
    %v3840 = vunpack.c.h.b16 %v3665
    %v3841 = vunpack.c.l.b16 %v3666
    %v3842 = vunpack.c.h.b16 %v3666
    %v3843 = vunpack.c.l.b16 %v3667
    %v3844 = vunpack.c.h.b16 %v3667
    %v3845 = vunpack.c.l.b16 %v3668
    %v3846 = vunpack.c.h.b16 %v3668
    %v3847 = vunpack.c.l.b16 %v3669
    %v3848 = vunpack.c.h.b16 %v3669
    %v3849 = vunpack.c.l.b16 %v3670
    %v3850 = vunpack.c.h.b16 %v3670
    %v3851 = vunpack.c.l.b16 %v3671
    %v3852 = vunpack.c.h.b16 %v3671
    %v3853 = vunpack.c.l.b16 %v3672
    %v3854 = vunpack.c.h.b16 %v3672
    %v3855 = vunpack.c.l.b16 %v3673
    %v3856 = vunpack.c.h.b16 %v3673
    %v3857 = vunpack.c.l.b16 %v3674
    %v3858 = vunpack.c.h.b16 %v3674
    %v3859 = vunpack.c.l.b16 %v3675
    %v3860 = vunpack.c.h.b16 %v3675
    %v3861 = vunpack.c.l.b16 %v3676
    %v3862 = vunpack.c.h.b16 %v3676
    %v3863 = vunpack.c.l.b16 %v3677
    %v3864 = vunpack.c.h.b16 %v3677
    %v3865 = vunpack.c.l.b16 %v3678
    %v3866 = vunpack.c.h.b16 %v3678
    %v3867 = vunpack.c.l.b16 %v3679
    %v3868 = vunpack.c.h.b16 %v3679
    %v3869 = vunpack.c.l.b16 %v3680
    %v3870 = vunpack.c.h.b16 %v3680
    %v3871 = vunpack.c.l.b16 %v3681
    %v3872 = vunpack.c.h.b16 %v3681
    %v3873 = vunpack.c.l.b16 %v3682
    %v3874 = vunpack.c.h.b16 %v3682
    %v3875 = vunpack.c.l.b16 %v3683
    %v3876 = vunpack.c.h.b16 %v3683
    %v3877 = vunpack.c.l.b16 %v3684
    %v3878 = vunpack.c.h.b16 %v3684
    %v3879 = vunpack.c.l.b16 %v3685
    %v3880 = vunpack.c.h.b16 %v3685
    %v3881 = vunpack.c.l.b16 %v3686
    %v3882 = vunpack.c.h.b16 %v3686
    %v3883 = vunpack.c.l.b16 %v3687
    %v3884 = vunpack.c.h.b16 %v3687
    %v3885 = vunpack.c.l.b16 %v3688
    %v3886 = vunpack.c.h.b16 %v3688
    %v3887 = vunpack.c.l.b16 %v3689
    %v3888 = vunpack.c.h.b16 %v3689
    %v3889 = vunpack.c.l.b16 %v3690
    %v3890 = vunpack.c.h.b16 %v3690
    %v3891 = vunpack.c.l.b16 %v3691
    %v3892 = vunpack.c.h.b16 %v3691
    %v3893 = vunpack.c.l.b16 %v3692
    %v3894 = vunpack.c.h.b16 %v3692
    %v3895 = vunpack.c.l.b16 %v3693
    %v3896 = vunpack.c.h.b16 %v3693
    %v3897 = vunpack.c.l.b16 %v3694
    %v3898 = vunpack.c.h.b16 %v3694
    %v3899 = vpack.c.b16 %v3773, %v3771
    %v3900 = vpack.c.b16 %v3774, %v3772
    %v3901 = vpack.c.b16 %v3777, %v3775
    %v3902 = vpack.c.b16 %v3778, %v3776
    %v3903 = vpack.c.b16 %v3781, %v3779
    %v3904 = vpack.c.b16 %v3782, %v3780
    %v3905 = vpack.c.b16 %v3785, %v3783
    %v3906 = vpack.c.b16 %v3786, %v3784
    %v3907 = vpack.c.b16 %v3789, %v3787
    %v3908 = vpack.c.b16 %v3790, %v3788
    %v3909 = vpack.c.b16 %v3793, %v3791
    %v3910 = vpack.c.b16 %v3794, %v3792
    %v3911 = vpack.c.b16 %v3797, %v3795
    %v3912 = vpack.c.b16 %v3798, %v3796
    %v3913 = vpack.c.b16 %v3801, %v3799
    %v3914 = vpack.c.b16 %v3802, %v3800
    %v3915 = vpack.c.b16 %v3805, %v3803
    %v3916 = vpack.c.b16 %v3806, %v3804
    %v3917 = vpack.c.b16 %v3809, %v3807
    %v3918 = vpack.c.b16 %v3810, %v3808
    %v3919 = vpack.c.b16 %v3813, %v3811
    %v3920 = vpack.c.b16 %v3814, %v3812
    %v3921 = vpack.c.b16 %v3817, %v3815
    %v3922 = vpack.c.b16 %v3818, %v3816
    %v3923 = vpack.c.b16 %v3821, %v3819
    %v3924 = vpack.c.b16 %v3822, %v3820
    %v3925 = vpack.c.b16 %v3825, %v3823
    %v3926 = vpack.c.b16 %v3826, %v3824
    %v3927 = vpack.c.b16 %v3829, %v3827
    %v3928 = vpack.c.b16 %v3830, %v3828
    %v3929 = vpack.c.b16 %v3833, %v3831
    %v3930 = vpack.c.b16 %v3834, %v3832
    %v3931 = vpack.c.b16 %v3837, %v3835
    %v3932 = vpack.c.b16 %v3838, %v3836
    %v3933 = vpack.c.b16 %v3841, %v3839
    %v3934 = vpack.c.b16 %v3842, %v3840
    %v3935 = vpack.c.b16 %v3845, %v3843
    %v3936 = vpack.c.b16 %v3846, %v3844
    %v3937 = vpack.c.b16 %v3849, %v3847
    %v3938 = vpack.c.b16 %v3850, %v3848
    %v3939 = vpack.c.b16 %v3853, %v3851
    %v3940 = vpack.c.b16 %v3854, %v3852
    %v3941 = vpack.c.b16 %v3857, %v3855
    %v3942 = vpack.c.b16 %v3858, %v3856
    %v3943 = vpack.c.b16 %v3861, %v3859
    %v3944 = vpack.c.b16 %v3862, %v3860
    %v3945 = vpack.c.b16 %v3865, %v3863
    %v3946 = vpack.c.b16 %v3866, %v3864
    %v3947 = vpack.c.b16 %v3869, %v3867
    %v3948 = vpack.c.b16 %v3870, %v3868
    %v3949 = vpack.c.b16 %v3873, %v3871
    %v3950 = vpack.c.b16 %v3874, %v3872
    %v3951 = vpack.c.b16 %v3877, %v3875
    %v3952 = vpack.c.b16 %v3878, %v3876
    %v3953 = vpack.c.b16 %v3881, %v3879
    %v3954 = vpack.c.b16 %v3882, %v3880
    %v3955 = vpack.c.b16 %v3885, %v3883
    %v3956 = vpack.c.b16 %v3886, %v3884
    %v3957 = vpack.c.b16 %v3889, %v3887
    %v3958 = vpack.c.b16 %v3890, %v3888
    %v3959 = vpack.c.b16 %v3893, %v3891
    %v3960 = vpack.c.b16 %v3894, %v3892
    %v3961 = vpack.c.b16 %v3897, %v3895
    %v3962 = vpack.c.b16 %v3898, %v3896
    %4027 = vmatprep.subr.bf16.mxu0 %v3900
    %4028 = vmatpush1.bf16.msra.mxu0 %v3899
    %4029 = vmatprep.subr.bf16.mxu0 %v3902
    %4030 = vmatpush1.bf16.msra.mxu0 %v3901
    %4031 = vmatprep.subr.bf16.mxu0 %v3904
    %4032 = vmatpush1.bf16.msra.mxu0 %v3903
    %4033 = vmatprep.subr.bf16.mxu0 %v3906
    %4034 = vmatpush1.bf16.msra.mxu0 %v3905
    %4035 = vmatprep.subr.bf16.mxu0 %v3908
    %4036 = vmatpush1.bf16.msra.mxu0 %v3907
    %4037 = vmatprep.subr.bf16.mxu0 %v3910
    %4038 = vmatpush1.bf16.msra.mxu0 %v3909
    %4039 = vmatprep.subr.bf16.mxu0 %v3912
    %4040 = vmatpush1.bf16.msra.mxu0 %v3911
    %4041 = vmatprep.subr.bf16.mxu0 %v3914
    %4042 = vmatpush1.bf16.msra.mxu0 %v3913
    %4043 = vmatprep.subr.bf16.mxu0 %v3916
    %4044 = vmatpush1.bf16.msra.mxu0 %v3915
    %4045 = vmatprep.subr.bf16.mxu0 %v3918
    %4046 = vmatpush1.bf16.msra.mxu0 %v3917
    %4047 = vmatprep.subr.bf16.mxu0 %v3920
    %4048 = vmatpush1.bf16.msra.mxu0 %v3919
    %4049 = vmatprep.subr.bf16.mxu0 %v3922
    %4050 = vmatpush1.bf16.msra.mxu0 %v3921
    %4051 = vmatprep.subr.bf16.mxu0 %v3924
    %4052 = vmatpush1.bf16.msra.mxu0 %v3923
    %4053 = vmatprep.subr.bf16.mxu0 %v3926
    %4054 = vmatpush1.bf16.msra.mxu0 %v3925
    %4055 = vmatprep.subr.bf16.mxu0 %v3928
    %4056 = vmatpush1.bf16.msra.mxu0 %v3927
    %4057 = vmatprep.subr.bf16.mxu0 %v3930
    %4058 = vmatpush1.bf16.msra.mxu0 %v3929
    %4059 = vmatprep.mubr.bf16.mxu0 %v3628
    %4060 = vmatmul.mubr.bf16.gmra.mrb[0].mxu0 %v3627
    %v4061 = vpop.f32.mrb[0].mxu0
    %v4062 = vadd.f32 %v3700, %v4061
    %v4063 = vpop.f32.mrb[0].mxu0
    %v4064 = vadd.f32 %v3704, %v4063
    %v4065 = vpop.f32.mrb[0].mxu0
    %v4066 = vpop.f32.mrb[0].mxu0
    %4067 = vdwg.mxu0
    %4068 = vmatprep.subr.bf16.mxu0 %v3932
    %4069 = vmatpush1.bf16.msra.mxu0 %v3931
    %4070 = vmatprep.subr.bf16.mxu0 %v3934
    %4071 = vmatpush1.bf16.msra.mxu0 %v3933
    %4072 = vmatprep.subr.bf16.mxu0 %v3936
    %4073 = vmatpush1.bf16.msra.mxu0 %v3935
    %4074 = vmatprep.subr.bf16.mxu0 %v3938
    %4075 = vmatpush1.bf16.msra.mxu0 %v3937
    %4076 = vmatprep.subr.bf16.mxu0 %v3940
    %4077 = vmatpush1.bf16.msra.mxu0 %v3939
    %4078 = vmatprep.subr.bf16.mxu0 %v3942
    %4079 = vmatpush1.bf16.msra.mxu0 %v3941
    %4080 = vmatprep.subr.bf16.mxu0 %v3944
    %4081 = vmatpush1.bf16.msra.mxu0 %v3943
    %4082 = vmatprep.subr.bf16.mxu0 %v3946
    %4083 = vmatpush1.bf16.msra.mxu0 %v3945
    %4084 = vmatprep.subr.bf16.mxu0 %v3948
    %4085 = vmatpush1.bf16.msra.mxu0 %v3947
    %4086 = vmatprep.subr.bf16.mxu0 %v3950
    %4087 = vmatpush1.bf16.msra.mxu0 %v3949
    %4088 = vmatprep.subr.bf16.mxu0 %v3952
    %4089 = vmatpush1.bf16.msra.mxu0 %v3951
    %4090 = vmatprep.subr.bf16.mxu0 %v3954
    %4091 = vmatpush1.bf16.msra.mxu0 %v3953
    %4092 = vmatprep.subr.bf16.mxu0 %v3956
    %4093 = vmatpush1.bf16.msra.mxu0 %v3955
    %4094 = vmatprep.subr.bf16.mxu0 %v3958
    %4095 = vmatpush1.bf16.msra.mxu0 %v3957
    %4096 = vmatprep.subr.bf16.mxu0 %v3960
    %4097 = vmatpush1.bf16.msra.mxu0 %v3959
    %4098 = vmatprep.subr.bf16.mxu0 %v3962
    %4099 = vmatpush1.bf16.msra.mxu0 %v3961
    %4100 = vmatprep.mubr.bf16.mxu0 %v3630
    %4101 = vmatmul.mubr.bf16.gmra.mrb[0].mxu0 %v3629
    %v4102 = vpop.f32.mrb[0].mxu0
    %v4103 = vadd.f32 %v4062, %v4102
    %v4104 = vpop.f32.mrb[0].mxu0
    %v4105 = vadd.f32 %v4064, %v4104
    %v4106 = vpop.f32.mrb[0].mxu0
    %v4107 = vpop.f32.mrb[0].mxu0
    %4108 = vdwg.mxu0
    %4109 = vst [vmem:[#allocation14] sm:$0xff] %v4103
    %4110 = vst [vmem:[#allocation14 + $0x8] sm:$0xff] %v4105
    // Predicated region
    $region82: #{tpu_custom_call.1} parent=1 // pred_check
      _
    $region83: #{tpu_custom_call.1} parent=1 // pred_check_branch
      %4112 = sbr.rel (0) target = $region85
    $region84: #{tpu_custom_call.1} parent=1 // pred_region
      %s4114 = ssub.s32 256, 256
      %4115 = vsyncadd [#allocation4], %s4114
      %s4117 = sshll.u32 [#allocation14], 4
      %s4118 = int_to_ptr.vmem [resolvable:$true] %s4117
      %4120 = dma.vmem_to_hbm [thread:$0]  %s4118, 256, %s13, [#allocation4]
    $region85: #{tpu_custom_call.1} parent=1 // pred_fallthru
      _
    // Predicated region
    $region86: #{tpu_custom_call.1} parent=1 // pred_check
      _
    $region87: #{tpu_custom_call.1} parent=1 // pred_check_branch
      %4122 = sbr.rel (0) target = $region89
    $region88: #{tpu_custom_call.1} parent=1 // pred_region
      %4123 = dma.done [#allocation4], 256
    $region89: #{tpu_custom_call.1} parent=1 // pred_fallthru
      _
    %4124 = vsyncpa [#allocation3], 1
    %4125 = vsyncpa [#allocation6], 1
    %4126 = vsyncpa [#allocation9], 1
    %4127 = vsyncpa [#allocation12], 1
    %4128 = vsyncpa [#allocation4], 1

</llo_original>
